<compile_context>
chip_gen: v7x
topology: tpu7x:2x2x1
jax: 0.10.0
libtpu: 0.0.40
codegen_flags: <defaults>
</compile_context>

<pallas_src>
import functools

import jax
import jax.numpy as jnp
from jax.experimental import pallas as pl
from jax.experimental.pallas import tpu as pltpu

EPS = 1e-5      # PyTorch BatchNorm2d default eps
LANE = 128      # TPU lane width; channels padded to a multiple of this


def _round_up(v, m):
    return (v + m - 1) // m * m


# --------------------------------------------------------------------------- #
# Kernel bodies
# --------------------------------------------------------------------------- #
def _write_stats(st_ref, acc):
    """Per-image partial BN statistics: row 0 = sum, row 1 = sum of squares."""
    st_ref[0, 0:1, :] = jnp.sum(acc, axis=0, keepdims=True)
    st_ref[0, 1:2, :] = jnp.sum(acc * acc, axis=0, keepdims=True)


def conv1_kernel(xph_ref, w1_ref, a1_ref, st1_ref, *, s, Ho, Wo, Ci_p, Co_p):
    """3x3 stride-s conv of one image; stride folded into the phase layout."""
    M = Ho * Wo
    acc = jnp.zeros((M, Co_p), jnp.float32)
    for kh in range(3):            # static taps -> 9 MXU matmuls
        for kw in range(3):
            rh, qh = kh % s, kh // s
            rw, qw = kw % s, kw // s
            patch = xph_ref[rh * s + rw, qh:qh + Ho, qw:qw + Wo, :]
            acc = acc + jnp.dot(patch.reshape(M, Ci_p), w1_ref[kh * 3 + kw],
                                preferred_element_type=jnp.float32)
    a1_ref[0] = acc.astype(a1_ref.dtype)
    _write_stats(st1_ref, acc)


def _store_h_padded(hpad_ref, h, Ho, Wo):
    """Write h into the interior of the padded scratch; zero only the 1-px halo."""
    cp = hpad_ref.shape[-1]
    z_row = jnp.zeros((1, Wo + 2, cp), hpad_ref.dtype)
    z_col = jnp.zeros((Ho + 2, 1, cp), hpad_ref.dtype)
    hpad_ref[0:1, :, :] = z_row
    hpad_ref[Ho + 1:Ho + 2, :, :] = z_row
    hpad_ref[:, 0:1, :] = z_col
    hpad_ref[:, Wo + 1:Wo + 2, :] = z_col
    hpad_ref[1:Ho + 1, 1:Wo + 1, :] = h.reshape(Ho, Wo, cp)


def _conv3x3_s1(hpad_ref, w_ref, Ho, Wo, Co_p):
    """3x3 stride-1 conv over the padded activation scratch (bf16 MXU, f32 acc)."""
    # TODO(synk): the kw shifts could use pltpu.roll (XLU) instead of sliced copies.
    M = Ho * Wo
    acc = jnp.zeros((M, Co_p), jnp.float32)
    for kh in range(3):
        for kw in range(3):
            patch = hpad_ref[kh:kh + Ho, kw:kw + Wo, :].reshape(M, Co_p)
            acc = acc + jnp.dot(patch.astype(jnp.bfloat16), w_ref[kh * 3 + kw],
                                preferred_element_type=jnp.float32)
    return acc


def mid_kernel_proj(a1_ref, xph_ref, w2_ref, ws_ref, sc1_ref, sh1_ref,
                    a2_ref, as_ref, st2_ref, sts_ref, hpad_ref,
                    *, s, Ho, Wo, Ci_p, Co_p):
    """BN1-apply + ReLU -> conv2 (3x3, s=1) and 1x1 stride-s shortcut conv."""
    M = Ho * Wo
    h = jnp.maximum(a1_ref[0].astype(jnp.float32) * sc1_ref[...] + sh1_ref[...], 0.0)
    _store_h_padded(hpad_ref, h, Ho, Wo)

    acc2 = _conv3x3_s1(hpad_ref, w2_ref, Ho, Wo, Co_p)
    a2_ref[0] = acc2.astype(a2_ref.dtype)
    _write_stats(st2_ref, acc2)

    # 1x1 stride-s shortcut conv: read the matching phase of the padded input.
    r, q0 = 1 % s, 1 // s
    xs = xph_ref[r * s + r, q0:q0 + Ho, q0:q0 + Wo, :].reshape(M, Ci_p)
    accs = jnp.dot(xs, ws_ref[...], preferred_element_type=jnp.float32)
    as_ref[0] = accs.astype(as_ref.dtype)
    _write_stats(sts_ref, accs)


def mid_kernel_id(a1_ref, w2_ref, sc1_ref, sh1_ref,
                  a2_ref, st2_ref, hpad_ref, *, Ho, Wo, Co_p):
    """Identity-shortcut variant: BN1-apply + ReLU -> conv2 only."""
    h = jnp.maximum(a1_ref[0].astype(jnp.float32) * sc1_ref[...] + sh1_ref[...], 0.0)
    _store_h_padded(hpad_ref, h, Ho, Wo)
    acc2 = _conv3x3_s1(hpad_ref, w2_ref, Ho, Wo, Co_p)
    a2_ref[0] = acc2.astype(a2_ref.dtype)
    _write_stats(st2_ref, acc2)


def out_kernel_proj(a2_ref, as_ref, sc2_ref, sh2_ref, scs_ref, shs_ref, o_ref):
    """BN2-apply + BNs-apply + add + ReLU (projection shortcut)."""
    left = a2_ref[0].astype(jnp.float32) * sc2_ref[...] + sh2_ref[...]
    sc = as_ref[0].astype(jnp.float32) * scs_ref[...] + shs_ref[...]
    o_ref[0] = jnp.maximum(left + sc, 0.0)


def out_kernel_id(a2_ref, xph_ref, sc2_ref, sh2_ref, o_ref, *, Ho, Wo, Co_p):
    """BN2-apply + identity add + ReLU (shortcut read from the padded input)."""
    left = a2_ref[0].astype(jnp.float32) * sc2_ref[...] + sh2_ref[...]
    sc = xph_ref[0, 1:1 + Ho, 1:1 + Wo, :].astype(jnp.float32).reshape(Ho * Wo, Co_p)
    o_ref[0] = jnp.maximum(left + sc, 0.0)


# --------------------------------------------------------------------------- #
# Wrapper
# --------------------------------------------------------------------------- #
def _affine_from_stats(stats, gamma, beta, count):
    """Reduce per-image (sum, sumsq) partials -> fused BN scale/shift (1, Cp)."""
    total = jnp.sum(stats[:, 0, :], axis=0)
    total_sq = jnp.sum(stats[:, 1, :], axis=0)
    mean = total / count
    var = jnp.maximum(total_sq / count - mean * mean, 0.0)   # guard cancellation
    scale = gamma * jax.lax.rsqrt(var + EPS)
    shift = beta - mean * scale
    return scale.reshape(1, -1), shift.reshape(1, -1)


def residual_block_forward(x_nchw, params, stride):
    """NCHW in / NCHW out; matches nn.BatchNorm2d training-mode forward stats."""
    x = jnp.transpose(x_nchw, (0, 2, 3, 1)).astype(jnp.float32)   # NHWC
    N, H, W, Cin = x.shape
    w1 = params["w1"]                                             # (Cout, Cin, 3, 3)
    Cout = w1.shape[0]
    s = int(stride)
    Ho = (H + 2 - 3) // s + 1
    Wo = (W + 2 - 3) // s + 1
    M = Ho * Wo
    Ci_p = _round_up(Cin, LANE)
    Co_p = _round_up(Cout, LANE)

    # ---- glue: channel pad -> spatial pad(1) -> stride-phase split, bf16 ------
    Hp2 = _round_up(H + 2, s)
    Wp2 = _round_up(W + 2, s)
    xp = jnp.pad(x, ((0, 0), (1, Hp2 - H - 1), (1, Wp2 - W - 1), (0, Ci_p - Cin)))
    Hph, Wph = Hp2 // s, Wp2 // s
    xph = xp.reshape(N, Hph, s, Wph, s, Ci_p).transpose(0, 2, 4, 1, 3, 5)
    xph = xph.reshape(N * s * s, Hph, Wph, Ci_p).astype(jnp.bfloat16)

    def prep_w(w, ip, op):   # OIHW -> (kh*kw, I_pad, O_pad) bf16
        O, I, KH, KW = w.shape
        wk = jnp.transpose(w, (2, 3, 1, 0)).reshape(KH * KW, I, O)
        return jnp.pad(wk, ((0, 0), (0, ip - I), (0, op - O))).astype(jnp.bfloat16)

    def prep_bn(g, b):
        return jnp.pad(g, (0, Co_p - Cout)), jnp.pad(b, (0, Co_p - Cout))

    w1k = prep_w(params["w1"], Ci_p, Co_p)            # (9, Ci_p, Co_p)
    w2k = prep_w(params["w2"], Co_p, Co_p)            # (9, Co_p, Co_p)
    g1, b1 = prep_bn(params["g1"], params["b1"])
    g2, b2 = prep_bn(params["g2"], params["b2"])

    grid = (N,)
    cparams = pltpu.CompilerParams(
        dimension_semantics=("parallel",),            # megacore sharding on v7x
        vmem_limit_bytes=48 * 1024 * 1024,            # stays under v7x's 64 MiB
    )
    x_spec = pl.BlockSpec((s * s, Hph, Wph, Ci_p), lambda n: (n, 0, 0, 0))
    act_spec = pl.BlockSpec((1, M, Co_p), lambda n: (n, 0, 0))      # lane-dense slabs
    st_spec = pl.BlockSpec((1, 2, Co_p), lambda n: (n, 0, 0))
    vec_spec = pl.BlockSpec((1, Co_p), lambda n: (0, 0))

    # ---------------- kernel A: conv1 + partial BN1 stats ---------------------
    a1, st1 = pl.pallas_call(
        functools.partial(conv1_kernel, s=s, Ho=Ho, Wo=Wo, Ci_p=Ci_p, Co_p=Co_p),
        grid=grid,
        in_specs=[x_spec, pl.BlockSpec((9, Ci_p, Co_p), lambda n: (0, 0, 0))],
        out_specs=(act_spec, st_spec),
        out_shape=(jax.ShapeDtypeStruct((N, M, Co_p), jnp.bfloat16),
                   jax.ShapeDtypeStruct((N, 2, Co_p), jnp.float32)),
        compiler_params=cparams,
        cost_estimate=pl.CostEstimate(
            flops=2 * N * M * 9 * Ci_p * Co_p,
            transcendentals=0,
            bytes_accessed=(N * s * s * Hph * Wph * Ci_p * 2 + 9 * Ci_p * Co_p * 2
                            + N * M * Co_p * 2 + N * 2 * Co_p * 4),
        ),
    )(xph, w1k)

    sc1, sh1 = _affine_from_stats(st1, g1, b1, N * M)

    has_proj = (s != 1) or (Cin != Cout)
    if has_proj:
        wsk = prep_w(params["ws"], Ci_p, Co_p)[0]     # (Ci_p, Co_p)
        gs, bs = prep_bn(params["gs"], params["bs"])

        # ------- kernel B: BN1+ReLU -> conv2 ; 1x1 shortcut conv ; stats -------
        a2, a_s, st2, sts = pl.pallas_call(
            functools.partial(mid_kernel_proj, s=s, Ho=Ho, Wo=Wo, Ci_p=Ci_p, Co_p=Co_p),
            grid=grid,
            in_specs=[act_spec, x_spec,
                      pl.BlockSpec((9, Co_p, Co_p), lambda n: (0, 0, 0)),
                      pl.BlockSpec((Ci_p, Co_p), lambda n: (0, 0)),
                      vec_spec, vec_spec],
            out_specs=(act_spec, act_spec, st_spec, st_spec),
            out_shape=(jax.ShapeDtypeStruct((N, M, Co_p), jnp.bfloat16),
                       jax.ShapeDtypeStruct((N, M, Co_p), jnp.bfloat16),
                       jax.ShapeDtypeStruct((N, 2, Co_p), jnp.float32),
                       jax.ShapeDtypeStruct((N, 2, Co_p), jnp.float32)),
            scratch_shapes=[pltpu.VMEM((Ho + 2, Wo + 2, Co_p), jnp.float32)],
            compiler_params=cparams,
            cost_estimate=pl.CostEstimate(
                flops=2 * N * M * (9 * Co_p * Co_p + Ci_p * Co_p),
                transcendentals=0,
                bytes_accessed=(N * M * Co_p * 2 + N * s * s * Hph * Wph * Ci_p * 2
                                + 9 * Co_p * Co_p * 2 + Ci_p * Co_p * 2
                                + 2 * N * M * Co_p * 2 + 2 * N * 2 * Co_p * 4),
            ),
        )(a1, xph, w2k, wsk, sc1, sh1)

        sc2, sh2 = _affine_from_stats(st2, g2, b2, N * M)
        scs, shs = _affine_from_stats(sts, gs, bs, N * M)

        # ------------- kernel C: BN2 + BNs apply, add, ReLU --------------------
        out = pl.pallas_call(
            out_kernel_proj,
            grid=grid,
            in_specs=[act_spec, act_spec, vec_spec, vec_spec, vec_spec, vec_spec],
            out_specs=act_spec,
            out_shape=jax.ShapeDtypeStruct((N, M, Co_p), jnp.float32),
            compiler_params=cparams,
        )(a2, a_s, sc2, sh2, scs, shs)
    else:
        # ------- kernel B (identity): BN1+ReLU -> conv2 ; stats ----------------
        a2, st2 = pl.pallas_call(
            functools.partial(mid_kernel_id, Ho=Ho, Wo=Wo, Co_p=Co_p),
            grid=grid,
            in_specs=[act_spec,
                      pl.BlockSpec((9, Co_p, Co_p), lambda n: (0, 0, 0)),
                      vec_spec, vec_spec],
            out_specs=(act_spec, st_spec),
            out_shape=(jax.ShapeDtypeStruct((N, M, Co_p), jnp.bfloat16),
                       jax.ShapeDtypeStruct((N, 2, Co_p), jnp.float32)),
            scratch_shapes=[pltpu.VMEM((Ho + 2, Wo + 2, Co_p), jnp.float32)],
            compiler_params=cparams,
            cost_estimate=pl.CostEstimate(
                flops=2 * N * M * 9 * Co_p * Co_p,
                transcendentals=0,
                bytes_accessed=(2 * N * M * Co_p * 2 + 9 * Co_p * Co_p * 2
                                + N * 2 * Co_p * 4),
            ),
        )(a1, w2k, sc1, sh1)

        sc2, sh2 = _affine_from_stats(st2, g2, b2, N * M)

        # ------------- kernel C: BN2 apply, add identity x, ReLU ---------------
        out = pl.pallas_call(
            functools.partial(out_kernel_id, Ho=Ho, Wo=Wo, Co_p=Co_p),
            grid=grid,
            in_specs=[act_spec, x_spec, vec_spec, vec_spec],
            out_specs=act_spec,
            out_shape=jax.ShapeDtypeStruct((N, M, Co_p), jnp.float32),
            compiler_params=cparams,
        )(a2, xph, sc2, sh2)

    out = out.reshape(N, Ho, Wo, Co_p)[:, :, :, :Cout]
    return jnp.transpose(out, (0, 3, 1, 2))           # back to NCHW


# --------------------------------------------------------------------------- #
# Pure-JAX reference (matches PyTorch training-mode forward)
# --------------------------------------------------------------------------- #
def reference_forward(x_nchw, params, stride):
    def conv(x, w, s, pad):
        return jax.lax.conv_general_dilated(
            x, w, (s, s), [(pad, pad), (pad, pad)],
            dimension_numbers=("NCHW", "OIHW", "NCHW"))

    def bn(x, g, b):
        mean = jnp.mean(x, axis=(0, 2, 3), keepdims=True)
        var = jnp.var(x, axis=(0, 2, 3), keepdims=True)
        return (x - mean) * jax.lax.rsqrt(var + EPS) * g.reshape(1, -1, 1, 1) \
            + b.reshape(1, -1, 1, 1)

    Cin = x_nchw.shape[1]
    Cout = params["w1"].shape[0]
    h = jax.nn.relu(bn(conv(x_nchw, params["w1"], stride, 1), params["g1"], params["b1"]))
    left = bn(conv(h, params["w2"], 1, 1), params["g2"], params["b2"])
    if stride != 1 or Cin != Cout:
        sc = bn(conv(x_nchw, params["ws"], stride, 0), params["gs"], params["bs"])
    else:
        sc = x_nchw
    return jax.nn.relu(left + sc)


if __name__ == "__main__":
    key = jax.random.PRNGKey(0)
    k = jax.random.split(key, 8)
    fwd = jax.jit(residual_block_forward, static_argnums=2)

    def check(out, ref, shape, tag):
        assert out.shape == shape, (tag, out.shape)
        err = jnp.abs(out.astype(jnp.float32) - ref)
        max_err, mean_err = float(jnp.max(err)), float(jnp.mean(err))
        # bf16 MXU operands vs f32 reference through conv->BN->ReLU->conv->BN chain.
        assert max_err < 1e-1 and mean_err < 2e-2, (tag, max_err, mean_err)

    # Case 1: projection shortcut (stride 2, channel change) -------------------
    N, Cin, H, W, Cout, stride = 2, 4, 16, 16, 8, 2
    x = jax.random.normal(k[0], (N, Cin, H, W), jnp.float32)
    params = dict(
        w1=0.1 * jax.random.normal(k[1], (Cout, Cin, 3, 3), jnp.float32),
        w2=0.1 * jax.random.normal(k[2], (Cout, Cout, 3, 3), jnp.float32),
        ws=0.1 * jax.random.normal(k[3], (Cout, Cin, 1, 1), jnp.float32),
        g1=jnp.ones((Cout,), jnp.float32), b1=jnp.zeros((Cout,), jnp.float32),
        g2=jnp.ones((Cout,), jnp.float32), b2=jnp.zeros((Cout,), jnp.float32),
        gs=jnp.ones((Cout,), jnp.float32), bs=jnp.zeros((Cout,), jnp.float32),
    )
    out = jax.block_until_ready(fwd(x, params, stride))
    ref = jax.block_until_ready(reference_forward(x, params, stride))
    check(out, ref, (N, Cout, H // stride, W // stride), "proj")

    # Case 2: identity shortcut (stride 1, same channels) ----------------------
    C2 = 8
    x2 = jax.random.normal(k[4], (N, C2, H, W), jnp.float32)
    params2 = dict(
        w1=0.1 * jax.random.normal(k[5], (C2, C2, 3, 3), jnp.float32),
        w2=0.1 * jax.random.normal(k[6], (C2, C2, 3, 3), jnp.float32),
        g1=jnp.ones((C2,), jnp.float32), b1=jnp.zeros((C2,), jnp.float32),
        g2=jnp.ones((C2,), jnp.float32), b2=jnp.zeros((C2,), jnp.float32),
    )
    out2 = jax.block_until_ready(fwd(x2, params2, 1))
    ref2 = jax.block_until_ready(reference_forward(x2, params2, 1))
    check(out2, ref2, (N, C2, H, W), "identity")

    print("KERNEL_OK")
</pallas_src>

<mosaic_0001>
module attributes {stable_mosaic.version = 11 : i64} {
  func.func @conv1_kernel(%arg0: i32, %arg1: memref<4x9x9x128xbf16, #tpu.memory_space<vmem>>, %arg2: memref<9x128x128xbf16, #tpu.memory_space<vmem>>, %arg3: memref<1x64x128xbf16, #tpu.memory_space<vmem>>, %arg4: memref<1x2x128xf32, #tpu.memory_space<vmem>>) attributes {dimension_semantics = [#tpu.dimension_semantics<parallel>], iteration_bounds = array<i64: 2>, scalar_prefetch = 0 : i64, scratch_operands = 0 : i64, tpu.core_type = #tpu.core_type<tc>, window_params = [{transform_indices = @transform_0, window_bounds = array<i64: 4, 9, 9, 128>}, {pipeline_mode = #tpu.pipeline_mode<synchronous>, transform_indices = @transform_1, window_bounds = array<i64: 9, 128, 128>}, {transform_indices = @transform_2, window_bounds = array<i64: 1, 64, 128>}, {transform_indices = @transform_3, window_bounds = array<i64: 1, 2, 128>}]} {
    %cst = arith.constant 0.000000e+00 : f32
    %0 = vector.broadcast %cst : f32 to vector<64x128xf32>
    %c0 = arith.constant 0 : index
    %c0_0 = arith.constant 0 : index
    %c0_1 = arith.constant 0 : index
    %c0_2 = arith.constant 0 : index
    %1 = vector.load %arg1[%c0, %c0_0, %c0_1, %c0_2] : memref<4x9x9x128xbf16, #tpu.memory_space<vmem>>, vector<1x8x8x128xbf16>
    %2 = vector.shape_cast %1 : vector<1x8x8x128xbf16> to vector<8x8x128xbf16>
    %3 = vector.shape_cast %2 : vector<8x8x128xbf16> to vector<64x128xbf16>
    %c0_3 = arith.constant 0 : index
    %c0_4 = arith.constant 0 : index
    %c0_5 = arith.constant 0 : index
    %4 = vector.load %arg2[%c0_3, %c0_4, %c0_5] : memref<9x128x128xbf16, #tpu.memory_space<vmem>>, vector<1x128x128xbf16>
    %5 = vector.shape_cast %4 : vector<1x128x128xbf16> to vector<128x128xbf16>
    %cst_6 = arith.constant dense<0.000000e+00> : vector<64x128xf32>
    %6 = tpu.matmul %3, %5, %cst_6 {dimension_numbers = #tpu.dot_dimension_numbers<[1], [0], [0], [1], [0, 0, 1, 1], [], []>} : vector<64x128xbf16>, vector<128x128xbf16>, vector<64x128xf32> -> vector<64x128xf32>
    %7 = arith.addf %0, %6 : vector<64x128xf32>
    %c1 = arith.constant 1 : index
    %c0_7 = arith.constant 0 : index
    %c0_8 = arith.constant 0 : index
    %c0_9 = arith.constant 0 : index
    %8 = vector.load %arg1[%c1, %c0_7, %c0_8, %c0_9] : memref<4x9x9x128xbf16, #tpu.memory_space<vmem>>, vector<1x8x8x128xbf16>
    %9 = vector.shape_cast %8 : vector<1x8x8x128xbf16> to vector<8x8x128xbf16>
    %10 = vector.shape_cast %9 : vector<8x8x128xbf16> to vector<64x128xbf16>
    %c1_10 = arith.constant 1 : index
    %c0_11 = arith.constant 0 : index
    %c0_12 = arith.constant 0 : index
    %11 = vector.load %arg2[%c1_10, %c0_11, %c0_12] : memref<9x128x128xbf16, #tpu.memory_space<vmem>>, vector<1x128x128xbf16>
    %12 = vector.shape_cast %11 : vector<1x128x128xbf16> to vector<128x128xbf16>
    %cst_13 = arith.constant dense<0.000000e+00> : vector<64x128xf32>
    %13 = tpu.matmul %10, %12, %cst_13 {dimension_numbers = #tpu.dot_dimension_numbers<[1], [0], [0], [1], [0, 0, 1, 1], [], []>} : vector<64x128xbf16>, vector<128x128xbf16>, vector<64x128xf32> -> vector<64x128xf32>
    %14 = arith.addf %7, %13 : vector<64x128xf32>
    %c0_14 = arith.constant 0 : index
    %c0_15 = arith.constant 0 : index
    %c1_16 = arith.constant 1 : index
    %c0_17 = arith.constant 0 : index
    %15 = vector.load %arg1[%c0_14, %c0_15, %c1_16, %c0_17] : memref<4x9x9x128xbf16, #tpu.memory_space<vmem>>, vector<1x8x8x128xbf16>
    %16 = vector.shape_cast %15 : vector<1x8x8x128xbf16> to vector<8x8x128xbf16>
    %17 = vector.shape_cast %16 : vector<8x8x128xbf16> to vector<64x128xbf16>
    %c2 = arith.constant 2 : index
    %c0_18 = arith.constant 0 : index
    %c0_19 = arith.constant 0 : index
    %18 = vector.load %arg2[%c2, %c0_18, %c0_19] : memref<9x128x128xbf16, #tpu.memory_space<vmem>>, vector<1x128x128xbf16>
    %19 = vector.shape_cast %18 : vector<1x128x128xbf16> to vector<128x128xbf16>
    %cst_20 = arith.constant dense<0.000000e+00> : vector<64x128xf32>
    %20 = tpu.matmul %17, %19, %cst_20 {dimension_numbers = #tpu.dot_dimension_numbers<[1], [0], [0], [1], [0, 0, 1, 1], [], []>} : vector<64x128xbf16>, vector<128x128xbf16>, vector<64x128xf32> -> vector<64x128xf32>
    %21 = arith.addf %14, %20 : vector<64x128xf32>
    %c2_21 = arith.constant 2 : index
    %c0_22 = arith.constant 0 : index
    %c0_23 = arith.constant 0 : index
    %c0_24 = arith.constant 0 : index
    %22 = vector.load %arg1[%c2_21, %c0_22, %c0_23, %c0_24] : memref<4x9x9x128xbf16, #tpu.memory_space<vmem>>, vector<1x8x8x128xbf16>
    %23 = vector.shape_cast %22 : vector<1x8x8x128xbf16> to vector<8x8x128xbf16>
    %24 = vector.shape_cast %23 : vector<8x8x128xbf16> to vector<64x128xbf16>
    %c3 = arith.constant 3 : index
    %c0_25 = arith.constant 0 : index
    %c0_26 = arith.constant 0 : index
    %25 = vector.load %arg2[%c3, %c0_25, %c0_26] : memref<9x128x128xbf16, #tpu.memory_space<vmem>>, vector<1x128x128xbf16>
    %26 = vector.shape_cast %25 : vector<1x128x128xbf16> to vector<128x128xbf16>
    %cst_27 = arith.constant dense<0.000000e+00> : vector<64x128xf32>
    %27 = tpu.matmul %24, %26, %cst_27 {dimension_numbers = #tpu.dot_dimension_numbers<[1], [0], [0], [1], [0, 0, 1, 1], [], []>} : vector<64x128xbf16>, vector<128x128xbf16>, vector<64x128xf32> -> vector<64x128xf32>
    %28 = arith.addf %21, %27 : vector<64x128xf32>
    %c3_28 = arith.constant 3 : index
    %c0_29 = arith.constant 0 : index
    %c0_30 = arith.constant 0 : index
    %c0_31 = arith.constant 0 : index
    %29 = vector.load %arg1[%c3_28, %c0_29, %c0_30, %c0_31] : memref<4x9x9x128xbf16, #tpu.memory_space<vmem>>, vector<1x8x8x128xbf16>
    %30 = vector.shape_cast %29 : vector<1x8x8x128xbf16> to vector<8x8x128xbf16>
    %31 = vector.shape_cast %30 : vector<8x8x128xbf16> to vector<64x128xbf16>
    %c4 = arith.constant 4 : index
    %c0_32 = arith.constant 0 : index
    %c0_33 = arith.constant 0 : index
    %32 = vector.load %arg2[%c4, %c0_32, %c0_33] : memref<9x128x128xbf16, #tpu.memory_space<vmem>>, vector<1x128x128xbf16>
    %33 = vector.shape_cast %32 : vector<1x128x128xbf16> to vector<128x128xbf16>
    %cst_34 = arith.constant dense<0.000000e+00> : vector<64x128xf32>
    %34 = tpu.matmul %31, %33, %cst_34 {dimension_numbers = #tpu.dot_dimension_numbers<[1], [0], [0], [1], [0, 0, 1, 1], [], []>} : vector<64x128xbf16>, vector<128x128xbf16>, vector<64x128xf32> -> vector<64x128xf32>
    %35 = arith.addf %28, %34 : vector<64x128xf32>
    %c2_35 = arith.constant 2 : index
    %c0_36 = arith.constant 0 : index
    %c1_37 = arith.constant 1 : index
    %c0_38 = arith.constant 0 : index
    %36 = vector.load %arg1[%c2_35, %c0_36, %c1_37, %c0_38] : memref<4x9x9x128xbf16, #tpu.memory_space<vmem>>, vector<1x8x8x128xbf16>
    %37 = vector.shape_cast %36 : vector<1x8x8x128xbf16> to vector<8x8x128xbf16>
    %38 = vector.shape_cast %37 : vector<8x8x128xbf16> to vector<64x128xbf16>
    %c5 = arith.constant 5 : index
    %c0_39 = arith.constant 0 : index
    %c0_40 = arith.constant 0 : index
    %39 = vector.load %arg2[%c5, %c0_39, %c0_40] : memref<9x128x128xbf16, #tpu.memory_space<vmem>>, vector<1x128x128xbf16>
    %40 = vector.shape_cast %39 : vector<1x128x128xbf16> to vector<128x128xbf16>
    %cst_41 = arith.constant dense<0.000000e+00> : vector<64x128xf32>
    %41 = tpu.matmul %38, %40, %cst_41 {dimension_numbers = #tpu.dot_dimension_numbers<[1], [0], [0], [1], [0, 0, 1, 1], [], []>} : vector<64x128xbf16>, vector<128x128xbf16>, vector<64x128xf32> -> vector<64x128xf32>
    %42 = arith.addf %35, %41 : vector<64x128xf32>
    %c0_42 = arith.constant 0 : index
    %c1_43 = arith.constant 1 : index
    %c0_44 = arith.constant 0 : index
    %c0_45 = arith.constant 0 : index
    %43 = vector.load %arg1[%c0_42, %c1_43, %c0_44, %c0_45] : memref<4x9x9x128xbf16, #tpu.memory_space<vmem>>, vector<1x8x8x128xbf16>
    %44 = vector.shape_cast %43 : vector<1x8x8x128xbf16> to vector<8x8x128xbf16>
    %45 = vector.shape_cast %44 : vector<8x8x128xbf16> to vector<64x128xbf16>
    %c6 = arith.constant 6 : index
    %c0_46 = arith.constant 0 : index
    %c0_47 = arith.constant 0 : index
    %46 = vector.load %arg2[%c6, %c0_46, %c0_47] : memref<9x128x128xbf16, #tpu.memory_space<vmem>>, vector<1x128x128xbf16>
    %47 = vector.shape_cast %46 : vector<1x128x128xbf16> to vector<128x128xbf16>
    %cst_48 = arith.constant dense<0.000000e+00> : vector<64x128xf32>
    %48 = tpu.matmul %45, %47, %cst_48 {dimension_numbers = #tpu.dot_dimension_numbers<[1], [0], [0], [1], [0, 0, 1, 1], [], []>} : vector<64x128xbf16>, vector<128x128xbf16>, vector<64x128xf32> -> vector<64x128xf32>
    %49 = arith.addf %42, %48 : vector<64x128xf32>
    %c1_49 = arith.constant 1 : index
    %c1_50 = arith.constant 1 : index
    %c0_51 = arith.constant 0 : index
    %c0_52 = arith.constant 0 : index
    %50 = vector.load %arg1[%c1_49, %c1_50, %c0_51, %c0_52] : memref<4x9x9x128xbf16, #tpu.memory_space<vmem>>, vector<1x8x8x128xbf16>
    %51 = vector.shape_cast %50 : vector<1x8x8x128xbf16> to vector<8x8x128xbf16>
    %52 = vector.shape_cast %51 : vector<8x8x128xbf16> to vector<64x128xbf16>
    %c7 = arith.constant 7 : index
    %c0_53 = arith.constant 0 : index
    %c0_54 = arith.constant 0 : index
    %53 = vector.load %arg2[%c7, %c0_53, %c0_54] : memref<9x128x128xbf16, #tpu.memory_space<vmem>>, vector<1x128x128xbf16>
    %54 = vector.shape_cast %53 : vector<1x128x128xbf16> to vector<128x128xbf16>
    %cst_55 = arith.constant dense<0.000000e+00> : vector<64x128xf32>
    %55 = tpu.matmul %52, %54, %cst_55 {dimension_numbers = #tpu.dot_dimension_numbers<[1], [0], [0], [1], [0, 0, 1, 1], [], []>} : vector<64x128xbf16>, vector<128x128xbf16>, vector<64x128xf32> -> vector<64x128xf32>
    %56 = arith.addf %49, %55 : vector<64x128xf32>
    %c0_56 = arith.constant 0 : index
    %c1_57 = arith.constant 1 : index
    %c1_58 = arith.constant 1 : index
    %c0_59 = arith.constant 0 : index
    %57 = vector.load %arg1[%c0_56, %c1_57, %c1_58, %c0_59] : memref<4x9x9x128xbf16, #tpu.memory_space<vmem>>, vector<1x8x8x128xbf16>
    %58 = vector.shape_cast %57 : vector<1x8x8x128xbf16> to vector<8x8x128xbf16>
    %59 = vector.shape_cast %58 : vector<8x8x128xbf16> to vector<64x128xbf16>
    %c8 = arith.constant 8 : index
    %c0_60 = arith.constant 0 : index
    %c0_61 = arith.constant 0 : index
    %60 = vector.load %arg2[%c8, %c0_60, %c0_61] : memref<9x128x128xbf16, #tpu.memory_space<vmem>>, vector<1x128x128xbf16>
    %61 = vector.shape_cast %60 : vector<1x128x128xbf16> to vector<128x128xbf16>
    %cst_62 = arith.constant dense<0.000000e+00> : vector<64x128xf32>
    %62 = tpu.matmul %59, %61, %cst_62 {dimension_numbers = #tpu.dot_dimension_numbers<[1], [0], [0], [1], [0, 0, 1, 1], [], []>} : vector<64x128xbf16>, vector<128x128xbf16>, vector<64x128xf32> -> vector<64x128xf32>
    %63 = arith.addf %56, %62 : vector<64x128xf32>
    %64 = arith.truncf %63 : vector<64x128xf32> to vector<64x128xbf16>
    %c0_63 = arith.constant 0 : index
    %c0_64 = arith.constant 0 : index
    %c0_65 = arith.constant 0 : index
    %65 = vector.load %arg3[%c0_63, %c0_64, %c0_65] : memref<1x64x128xbf16, #tpu.memory_space<vmem>>, vector<1x64x128xbf16>
    %66 = vector.shape_cast %65 : vector<1x64x128xbf16> to vector<64x128xbf16>
    %67 = vector.shape_cast %64 : vector<64x128xbf16> to vector<1x64x128xbf16>
    tpu.vector_store %arg3[%c0_63, %c0_64, %c0_65], %67 {strides = array<i32>} : memref<1x64x128xbf16, #tpu.memory_space<vmem>>, vector<1x64x128xbf16>,
    %cst_66 = arith.constant dense<0.000000e+00> : vector<128xf32>
    %68 = vector.multi_reduction <add>, %63, %cst_66 [0] : vector<64x128xf32> to vector<128xf32>
    %69 = vector.shape_cast %68 : vector<128xf32> to vector<1x128xf32>
    %c0_67 = arith.constant 0 : index
    %c0_68 = arith.constant 0 : index
    %c0_69 = arith.constant 0 : index
    %70 = vector.load %arg4[%c0_67, %c0_68, %c0_69] : memref<1x2x128xf32, #tpu.memory_space<vmem>>, vector<1x1x128xf32>
    %71 = vector.shape_cast %70 : vector<1x1x128xf32> to vector<1x128xf32>
    %72 = vector.shape_cast %69 : vector<1x128xf32> to vector<1x1x128xf32>
    tpu.vector_store %arg4[%c0_67, %c0_68, %c0_69], %72 {strides = array<i32>} : memref<1x2x128xf32, #tpu.memory_space<vmem>>, vector<1x1x128xf32>,
    %73 = arith.mulf %63, %63 : vector<64x128xf32>
    %cst_70 = arith.constant dense<0.000000e+00> : vector<128xf32>
    %74 = vector.multi_reduction <add>, %73, %cst_70 [0] : vector<64x128xf32> to vector<128xf32>
    %75 = vector.shape_cast %74 : vector<128xf32> to vector<1x128xf32>
    %c0_71 = arith.constant 0 : index
    %c1_72 = arith.constant 1 : index
    %c0_73 = arith.constant 0 : index
    %76 = vector.load %arg4[%c0_71, %c1_72, %c0_73] : memref<1x2x128xf32, #tpu.memory_space<vmem>>, vector<1x1x128xf32>
    %77 = vector.shape_cast %76 : vector<1x1x128xf32> to vector<1x128xf32>
    %78 = vector.shape_cast %75 : vector<1x128xf32> to vector<1x1x128xf32>
    tpu.vector_store %arg4[%c0_71, %c1_72, %c0_73], %78 {strides = array<i32>} : memref<1x2x128xf32, #tpu.memory_space<vmem>>, vector<1x1x128xf32>,
    return
  }
  func.func @transform_0(%arg0: i32) -> (i32, i32, i32, i32) {
    %c0_i32 = arith.constant 0 : i32
    %c0_i32_0 = arith.constant 0 : i32
    %c0_i32_1 = arith.constant 0 : i32
    %c0_i32_2 = arith.constant 0 : i32
    return %arg0, %c0_i32, %c0_i32_0, %c0_i32_1 : i32, i32, i32, i32
  }
  func.func @transform_1(%arg0: i32) -> (i32, i32, i32) {
    %c0_i32 = arith.constant 0 : i32
    %c0_i32_0 = arith.constant 0 : i32
    %c0_i32_1 = arith.constant 0 : i32
    %c0_i32_2 = arith.constant 0 : i32
    return %c0_i32, %c0_i32_0, %c0_i32_1 : i32, i32, i32
  }
  func.func @transform_2(%arg0: i32) -> (i32, i32, i32) {
    %c0_i32 = arith.constant 0 : i32
    %c0_i32_0 = arith.constant 0 : i32
    %c0_i32_1 = arith.constant 0 : i32
    return %arg0, %c0_i32, %c0_i32_0 : i32, i32, i32
  }
  func.func @transform_3(%arg0: i32) -> (i32, i32, i32) {
    %c0_i32 = arith.constant 0 : i32
    %c0_i32_0 = arith.constant 0 : i32
    %c0_i32_1 = arith.constant 0 : i32
    return %arg0, %c0_i32, %c0_i32_0 : i32, i32, i32
  }
}

module attributes {stable_mosaic.version = 11 : i64} {
  func.func @mid_kernel_proj(%arg0: i32, %arg1: memref<1x64x128xbf16, #tpu.memory_space<vmem>>, %arg2: memref<4x9x9x128xbf16, #tpu.memory_space<vmem>>, %arg3: memref<9x128x128xbf16, #tpu.memory_space<vmem>>, %arg4: memref<128x128xbf16, #tpu.memory_space<vmem>>, %arg5: memref<1x128xf32, #tpu.memory_space<vmem>>, %arg6: memref<1x128xf32, #tpu.memory_space<vmem>>, %arg7: memref<1x64x128xbf16, #tpu.memory_space<vmem>>, %arg8: memref<1x64x128xbf16, #tpu.memory_space<vmem>>, %arg9: memref<1x2x128xf32, #tpu.memory_space<vmem>>, %arg10: memref<1x2x128xf32, #tpu.memory_space<vmem>>, %arg11: memref<10x10x128xf32, #tpu.memory_space<vmem>>) attributes {dimension_semantics = [#tpu.dimension_semantics<parallel>], iteration_bounds = array<i64: 2>, scalar_prefetch = 0 : i64, scratch_operands = 1 : i64, tpu.core_type = #tpu.core_type<tc>, window_params = [{transform_indices = @transform_0, window_bounds = array<i64: 1, 64, 128>}, {transform_indices = @transform_1, window_bounds = array<i64: 4, 9, 9, 128>}, {pipeline_mode = #tpu.pipeline_mode<synchronous>, transform_indices = @transform_2, window_bounds = array<i64: 9, 128, 128>}, {pipeline_mode = #tpu.pipeline_mode<synchronous>, transform_indices = @transform_3, window_bounds = array<i64: 128, 128>}, {pipeline_mode = #tpu.pipeline_mode<synchronous>, transform_indices = @transform_4, window_bounds = array<i64: 1, 128>}, {pipeline_mode = #tpu.pipeline_mode<synchronous>, transform_indices = @transform_5, window_bounds = array<i64: 1, 128>}, {transform_indices = @transform_6, window_bounds = array<i64: 1, 64, 128>}, {transform_indices = @transform_7, window_bounds = array<i64: 1, 64, 128>}, {transform_indices = @transform_8, window_bounds = array<i64: 1, 2, 128>}, {transform_indices = @transform_9, window_bounds = array<i64: 1, 2, 128>}]} {
    %c0 = arith.constant 0 : index
    %c0_0 = arith.constant 0 : index
    %c0_1 = arith.constant 0 : index
    %0 = vector.load %arg1[%c0, %c0_0, %c0_1] : memref<1x64x128xbf16, #tpu.memory_space<vmem>>, vector<1x64x128xbf16>
    %1 = vector.shape_cast %0 : vector<1x64x128xbf16> to vector<64x128xbf16>
    %2 = arith.extf %1 : vector<64x128xbf16> to vector<64x128xf32>
    %c0_2 = arith.constant 0 : index
    %c0_3 = arith.constant 0 : index
    %3 = vector.load %arg5[%c0_2, %c0_3] : memref<1x128xf32, #tpu.memory_space<vmem>>, vector<1x128xf32>
    %4 = vector.broadcast %3 : vector<1x128xf32> to vector<64x128xf32>
    %5 = arith.mulf %2, %4 : vector<64x128xf32>
    %c0_4 = arith.constant 0 : index
    %c0_5 = arith.constant 0 : index
    %6 = vector.load %arg6[%c0_4, %c0_5] : memref<1x128xf32, #tpu.memory_space<vmem>>, vector<1x128xf32>
    %7 = vector.broadcast %6 : vector<1x128xf32> to vector<64x128xf32>
    %8 = arith.addf %5, %7 : vector<64x128xf32>
    %cst = arith.constant 0.000000e+00 : f32
    %9 = vector.broadcast %cst : f32 to vector<64x128xf32>
    %10 = arith.maximumf %8, %9 : vector<64x128xf32>
    %cst_6 = arith.constant 0.000000e+00 : f32
    %11 = vector.broadcast %cst_6 : f32 to vector<1x10x128xf32>
    %cst_7 = arith.constant 0.000000e+00 : f32
    %12 = vector.broadcast %cst_7 : f32 to vector<10x1x128xf32>
    %c0_8 = arith.constant 0 : index
    %c0_9 = arith.constant 0 : index
    %c0_10 = arith.constant 0 : index
    %13 = vector.load %arg11[%c0_8, %c0_9, %c0_10] : memref<10x10x128xf32, #tpu.memory_space<vmem>>, vector<1x10x128xf32>
    tpu.vector_store %arg11[%c0_8, %c0_9, %c0_10], %11 {strides = array<i32>} : memref<10x10x128xf32, #tpu.memory_space<vmem>>, vector<1x10x128xf32>,
    %c9 = arith.constant 9 : index
    %c0_11 = arith.constant 0 : index
    %c0_12 = arith.constant 0 : index
    %14 = vector.load %arg11[%c9, %c0_11, %c0_12] : memref<10x10x128xf32, #tpu.memory_space<vmem>>, vector<1x10x128xf32>
    tpu.vector_store %arg11[%c9, %c0_11, %c0_12], %11 {strides = array<i32>} : memref<10x10x128xf32, #tpu.memory_space<vmem>>, vector<1x10x128xf32>,
    %c0_13 = arith.constant 0 : index
    %c0_14 = arith.constant 0 : index
    %c0_15 = arith.constant 0 : index
    %15 = vector.load %arg11[%c0_13, %c0_14, %c0_15] : memref<10x10x128xf32, #tpu.memory_space<vmem>>, vector<10x1x128xf32>
    tpu.vector_store %arg11[%c0_13, %c0_14, %c0_15], %12 {strides = array<i32>} : memref<10x10x128xf32, #tpu.memory_space<vmem>>, vector<10x1x128xf32>,
    %c0_16 = arith.constant 0 : index
    %c9_17 = arith.constant 9 : index
    %c0_18 = arith.constant 0 : index
    %16 = vector.load %arg11[%c0_16, %c9_17, %c0_18] : memref<10x10x128xf32, #tpu.memory_space<vmem>>, vector<10x1x128xf32>
    tpu.vector_store %arg11[%c0_16, %c9_17, %c0_18], %12 {strides = array<i32>} : memref<10x10x128xf32, #tpu.memory_space<vmem>>, vector<10x1x128xf32>,
    %17 = vector.shape_cast %10 : vector<64x128xf32> to vector<8x8x128xf32>
    %c1 = arith.constant 1 : index
    %c1_19 = arith.constant 1 : index
    %c0_20 = arith.constant 0 : index
    %18 = vector.load %arg11[%c1, %c1_19, %c0_20] : memref<10x10x128xf32, #tpu.memory_space<vmem>>, vector<8x8x128xf32>
    tpu.vector_store %arg11[%c1, %c1_19, %c0_20], %17 {strides = array<i32>} : memref<10x10x128xf32, #tpu.memory_space<vmem>>, vector<8x8x128xf32>,
    %cst_21 = arith.constant 0.000000e+00 : f32
    %19 = vector.broadcast %cst_21 : f32 to vector<64x128xf32>
    %c0_22 = arith.constant 0 : index
    %c0_23 = arith.constant 0 : index
    %c0_24 = arith.constant 0 : index
    %20 = vector.load %arg11[%c0_22, %c0_23, %c0_24] : memref<10x10x128xf32, #tpu.memory_space<vmem>>, vector<8x8x128xf32>
    %21 = vector.shape_cast %20 : vector<8x8x128xf32> to vector<64x128xf32>
    %22 = arith.truncf %21 : vector<64x128xf32> to vector<64x128xbf16>
    %c0_25 = arith.constant 0 : index
    %c0_26 = arith.constant 0 : index
    %c0_27 = arith.constant 0 : index
    %23 = vector.load %arg3[%c0_25, %c0_26, %c0_27] : memref<9x128x128xbf16, #tpu.memory_space<vmem>>, vector<1x128x128xbf16>
    %24 = vector.shape_cast %23 : vector<1x128x128xbf16> to vector<128x128xbf16>
    %cst_28 = arith.constant dense<0.000000e+00> : vector<64x128xf32>
    %25 = tpu.matmul %22, %24, %cst_28 {dimension_numbers = #tpu.dot_dimension_numbers<[1], [0], [0], [1], [0, 0, 1, 1], [], []>} : vector<64x128xbf16>, vector<128x128xbf16>, vector<64x128xf32> -> vector<64x128xf32>
    %26 = arith.addf %19, %25 : vector<64x128xf32>
    %c0_29 = arith.constant 0 : index
    %c1_30 = arith.constant 1 : index
    %c0_31 = arith.constant 0 : index
    %27 = vector.load %arg11[%c0_29, %c1_30, %c0_31] : memref<10x10x128xf32, #tpu.memory_space<vmem>>, vector<8x8x128xf32>
    %28 = vector.shape_cast %27 : vector<8x8x128xf32> to vector<64x128xf32>
    %29 = arith.truncf %28 : vector<64x128xf32> to vector<64x128xbf16>
    %c1_32 = arith.constant 1 : index
    %c0_33 = arith.constant 0 : index
    %c0_34 = arith.constant 0 : index
    %30 = vector.load %arg3[%c1_32, %c0_33, %c0_34] : memref<9x128x128xbf16, #tpu.memory_space<vmem>>, vector<1x128x128xbf16>
    %31 = vector.shape_cast %30 : vector<1x128x128xbf16> to vector<128x128xbf16>
    %cst_35 = arith.constant dense<0.000000e+00> : vector<64x128xf32>
    %32 = tpu.matmul %29, %31, %cst_35 {dimension_numbers = #tpu.dot_dimension_numbers<[1], [0], [0], [1], [0, 0, 1, 1], [], []>} : vector<64x128xbf16>, vector<128x128xbf16>, vector<64x128xf32> -> vector<64x128xf32>
    %33 = arith.addf %26, %32 : vector<64x128xf32>
    %c0_36 = arith.constant 0 : index
    %c2 = arith.constant 2 : index
    %c0_37 = arith.constant 0 : index
    %34 = vector.load %arg11[%c0_36, %c2, %c0_37] : memref<10x10x128xf32, #tpu.memory_space<vmem>>, vector<8x8x128xf32>
    %35 = vector.shape_cast %34 : vector<8x8x128xf32> to vector<64x128xf32>
    %36 = arith.truncf %35 : vector<64x128xf32> to vector<64x128xbf16>
    %c2_38 = arith.constant 2 : index
    %c0_39 = arith.constant 0 : index
    %c0_40 = arith.constant 0 : index
    %37 = vector.load %arg3[%c2_38, %c0_39, %c0_40] : memref<9x128x128xbf16, #tpu.memory_space<vmem>>, vector<1x128x128xbf16>
    %38 = vector.shape_cast %37 : vector<1x128x128xbf16> to vector<128x128xbf16>
    %cst_41 = arith.constant dense<0.000000e+00> : vector<64x128xf32>
    %39 = tpu.matmul %36, %38, %cst_41 {dimension_numbers = #tpu.dot_dimension_numbers<[1], [0], [0], [1], [0, 0, 1, 1], [], []>} : vector<64x128xbf16>, vector<128x128xbf16>, vector<64x128xf32> -> vector<64x128xf32>
    %40 = arith.addf %33, %39 : vector<64x128xf32>
    %c1_42 = arith.constant 1 : index
    %c0_43 = arith.constant 0 : index
    %c0_44 = arith.constant 0 : index
    %41 = vector.load %arg11[%c1_42, %c0_43, %c0_44] : memref<10x10x128xf32, #tpu.memory_space<vmem>>, vector<8x8x128xf32>
    %42 = vector.shape_cast %41 : vector<8x8x128xf32> to vector<64x128xf32>
    %43 = arith.truncf %42 : vector<64x128xf32> to vector<64x128xbf16>
    %c3 = arith.constant 3 : index
    %c0_45 = arith.constant 0 : index
    %c0_46 = arith.constant 0 : index
    %44 = vector.load %arg3[%c3, %c0_45, %c0_46] : memref<9x128x128xbf16, #tpu.memory_space<vmem>>, vector<1x128x128xbf16>
    %45 = vector.shape_cast %44 : vector<1x128x128xbf16> to vector<128x128xbf16>
    %cst_47 = arith.constant dense<0.000000e+00> : vector<64x128xf32>
    %46 = tpu.matmul %43, %45, %cst_47 {dimension_numbers = #tpu.dot_dimension_numbers<[1], [0], [0], [1], [0, 0, 1, 1], [], []>} : vector<64x128xbf16>, vector<128x128xbf16>, vector<64x128xf32> -> vector<64x128xf32>
    %47 = arith.addf %40, %46 : vector<64x128xf32>
    %c1_48 = arith.constant 1 : index
    %c1_49 = arith.constant 1 : index
    %c0_50 = arith.constant 0 : index
    %48 = vector.load %arg11[%c1_48, %c1_49, %c0_50] : memref<10x10x128xf32, #tpu.memory_space<vmem>>, vector<8x8x128xf32>
    %49 = vector.shape_cast %48 : vector<8x8x128xf32> to vector<64x128xf32>
    %50 = arith.truncf %49 : vector<64x128xf32> to vector<64x128xbf16>
    %c4 = arith.constant 4 : index
    %c0_51 = arith.constant 0 : index
    %c0_52 = arith.constant 0 : index
    %51 = vector.load %arg3[%c4, %c0_51, %c0_52] : memref<9x128x128xbf16, #tpu.memory_space<vmem>>, vector<1x128x128xbf16>
    %52 = vector.shape_cast %51 : vector<1x128x128xbf16> to vector<128x128xbf16>
    %cst_53 = arith.constant dense<0.000000e+00> : vector<64x128xf32>
    %53 = tpu.matmul %50, %52, %cst_53 {dimension_numbers = #tpu.dot_dimension_numbers<[1], [0], [0], [1], [0, 0, 1, 1], [], []>} : vector<64x128xbf16>, vector<128x128xbf16>, vector<64x128xf32> -> vector<64x128xf32>
    %54 = arith.addf %47, %53 : vector<64x128xf32>
    %c1_54 = arith.constant 1 : index
    %c2_55 = arith.constant 2 : index
    %c0_56 = arith.constant 0 : index
    %55 = vector.load %arg11[%c1_54, %c2_55, %c0_56] : memref<10x10x128xf32, #tpu.memory_space<vmem>>, vector<8x8x128xf32>
    %56 = vector.shape_cast %55 : vector<8x8x128xf32> to vector<64x128xf32>
    %57 = arith.truncf %56 : vector<64x128xf32> to vector<64x128xbf16>
    %c5 = arith.constant 5 : index
    %c0_57 = arith.constant 0 : index
    %c0_58 = arith.constant 0 : index
    %58 = vector.load %arg3[%c5, %c0_57, %c0_58] : memref<9x128x128xbf16, #tpu.memory_space<vmem>>, vector<1x128x128xbf16>
    %59 = vector.shape_cast %58 : vector<1x128x128xbf16> to vector<128x128xbf16>
    %cst_59 = arith.constant dense<0.000000e+00> : vector<64x128xf32>
    %60 = tpu.matmul %57, %59, %cst_59 {dimension_numbers = #tpu.dot_dimension_numbers<[1], [0], [0], [1], [0, 0, 1, 1], [], []>} : vector<64x128xbf16>, vector<128x128xbf16>, vector<64x128xf32> -> vector<64x128xf32>
    %61 = arith.addf %54, %60 : vector<64x128xf32>
    %c2_60 = arith.constant 2 : index
    %c0_61 = arith.constant 0 : index
    %c0_62 = arith.constant 0 : index
    %62 = vector.load %arg11[%c2_60, %c0_61, %c0_62] : memref<10x10x128xf32, #tpu.memory_space<vmem>>, vector<8x8x128xf32>
    %63 = vector.shape_cast %62 : vector<8x8x128xf32> to vector<64x128xf32>
    %64 = arith.truncf %63 : vector<64x128xf32> to vector<64x128xbf16>
    %c6 = arith.constant 6 : index
    %c0_63 = arith.constant 0 : index
    %c0_64 = arith.constant 0 : index
    %65 = vector.load %arg3[%c6, %c0_63, %c0_64] : memref<9x128x128xbf16, #tpu.memory_space<vmem>>, vector<1x128x128xbf16>
    %66 = vector.shape_cast %65 : vector<1x128x128xbf16> to vector<128x128xbf16>
    %cst_65 = arith.constant dense<0.000000e+00> : vector<64x128xf32>
    %67 = tpu.matmul %64, %66, %cst_65 {dimension_numbers = #tpu.dot_dimension_numbers<[1], [0], [0], [1], [0, 0, 1, 1], [], []>} : vector<64x128xbf16>, vector<128x128xbf16>, vector<64x128xf32> -> vector<64x128xf32>
    %68 = arith.addf %61, %67 : vector<64x128xf32>
    %c2_66 = arith.constant 2 : index
    %c1_67 = arith.constant 1 : index
    %c0_68 = arith.constant 0 : index
    %69 = vector.load %arg11[%c2_66, %c1_67, %c0_68] : memref<10x10x128xf32, #tpu.memory_space<vmem>>, vector<8x8x128xf32>
    %70 = vector.shape_cast %69 : vector<8x8x128xf32> to vector<64x128xf32>
    %71 = arith.truncf %70 : vector<64x128xf32> to vector<64x128xbf16>
    %c7 = arith.constant 7 : index
    %c0_69 = arith.constant 0 : index
    %c0_70 = arith.constant 0 : index
    %72 = vector.load %arg3[%c7, %c0_69, %c0_70] : memref<9x128x128xbf16, #tpu.memory_space<vmem>>, vector<1x128x128xbf16>
    %73 = vector.shape_cast %72 : vector<1x128x128xbf16> to vector<128x128xbf16>
    %cst_71 = arith.constant dense<0.000000e+00> : vector<64x128xf32>
    %74 = tpu.matmul %71, %73, %cst_71 {dimension_numbers = #tpu.dot_dimension_numbers<[1], [0], [0], [1], [0, 0, 1, 1], [], []>} : vector<64x128xbf16>, vector<128x128xbf16>, vector<64x128xf32> -> vector<64x128xf32>
    %75 = arith.addf %68, %74 : vector<64x128xf32>
    %c2_72 = arith.constant 2 : index
    %c2_73 = arith.constant 2 : index
    %c0_74 = arith.constant 0 : index
    %76 = vector.load %arg11[%c2_72, %c2_73, %c0_74] : memref<10x10x128xf32, #tpu.memory_space<vmem>>, vector<8x8x128xf32>
    %77 = vector.shape_cast %76 : vector<8x8x128xf32> to vector<64x128xf32>
    %78 = arith.truncf %77 : vector<64x128xf32> to vector<64x128xbf16>
    %c8 = arith.constant 8 : index
    %c0_75 = arith.constant 0 : index
    %c0_76 = arith.constant 0 : index
    %79 = vector.load %arg3[%c8, %c0_75, %c0_76] : memref<9x128x128xbf16, #tpu.memory_space<vmem>>, vector<1x128x128xbf16>
    %80 = vector.shape_cast %79 : vector<1x128x128xbf16> to vector<128x128xbf16>
    %cst_77 = arith.constant dense<0.000000e+00> : vector<64x128xf32>
    %81 = tpu.matmul %78, %80, %cst_77 {dimension_numbers = #tpu.dot_dimension_numbers<[1], [0], [0], [1], [0, 0, 1, 1], [], []>} : vector<64x128xbf16>, vector<128x128xbf16>, vector<64x128xf32> -> vector<64x128xf32>
    %82 = arith.addf %75, %81 : vector<64x128xf32>
    %83 = arith.truncf %82 : vector<64x128xf32> to vector<64x128xbf16>
    %c0_78 = arith.constant 0 : index
    %c0_79 = arith.constant 0 : index
    %c0_80 = arith.constant 0 : index
    %84 = vector.load %arg7[%c0_78, %c0_79, %c0_80] : memref<1x64x128xbf16, #tpu.memory_space<vmem>>, vector<1x64x128xbf16>
    %85 = vector.shape_cast %84 : vector<1x64x128xbf16> to vector<64x128xbf16>
    %86 = vector.shape_cast %83 : vector<64x128xbf16> to vector<1x64x128xbf16>
    tpu.vector_store %arg7[%c0_78, %c0_79, %c0_80], %86 {strides = array<i32>} : memref<1x64x128xbf16, #tpu.memory_space<vmem>>, vector<1x64x128xbf16>,
    %cst_81 = arith.constant dense<0.000000e+00> : vector<128xf32>
    %87 = vector.multi_reduction <add>, %82, %cst_81 [0] : vector<64x128xf32> to vector<128xf32>
    %88 = vector.shape_cast %87 : vector<128xf32> to vector<1x128xf32>
    %c0_82 = arith.constant 0 : index
    %c0_83 = arith.constant 0 : index
    %c0_84 = arith.constant 0 : index
    %89 = vector.load %arg9[%c0_82, %c0_83, %c0_84] : memref<1x2x128xf32, #tpu.memory_space<vmem>>, vector<1x1x128xf32>
    %90 = vector.shape_cast %89 : vector<1x1x128xf32> to vector<1x128xf32>
    %91 = vector.shape_cast %88 : vector<1x128xf32> to vector<1x1x128xf32>
    tpu.vector_store %arg9[%c0_82, %c0_83, %c0_84], %91 {strides = array<i32>} : memref<1x2x128xf32, #tpu.memory_space<vmem>>, vector<1x1x128xf32>,
    %92 = arith.mulf %82, %82 : vector<64x128xf32>
    %cst_85 = arith.constant dense<0.000000e+00> : vector<128xf32>
    %93 = vector.multi_reduction <add>, %92, %cst_85 [0] : vector<64x128xf32> to vector<128xf32>
    %94 = vector.shape_cast %93 : vector<128xf32> to vector<1x128xf32>
    %c0_86 = arith.constant 0 : index
    %c1_87 = arith.constant 1 : index
    %c0_88 = arith.constant 0 : index
    %95 = vector.load %arg9[%c0_86, %c1_87, %c0_88] : memref<1x2x128xf32, #tpu.memory_space<vmem>>, vector<1x1x128xf32>
    %96 = vector.shape_cast %95 : vector<1x1x128xf32> to vector<1x128xf32>
    %97 = vector.shape_cast %94 : vector<1x128xf32> to vector<1x1x128xf32>
    tpu.vector_store %arg9[%c0_86, %c1_87, %c0_88], %97 {strides = array<i32>} : memref<1x2x128xf32, #tpu.memory_space<vmem>>, vector<1x1x128xf32>,
    %c3_89 = arith.constant 3 : index
    %c0_90 = arith.constant 0 : index
    %c0_91 = arith.constant 0 : index
    %c0_92 = arith.constant 0 : index
    %98 = vector.load %arg2[%c3_89, %c0_90, %c0_91, %c0_92] : memref<4x9x9x128xbf16, #tpu.memory_space<vmem>>, vector<1x8x8x128xbf16>
    %99 = vector.shape_cast %98 : vector<1x8x8x128xbf16> to vector<8x8x128xbf16>
    %100 = vector.shape_cast %99 : vector<8x8x128xbf16> to vector<64x128xbf16>
    %c0_93 = arith.constant 0 : index
    %c0_94 = arith.constant 0 : index
    %101 = vector.load %arg4[%c0_93, %c0_94] : memref<128x128xbf16, #tpu.memory_space<vmem>>, vector<128x128xbf16>
    %cst_95 = arith.constant dense<0.000000e+00> : vector<64x128xf32>
    %102 = tpu.matmul %100, %101, %cst_95 {dimension_numbers = #tpu.dot_dimension_numbers<[1], [0], [0], [1], [0, 0, 1, 1], [], []>} : vector<64x128xbf16>, vector<128x128xbf16>, vector<64x128xf32> -> vector<64x128xf32>
    %103 = arith.truncf %102 : vector<64x128xf32> to vector<64x128xbf16>
    %c0_96 = arith.constant 0 : index
    %c0_97 = arith.constant 0 : index
    %c0_98 = arith.constant 0 : index
    %104 = vector.load %arg8[%c0_96, %c0_97, %c0_98] : memref<1x64x128xbf16, #tpu.memory_space<vmem>>, vector<1x64x128xbf16>
    %105 = vector.shape_cast %104 : vector<1x64x128xbf16> to vector<64x128xbf16>
    %106 = vector.shape_cast %103 : vector<64x128xbf16> to vector<1x64x128xbf16>
    tpu.vector_store %arg8[%c0_96, %c0_97, %c0_98], %106 {strides = array<i32>} : memref<1x64x128xbf16, #tpu.memory_space<vmem>>, vector<1x64x128xbf16>,
    %cst_99 = arith.constant dense<0.000000e+00> : vector<128xf32>
    %107 = vector.multi_reduction <add>, %102, %cst_99 [0] : vector<64x128xf32> to vector<128xf32>
    %108 = vector.shape_cast %107 : vector<128xf32> to vector<1x128xf32>
    %c0_100 = arith.constant 0 : index
    %c0_101 = arith.constant 0 : index
    %c0_102 = arith.constant 0 : index
    %109 = vector.load %arg10[%c0_100, %c0_101, %c0_102] : memref<1x2x128xf32, #tpu.memory_space<vmem>>, vector<1x1x128xf32>
    %110 = vector.shape_cast %109 : vector<1x1x128xf32> to vector<1x128xf32>
    %111 = vector.shape_cast %108 : vector<1x128xf32> to vector<1x1x128xf32>
    tpu.vector_store %arg10[%c0_100, %c0_101, %c0_102], %111 {strides = array<i32>} : memref<1x2x128xf32, #tpu.memory_space<vmem>>, vector<1x1x128xf32>,
    %112 = arith.mulf %102, %102 : vector<64x128xf32>
    %cst_103 = arith.constant dense<0.000000e+00> : vector<128xf32>
    %113 = vector.multi_reduction <add>, %112, %cst_103 [0] : vector<64x128xf32> to vector<128xf32>
    %114 = vector.shape_cast %113 : vector<128xf32> to vector<1x128xf32>
    %c0_104 = arith.constant 0 : index
    %c1_105 = arith.constant 1 : index
    %c0_106 = arith.constant 0 : index
    %115 = vector.load %arg10[%c0_104, %c1_105, %c0_106] : memref<1x2x128xf32, #tpu.memory_space<vmem>>, vector<1x1x128xf32>
    %116 = vector.shape_cast %115 : vector<1x1x128xf32> to vector<1x128xf32>
    %117 = vector.shape_cast %114 : vector<1x128xf32> to vector<1x1x128xf32>
    tpu.vector_store %arg10[%c0_104, %c1_105, %c0_106], %117 {strides = array<i32>} : memref<1x2x128xf32, #tpu.memory_space<vmem>>, vector<1x1x128xf32>,
    return
  }
  func.func @transform_0(%arg0: i32) -> (i32, i32, i32) {
    %c0_i32 = arith.constant 0 : i32
    %c0_i32_0 = arith.constant 0 : i32
    %c0_i32_1 = arith.constant 0 : i32
    return %arg0, %c0_i32, %c0_i32_0 : i32, i32, i32
  }
  func.func @transform_1(%arg0: i32) -> (i32, i32, i32, i32) {
    %c0_i32 = arith.constant 0 : i32
    %c0_i32_0 = arith.constant 0 : i32
    %c0_i32_1 = arith.constant 0 : i32
    %c0_i32_2 = arith.constant 0 : i32
    return %arg0, %c0_i32, %c0_i32_0, %c0_i32_1 : i32, i32, i32, i32
  }
  func.func @transform_2(%arg0: i32) -> (i32, i32, i32) {
    %c0_i32 = arith.constant 0 : i32
    %c0_i32_0 = arith.constant 0 : i32
    %c0_i32_1 = arith.constant 0 : i32
    %c0_i32_2 = arith.constant 0 : i32
    return %c0_i32, %c0_i32_0, %c0_i32_1 : i32, i32, i32
  }
  func.func @transform_3(%arg0: i32) -> (i32, i32) {
    %c0_i32 = arith.constant 0 : i32
    %c0_i32_0 = arith.constant 0 : i32
    %c0_i32_1 = arith.constant 0 : i32
    return %c0_i32, %c0_i32_0 : i32, i32
  }
  func.func @transform_4(%arg0: i32) -> (i32, i32) {
    %c0_i32 = arith.constant 0 : i32
    %c0_i32_0 = arith.constant 0 : i32
    %c0_i32_1 = arith.constant 0 : i32
    return %c0_i32, %c0_i32_0 : i32, i32
  }
  func.func @transform_5(%arg0: i32) -> (i32, i32) {
    %c0_i32 = arith.constant 0 : i32
    %c0_i32_0 = arith.constant 0 : i32
    %c0_i32_1 = arith.constant 0 : i32
    return %c0_i32, %c0_i32_0 : i32, i32
  }
  func.func @transform_6(%arg0: i32) -> (i32, i32, i32) {
    %c0_i32 = arith.constant 0 : i32
    %c0_i32_0 = arith.constant 0 : i32
    %c0_i32_1 = arith.constant 0 : i32
    return %arg0, %c0_i32, %c0_i32_0 : i32, i32, i32
  }
  func.func @transform_7(%arg0: i32) -> (i32, i32, i32) {
    %c0_i32 = arith.constant 0 : i32
    %c0_i32_0 = arith.constant 0 : i32
    %c0_i32_1 = arith.constant 0 : i32
    return %arg0, %c0_i32, %c0_i32_0 : i32, i32, i32
  }
  func.func @transform_8(%arg0: i32) -> (i32, i32, i32) {
    %c0_i32 = arith.constant 0 : i32
    %c0_i32_0 = arith.constant 0 : i32
    %c0_i32_1 = arith.constant 0 : i32
    return %arg0, %c0_i32, %c0_i32_0 : i32, i32, i32
  }
  func.func @transform_9(%arg0: i32) -> (i32, i32, i32) {
    %c0_i32 = arith.constant 0 : i32
    %c0_i32_0 = arith.constant 0 : i32
    %c0_i32_1 = arith.constant 0 : i32
    return %arg0, %c0_i32, %c0_i32_0 : i32, i32, i32
  }
}

module attributes {stable_mosaic.version = 11 : i64} {
  func.func @out_kernel_proj(%arg0: i32, %arg1: memref<1x64x128xbf16, #tpu.memory_space<vmem>>, %arg2: memref<1x64x128xbf16, #tpu.memory_space<vmem>>, %arg3: memref<1x128xf32, #tpu.memory_space<vmem>>, %arg4: memref<1x128xf32, #tpu.memory_space<vmem>>, %arg5: memref<1x128xf32, #tpu.memory_space<vmem>>, %arg6: memref<1x128xf32, #tpu.memory_space<vmem>>, %arg7: memref<1x64x128xf32, #tpu.memory_space<vmem>>) attributes {dimension_semantics = [#tpu.dimension_semantics<parallel>], iteration_bounds = array<i64: 2>, scalar_prefetch = 0 : i64, scratch_operands = 0 : i64, tpu.core_type = #tpu.core_type<tc>, window_params = [{transform_indices = @transform_0, window_bounds = array<i64: 1, 64, 128>}, {transform_indices = @transform_1, window_bounds = array<i64: 1, 64, 128>}, {pipeline_mode = #tpu.pipeline_mode<synchronous>, transform_indices = @transform_2, window_bounds = array<i64: 1, 128>}, {pipeline_mode = #tpu.pipeline_mode<synchronous>, transform_indices = @transform_3, window_bounds = array<i64: 1, 128>}, {pipeline_mode = #tpu.pipeline_mode<synchronous>, transform_indices = @transform_4, window_bounds = array<i64: 1, 128>}, {pipeline_mode = #tpu.pipeline_mode<synchronous>, transform_indices = @transform_5, window_bounds = array<i64: 1, 128>}, {transform_indices = @transform_6, window_bounds = array<i64: 1, 64, 128>}]} {
    %c0 = arith.constant 0 : index
    %c0_0 = arith.constant 0 : index
    %c0_1 = arith.constant 0 : index
    %0 = vector.load %arg1[%c0, %c0_0, %c0_1] : memref<1x64x128xbf16, #tpu.memory_space<vmem>>, vector<1x64x128xbf16>
    %1 = vector.shape_cast %0 : vector<1x64x128xbf16> to vector<64x128xbf16>
    %2 = arith.extf %1 : vector<64x128xbf16> to vector<64x128xf32>
    %c0_2 = arith.constant 0 : index
    %c0_3 = arith.constant 0 : index
    %3 = vector.load %arg3[%c0_2, %c0_3] : memref<1x128xf32, #tpu.memory_space<vmem>>, vector<1x128xf32>
    %4 = vector.broadcast %3 : vector<1x128xf32> to vector<64x128xf32>
    %5 = arith.mulf %2, %4 : vector<64x128xf32>
    %c0_4 = arith.constant 0 : index
    %c0_5 = arith.constant 0 : index
    %6 = vector.load %arg4[%c0_4, %c0_5] : memref<1x128xf32, #tpu.memory_space<vmem>>, vector<1x128xf32>
    %7 = vector.broadcast %6 : vector<1x128xf32> to vector<64x128xf32>
    %8 = arith.addf %5, %7 : vector<64x128xf32>
    %c0_6 = arith.constant 0 : index
    %c0_7 = arith.constant 0 : index
    %c0_8 = arith.constant 0 : index
    %9 = vector.load %arg2[%c0_6, %c0_7, %c0_8] : memref<1x64x128xbf16, #tpu.memory_space<vmem>>, vector<1x64x128xbf16>
    %10 = vector.shape_cast %9 : vector<1x64x128xbf16> to vector<64x128xbf16>
    %11 = arith.extf %10 : vector<64x128xbf16> to vector<64x128xf32>
    %c0_9 = arith.constant 0 : index
    %c0_10 = arith.constant 0 : index
    %12 = vector.load %arg5[%c0_9, %c0_10] : memref<1x128xf32, #tpu.memory_space<vmem>>, vector<1x128xf32>
    %13 = vector.broadcast %12 : vector<1x128xf32> to vector<64x128xf32>
    %14 = arith.mulf %11, %13 : vector<64x128xf32>
    %c0_11 = arith.constant 0 : index
    %c0_12 = arith.constant 0 : index
    %15 = vector.load %arg6[%c0_11, %c0_12] : memref<1x128xf32, #tpu.memory_space<vmem>>, vector<1x128xf32>
    %16 = vector.broadcast %15 : vector<1x128xf32> to vector<64x128xf32>
    %17 = arith.addf %14, %16 : vector<64x128xf32>
    %18 = arith.addf %8, %17 : vector<64x128xf32>
    %cst = arith.constant 0.000000e+00 : f32
    %19 = vector.broadcast %cst : f32 to vector<64x128xf32>
    %20 = arith.maximumf %18, %19 : vector<64x128xf32>
    %c0_13 = arith.constant 0 : index
    %c0_14 = arith.constant 0 : index
    %c0_15 = arith.constant 0 : index
    %21 = vector.load %arg7[%c0_13, %c0_14, %c0_15] : memref<1x64x128xf32, #tpu.memory_space<vmem>>, vector<1x64x128xf32>
    %22 = vector.shape_cast %21 : vector<1x64x128xf32> to vector<64x128xf32>
    %23 = vector.shape_cast %20 : vector<64x128xf32> to vector<1x64x128xf32>
    tpu.vector_store %arg7[%c0_13, %c0_14, %c0_15], %23 {strides = array<i32>} : memref<1x64x128xf32, #tpu.memory_space<vmem>>, vector<1x64x128xf32>,
    return
  }
  func.func @transform_0(%arg0: i32) -> (i32, i32, i32) {
    %c0_i32 = arith.constant 0 : i32
    %c0_i32_0 = arith.constant 0 : i32
    %c0_i32_1 = arith.constant 0 : i32
    return %arg0, %c0_i32, %c0_i32_0 : i32, i32, i32
  }
  func.func @transform_1(%arg0: i32) -> (i32, i32, i32) {
    %c0_i32 = arith.constant 0 : i32
    %c0_i32_0 = arith.constant 0 : i32
    %c0_i32_1 = arith.constant 0 : i32
    return %arg0, %c0_i32, %c0_i32_0 : i32, i32, i32
  }
  func.func @transform_2(%arg0: i32) -> (i32, i32) {
    %c0_i32 = arith.constant 0 : i32
    %c0_i32_0 = arith.constant 0 : i32
    %c0_i32_1 = arith.constant 0 : i32
    return %c0_i32, %c0_i32_0 : i32, i32
  }
  func.func @transform_3(%arg0: i32) -> (i32, i32) {
    %c0_i32 = arith.constant 0 : i32
    %c0_i32_0 = arith.constant 0 : i32
    %c0_i32_1 = arith.constant 0 : i32
    return %c0_i32, %c0_i32_0 : i32, i32
  }
  func.func @transform_4(%arg0: i32) -> (i32, i32) {
    %c0_i32 = arith.constant 0 : i32
    %c0_i32_0 = arith.constant 0 : i32
    %c0_i32_1 = arith.constant 0 : i32
    return %c0_i32, %c0_i32_0 : i32, i32
  }
  func.func @transform_5(%arg0: i32) -> (i32, i32) {
    %c0_i32 = arith.constant 0 : i32
    %c0_i32_0 = arith.constant 0 : i32
    %c0_i32_1 = arith.constant 0 : i32
    return %c0_i32, %c0_i32_0 : i32, i32
  }
  func.func @transform_6(%arg0: i32) -> (i32, i32, i32) {
    %c0_i32 = arith.constant 0 : i32
    %c0_i32_0 = arith.constant 0 : i32
    %c0_i32_1 = arith.constant 0 : i32
    return %arg0, %c0_i32, %c0_i32_0 : i32, i32, i32
  }
}

</mosaic_0001>

<llo_original>
// kernel: residual_block_forward.5
$region0: #{residual_block_forward.5}
  #allocation0 [shape = 'u32[]', space=smem, size = 0x4, offset = 0x4, fixed_abs, tag = 'smem constant byte address 0x4 - core index']
  #allocation1 [shape = 'u32[144,128]{1,0:T(1,128)}', space=vmem, size = 0x12000, scoped, tag = 'internal scratch']
  %s0 = inlined_call_operand.vmem [shape: bf16[2,64,128], index: 0, kind: input, shape index: {}]
  %s1 = inlined_call_operand.vmem [shape: bf16[2,64,128], index: 1, kind: input, shape index: {}]
  %s2 = inlined_call_operand.vmem [shape: f32[1,128], index: 2, kind: input, shape index: {}]
  %s3 = inlined_call_operand.vmem [shape: f32[1,128], index: 3, kind: input, shape index: {}]
  %s4 = inlined_call_operand.vmem [shape: f32[1,128], index: 4, kind: input, shape index: {}]
  %s5 = inlined_call_operand.vmem [shape: f32[1,128], index: 5, kind: input, shape index: {}]
  %s6 = inlined_call_operand.vmem [shape: f32[2,64,128], index: 6, kind: output, shape index: {}]
  %s7 = sld [smem:[#allocation0]]
  $region57: #{residual_block_forward.5} parent=0
    _
  %s9 = ssub.s32 1, %s7
  %s10 = scalar_select 0, %s9, %s7
  loop: start=0, step=1, limit=4
  $region2: #{residual_block_forward.5} parent=0 // loop_pre_header
    _
  $region3: #{residual_block_forward.5} parent=0 // loop_header
    %s12 = sphi 0, %s16
    %p13 = scmp.ge.s32.totalorder %s12, 4
    %s22 = sphi 0, %s24
    %s25 = sphi 0, %s22
    %s26 = sphi 0, %s25
    %s42 = sphi 0, %s26
    %s48 = sphi 0, %s50
    %s51 = sphi 0, %s48
    %s52 = sphi 0, %s51
    %s68 = sphi 0, %s52
    %s72 = sphi 0, %s72
    %s74 = sphi 0, %s72
    %s75 = sphi 0, %s74
    %s89 = sphi 0, %s75
    %s93 = sphi 0, %s93
    %s95 = sphi 0, %s93
    %s96 = sphi 0, %s95
    %s110 = sphi 0, %s96
    %s114 = sphi 0, %s114
    %s116 = sphi 0, %s114
    %s117 = sphi 0, %s116
    %s131 = sphi 0, %s117
    %s135 = sphi 0, %s135
    %s137 = sphi 0, %s135
    %s138 = sphi 0, %s137
    %s152 = sphi 0, %s138
    %s158 = sphi 0, %s160
    %s161 = sphi 0, %s158
    %s162 = sphi 0, %s161
    %s178 = sphi 0, %s162
  $region4: #{residual_block_forward.5} parent=0 // loop_header_branch
    %15 = sbr.rel (%p13) target = $region8
  $region5: #{residual_block_forward.5} parent=0 // loop_body
    %s17 = ssub.s32 %s12, 1
    %s18 = ssub.s32 %s12, 2
    %s19 = sadd.s32 %s12, 1
    %s20 = ssub.s32 %s12, %s19
    %p21 = scmp.eq.s32.totalorder %s20, 0
    %s23 = sadd.s32 %s22, 1
    %s24 = scalar_select %p21, %s22, %s23
    %p27 = pneg %p21
    %p28 = scmp.eq.s32.totalorder %s12, 1
    %p29 = por %p27, %p28
    %p30 = scmp.ne.s32.totalorder %s22, %s25
    %p31 = scmp.eq.s32.totalorder %s12, 0
    %p32 = por %p30, %p31
    %p33 = scmp.ne.s32.totalorder %s22, %s25
    %p34 = scmp.eq.s32.totalorder %s17, 1
    %p35 = por %p33, %p34
    %p36 = scmp.ne.s32.totalorder %s25, %s26
    %p37 = scmp.eq.s32.totalorder %s17, 0
    %p38 = por %p36, %p37
    %p39 = scmp.ne.s32.totalorder %s25, %s26
    %p40 = scmp.eq.s32.totalorder %s18, 1
    %p41 = por %p39, %p40
    %p43 = scmp.ne.s32.totalorder %s26, %s42
    %p44 = scmp.eq.s32.totalorder %s18, 0
    %p45 = por %p43, %p44
    %s46 = ssub.s32 %s12, %s19
    %p47 = scmp.eq.s32.totalorder %s46, 0
    %s49 = sadd.s32 %s48, 1
    %s50 = scalar_select %p47, %s48, %s49
    %p53 = pneg %p47
    %p54 = scmp.eq.s32.totalorder %s12, 1
    %p55 = por %p53, %p54
    %p56 = scmp.ne.s32.totalorder %s48, %s51
    %p57 = scmp.eq.s32.totalorder %s12, 0
    %p58 = por %p56, %p57
    %p59 = scmp.ne.s32.totalorder %s48, %s51
    %p60 = scmp.eq.s32.totalorder %s17, 1
    %p61 = por %p59, %p60
    %p62 = scmp.ne.s32.totalorder %s51, %s52
    %p63 = scmp.eq.s32.totalorder %s17, 0
    %p64 = por %p62, %p63
    %p65 = scmp.ne.s32.totalorder %s51, %s52
    %p66 = scmp.eq.s32.totalorder %s18, 1
    %p67 = por %p65, %p66
    %p69 = scmp.ne.s32.totalorder %s52, %s68
    %p70 = scmp.eq.s32.totalorder %s18, 0
    %p71 = por %p69, %p70
    %s73 = sadd.s32 %s72, 1
    %p76 = scmp.eq.s32.totalorder %s12, 1
    %p77 = scmp.ne.s32.totalorder %s72, %s74
    %p78 = scmp.eq.s32.totalorder %s12, 0
    %p79 = por %p77, %p78
    %p80 = scmp.ne.s32.totalorder %s72, %s74
    %p81 = scmp.eq.s32.totalorder %s17, 1
    %p82 = por %p80, %p81
    %p83 = scmp.ne.s32.totalorder %s74, %s75
    %p84 = scmp.eq.s32.totalorder %s17, 0
    %p85 = por %p83, %p84
    %p86 = scmp.ne.s32.totalorder %s74, %s75
    %p87 = scmp.eq.s32.totalorder %s18, 1
    %p88 = por %p86, %p87
    %p90 = scmp.ne.s32.totalorder %s75, %s89
    %p91 = scmp.eq.s32.totalorder %s18, 0
    %p92 = por %p90, %p91
    %s94 = sadd.s32 %s93, 1
    %p97 = scmp.eq.s32.totalorder %s12, 1
    %p98 = scmp.ne.s32.totalorder %s93, %s95
    %p99 = scmp.eq.s32.totalorder %s12, 0
    %p100 = por %p98, %p99
    %p101 = scmp.ne.s32.totalorder %s93, %s95
    %p102 = scmp.eq.s32.totalorder %s17, 1
    %p103 = por %p101, %p102
    %p104 = scmp.ne.s32.totalorder %s95, %s96
    %p105 = scmp.eq.s32.totalorder %s17, 0
    %p106 = por %p104, %p105
    %p107 = scmp.ne.s32.totalorder %s95, %s96
    %p108 = scmp.eq.s32.totalorder %s18, 1
    %p109 = por %p107, %p108
    %p111 = scmp.ne.s32.totalorder %s96, %s110
    %p112 = scmp.eq.s32.totalorder %s18, 0
    %p113 = por %p111, %p112
    %s115 = sadd.s32 %s114, 1
    %p118 = scmp.eq.s32.totalorder %s12, 1
    %p119 = scmp.ne.s32.totalorder %s114, %s116
    %p120 = scmp.eq.s32.totalorder %s12, 0
    %p121 = por %p119, %p120
    %p122 = scmp.ne.s32.totalorder %s114, %s116
    %p123 = scmp.eq.s32.totalorder %s17, 1
    %p124 = por %p122, %p123
    %p125 = scmp.ne.s32.totalorder %s116, %s117
    %p126 = scmp.eq.s32.totalorder %s17, 0
    %p127 = por %p125, %p126
    %p128 = scmp.ne.s32.totalorder %s116, %s117
    %p129 = scmp.eq.s32.totalorder %s18, 1
    %p130 = por %p128, %p129
    %p132 = scmp.ne.s32.totalorder %s117, %s131
    %p133 = scmp.eq.s32.totalorder %s18, 0
    %p134 = por %p132, %p133
    %s136 = sadd.s32 %s135, 1
    %p139 = scmp.eq.s32.totalorder %s12, 1
    %p140 = scmp.ne.s32.totalorder %s135, %s137
    %p141 = scmp.eq.s32.totalorder %s12, 0
    %p142 = por %p140, %p141
    %p143 = scmp.ne.s32.totalorder %s135, %s137
    %p144 = scmp.eq.s32.totalorder %s17, 1
    %p145 = por %p143, %p144
    %p146 = scmp.ne.s32.totalorder %s137, %s138
    %p147 = scmp.eq.s32.totalorder %s17, 0
    %p148 = por %p146, %p147
    %p149 = scmp.ne.s32.totalorder %s137, %s138
    %p150 = scmp.eq.s32.totalorder %s18, 1
    %p151 = por %p149, %p150
    %p153 = scmp.ne.s32.totalorder %s138, %s152
    %p154 = scmp.eq.s32.totalorder %s18, 0
    %p155 = por %p153, %p154
    %s156 = ssub.s32 %s12, %s19
    %p157 = scmp.eq.s32.totalorder %s156, 0
    %s159 = sadd.s32 %s158, 1
    %s160 = scalar_select %p157, %s158, %s159
    %p163 = pneg %p157
    %p164 = scmp.eq.s32.totalorder %s12, 1
    %p165 = por %p163, %p164
    %p166 = scmp.ne.s32.totalorder %s158, %s161
    %p167 = scmp.eq.s32.totalorder %s12, 0
    %p168 = por %p166, %p167
    %p169 = scmp.ne.s32.totalorder %s158, %s161
    %p170 = scmp.eq.s32.totalorder %s17, 1
    %p171 = por %p169, %p170
    %p172 = scmp.ne.s32.totalorder %s161, %s162
    %p173 = scmp.eq.s32.totalorder %s17, 0
    %p174 = por %p172, %p173
    %p175 = scmp.ne.s32.totalorder %s161, %s162
    %p176 = scmp.eq.s32.totalorder %s18, 1
    %p177 = por %p175, %p176
    %p179 = scmp.ne.s32.totalorder %s162, %s178
    %p180 = scmp.eq.s32.totalorder %s18, 0
    %p181 = por %p179, %p180
    %p182 = scmp.le.s32.totalorder 1, %s12
    %p183 = scmp.lt.s32.totalorder %s12, 3
    %p184 = pnand %p182, %p183
    %p185 = pneg %p184
    // Predicated region
    $region9: #{residual_block_forward.5} parent=5 // pred_check
      _
    $region10: #{residual_block_forward.5} parent=5 // pred_check_branch
      %187 = sbr.rel (%p184) target = $region12
    $region11: #{residual_block_forward.5} parent=5 // pred_region
      %s188 = ssub.s32 %s12, 1
      // Predicated region
      $region13: #{residual_block_forward.5} parent=11 // pred_check
        %p189 = pneg %p85
      $region14: #{residual_block_forward.5} parent=11 // pred_check_branch
        %191 = sbr.rel (%p189) target = $region16
      $region15: #{residual_block_forward.5} parent=11 // pred_region
        _
      $region16: #{residual_block_forward.5} parent=11 // pred_fallthru
        _
      // Predicated region
      $region17: #{residual_block_forward.5} parent=11 // pred_check
        %p192 = pneg %p106
      $region18: #{residual_block_forward.5} parent=11 // pred_check_branch
        %194 = sbr.rel (%p192) target = $region20
      $region19: #{residual_block_forward.5} parent=11 // pred_region
        _
      $region20: #{residual_block_forward.5} parent=11 // pred_fallthru
        _
      // Predicated region
      $region21: #{residual_block_forward.5} parent=11 // pred_check
        %p195 = pneg %p127
      $region22: #{residual_block_forward.5} parent=11 // pred_check_branch
        %197 = sbr.rel (%p195) target = $region24
      $region23: #{residual_block_forward.5} parent=11 // pred_region
        _
      $region24: #{residual_block_forward.5} parent=11 // pred_fallthru
        _
      // Predicated region
      $region25: #{residual_block_forward.5} parent=11 // pred_check
        %p198 = pneg %p148
      $region26: #{residual_block_forward.5} parent=11 // pred_check_branch
        %200 = sbr.rel (%p198) target = $region28
      $region27: #{residual_block_forward.5} parent=11 // pred_region
        _
      $region28: #{residual_block_forward.5} parent=11 // pred_fallthru
        _
    $region12: #{residual_block_forward.5} parent=5 // pred_fallthru
      _
    %p201 = scmp.lt.s32.totalorder %s12, 2
    // Predicated region
    $region29: #{residual_block_forward.5} parent=5 // pred_check
      %p202 = pneg %p201
    $region30: #{residual_block_forward.5} parent=5 // pred_check_branch
      %204 = sbr.rel (%p202) target = $region32
    $region31: #{residual_block_forward.5} parent=5 // pred_region
      // Predicated region
      $region33: #{residual_block_forward.5} parent=31 // pred_check
        %p205 = pneg %p32
      $region34: #{residual_block_forward.5} parent=31 // pred_check_branch
        %207 = sbr.rel (%p205) target = $region36
      $region35: #{residual_block_forward.5} parent=31 // pred_region
        %p208 = scmp.lt.s32.totalorder %s12, 1
        %s209 = scalar_select %p208, %s12, 1
        %s210 = smul.addr %s209, 8
        %s211 = smul.addr %s210, 4
        %s212 = scalar_lea.vmem %s0, %s211
      $region36: #{residual_block_forward.5} parent=31 // pred_fallthru
        _
      // Predicated region
      $region37: #{residual_block_forward.5} parent=31 // pred_check
        %p213 = pneg %p58
      $region38: #{residual_block_forward.5} parent=31 // pred_check_branch
        %215 = sbr.rel (%p213) target = $region40
      $region39: #{residual_block_forward.5} parent=31 // pred_region
        %p216 = scmp.lt.s32.totalorder %s12, 1
        %s217 = scalar_select %p216, %s12, 1
        %s218 = smul.addr %s217, 8
        %s219 = smul.addr %s218, 4
        %s220 = scalar_lea.vmem %s1, %s219
      $region40: #{residual_block_forward.5} parent=31 // pred_fallthru
        _
    $region32: #{residual_block_forward.5} parent=5 // pred_fallthru
      _
    %p221 = scmp.le.s32.totalorder 1, %s12
    %p222 = scmp.lt.s32.totalorder %s12, 3
    %p223 = pnand %p221, %p222
    %p224 = pneg %p223
    // Predicated region
    $region41: #{residual_block_forward.5} parent=5 // pred_check
      _
    $region42: #{residual_block_forward.5} parent=5 // pred_check_branch
      %226 = sbr.rel (%p223) target = $region44
    $region43: #{residual_block_forward.5} parent=5 // pred_region
      %s227 = ssub.s32 %s12, 1
      %p228 = scmp.lt.s32.totalorder %s17, 1
      %s229 = scalar_select %p228, %s17, 1
      %s230 = smul.addr %s229, 8
      %s231 = smul.addr %s230, 4
      %s232 = scalar_lea.vmem %s0, %s231
      %p233 = pneg %p38
      %p234 = pneg %p35
      %p235 = scmp.lt.s32.totalorder %s17, 1
      %s236 = scalar_select %p235, %s17, 1
      %s237 = smul.addr %s236, 8
      %s238 = smul.addr %s237, 4
      %s239 = scalar_lea.vmem %s1, %s238
      %p240 = pneg %p64
      %p241 = pneg %p61
      %p242 = pneg %p85
      %p243 = pneg %p82
      %p244 = pneg %p106
      %p245 = pneg %p103
      %p246 = pneg %p127
      %p247 = pneg %p124
      %p248 = pneg %p148
      %p249 = pneg %p145
      %p250 = pneg %p174
      %p251 = pneg %p171
      %p252 = scmp.lt.s32.totalorder %s17, 1
      %s253 = scalar_select %p252, %s17, 1
      %s254 = smul.addr %s253, 8
      %s255 = smul.addr %s254, 8
      %s256 = scalar_lea.vmem %s6, %s255
      %p257 = scmp.lt.s32.totalorder %s17, 1
      %s258 = scalar_select %p257, %s17, 1
      %s259 = smul.addr %s258, 8
      %s260 = smul.addr %s259, 4
      %s261 = scalar_lea.vmem %s0, %s260
      %p262 = scmp.lt.s32.totalorder %s17, 1
      %s263 = scalar_select %p262, %s17, 1
      %s264 = smul.addr %s263, 8
      %s265 = smul.addr %s264, 4
      %s266 = scalar_lea.vmem %s1, %s265
      %p267 = scmp.lt.s32.totalorder %s17, 1
      %s268 = scalar_select %p267, %s17, 1
      %s269 = smul.addr %s268, 8
      %s270 = smul.addr %s269, 8
      %s271 = scalar_lea.vmem %s6, %s270
      %v272 = vld [vmem:[%s261] sm:$0xf]
      %v273 = vld [vmem:[%s261 + $0x4] sm:$0xf]
      %v274 = vld [vmem:[%s261 + $0x8] sm:$0xf]
      %v275 = vld [vmem:[%s261 + $0xc] sm:$0xf]
      %v276 = vld [vmem:[%s261 + $0x10] sm:$0xf]
      %v277 = vld [vmem:[%s261 + $0x14] sm:$0xf]
      %v278 = vld [vmem:[%s261 + $0x18] sm:$0xf]
      %v279 = vld [vmem:[%s261 + $0x1c] sm:$0xf]
      %v280 = vunpack.c.l.bf16 %v272
      %v281 = vunpack.c.l.bf16 %v273
      %v282 = vunpack.c.l.bf16 %v274
      %v283 = vunpack.c.l.bf16 %v275
      %v284 = vunpack.c.l.bf16 %v276
      %v285 = vunpack.c.l.bf16 %v277
      %v286 = vunpack.c.l.bf16 %v278
      %v287 = vunpack.c.l.bf16 %v279
      %v288 = vld [vmem:[%s2] sm:$0x1]
      %v290 = vlaneseq
      %v291 = vshrl.u32 %v290, 7
      %v292 = vsub.s32 0, %v291
      %v293 = vrot.slane %v288, %v292
      %v295 = vmul.f32 %v280, %v293
      %v296 = vmul.f32 %v281, %v293
      %v297 = vmul.f32 %v282, %v293
      %v298 = vmul.f32 %v283, %v293
      %v299 = vmul.f32 %v284, %v293
      %v300 = vmul.f32 %v285, %v293
      %v301 = vmul.f32 %v286, %v293
      %v302 = vmul.f32 %v287, %v293
      %v303 = vld [vmem:[%s3] sm:$0x1]
      %v305 = vlaneseq
      %v306 = vshrl.u32 %v305, 7
      %v307 = vsub.s32 0, %v306
      %v308 = vrot.slane %v303, %v307
      %v310 = vadd.f32 %v295, %v308
      %v311 = vadd.f32 %v296, %v308
      %v312 = vadd.f32 %v297, %v308
      %v313 = vadd.f32 %v298, %v308
      %v314 = vadd.f32 %v299, %v308
      %v315 = vadd.f32 %v300, %v308
      %v316 = vadd.f32 %v301, %v308
      %v317 = vadd.f32 %v302, %v308
      %v318 = vld [vmem:[%s266] sm:$0xf]
      %v319 = vld [vmem:[%s266 + $0x4] sm:$0xf]
      %v320 = vld [vmem:[%s266 + $0x8] sm:$0xf]
      %v321 = vld [vmem:[%s266 + $0xc] sm:$0xf]
      %v322 = vld [vmem:[%s266 + $0x10] sm:$0xf]
      %v323 = vld [vmem:[%s266 + $0x14] sm:$0xf]
      %v324 = vld [vmem:[%s266 + $0x18] sm:$0xf]
      %v325 = vld [vmem:[%s266 + $0x1c] sm:$0xf]
      %v326 = vunpack.c.l.bf16 %v318
      %v327 = vunpack.c.l.bf16 %v319
      %v328 = vunpack.c.l.bf16 %v320
      %v329 = vunpack.c.l.bf16 %v321
      %v330 = vunpack.c.l.bf16 %v322
      %v331 = vunpack.c.l.bf16 %v323
      %v332 = vunpack.c.l.bf16 %v324
      %v333 = vunpack.c.l.bf16 %v325
      %v334 = vld [vmem:[%s4] sm:$0x1]
      %v336 = vlaneseq
      %v337 = vshrl.u32 %v336, 7
      %v338 = vsub.s32 0, %v337
      %v339 = vrot.slane %v334, %v338
      %v341 = vmul.f32 %v326, %v339
      %v342 = vmul.f32 %v327, %v339
      %v343 = vmul.f32 %v328, %v339
      %v344 = vmul.f32 %v329, %v339
      %v345 = vmul.f32 %v330, %v339
      %v346 = vmul.f32 %v331, %v339
      %v347 = vmul.f32 %v332, %v339
      %v348 = vmul.f32 %v333, %v339
      %v349 = vld [vmem:[%s5] sm:$0x1]
      %v351 = vlaneseq
      %v352 = vshrl.u32 %v351, 7
      %v353 = vsub.s32 0, %v352
      %v354 = vrot.slane %v349, %v353
      %v356 = vadd.f32 %v341, %v354
      %v357 = vadd.f32 %v342, %v354
      %v358 = vadd.f32 %v343, %v354
      %v359 = vadd.f32 %v344, %v354
      %v360 = vadd.f32 %v345, %v354
      %v361 = vadd.f32 %v346, %v354
      %v362 = vadd.f32 %v347, %v354
      %v363 = vadd.f32 %v348, %v354
      %v364 = vadd.f32 %v310, %v356
      %v365 = vadd.f32 %v311, %v357
      %v366 = vadd.f32 %v312, %v358
      %v367 = vadd.f32 %v313, %v359
      %v368 = vadd.f32 %v314, %v360
      %v369 = vadd.f32 %v315, %v361
      %v370 = vadd.f32 %v316, %v362
      %v371 = vadd.f32 %v317, %v363
      %v372 = vmax.f32 %v364, 0.0
      %v373 = vmax.f32 %v365, 0.0
      %v374 = vmax.f32 %v366, 0.0
      %v375 = vmax.f32 %v367, 0.0
      %v376 = vmax.f32 %v368, 0.0
      %v377 = vmax.f32 %v369, 0.0
      %v378 = vmax.f32 %v370, 0.0
      %v379 = vmax.f32 %v371, 0.0
      %380 = vst [vmem:[%s271] sm:$0xff] %v372
      %381 = vst [vmem:[%s271 + $0x8] sm:$0xff] %v373
      %382 = vst [vmem:[%s271 + $0x10] sm:$0xff] %v374
      %383 = vst [vmem:[%s271 + $0x18] sm:$0xff] %v375
      %384 = vst [vmem:[%s271 + $0x20] sm:$0xff] %v376
      %385 = vst [vmem:[%s271 + $0x28] sm:$0xff] %v377
      %386 = vst [vmem:[%s271 + $0x30] sm:$0xff] %v378
      %387 = vst [vmem:[%s271 + $0x38] sm:$0xff] %v379
      %p388 = scmp.lt.s32.totalorder %s17, 1
      %s389 = scalar_select %p388, %s17, 1
      %s390 = smul.addr %s389, 8
      %s391 = smul.addr %s390, 8
      %s392 = scalar_lea.vmem %s6, %s391
      // Predicated region
      $region45: #{residual_block_forward.5} parent=43 // pred_check
        %p393 = pneg %p171
      $region46: #{residual_block_forward.5} parent=43 // pred_check_branch
        %395 = sbr.rel (%p393) target = $region48
      $region47: #{residual_block_forward.5} parent=43 // pred_region
        _
      $region48: #{residual_block_forward.5} parent=43 // pred_fallthru
        _
    $region44: #{residual_block_forward.5} parent=5 // pred_fallthru
      _
    %p396 = scmp.le.s32.totalorder 2, %s12
    // Predicated region
    $region49: #{residual_block_forward.5} parent=5 // pred_check
      %p397 = pneg %p396
    $region50: #{residual_block_forward.5} parent=5 // pred_check_branch
      %399 = sbr.rel (%p397) target = $region52
    $region51: #{residual_block_forward.5} parent=5 // pred_region
      %s400 = ssub.s32 %s12, 2
      // Predicated region
      $region53: #{residual_block_forward.5} parent=51 // pred_check
        %p401 = pneg %p177
      $region54: #{residual_block_forward.5} parent=51 // pred_check_branch
        %403 = sbr.rel (%p401) target = $region56
      $region55: #{residual_block_forward.5} parent=51 // pred_region
        %p404 = scmp.lt.s32.totalorder %s18, 1
        %s405 = scalar_select %p404, %s18, 1
        %s406 = smul.addr %s405, 8
        %s407 = smul.addr %s406, 8
        %s408 = scalar_lea.vmem %s6, %s407
      $region56: #{residual_block_forward.5} parent=51 // pred_fallthru
        _
    $region52: #{residual_block_forward.5} parent=5 // pred_fallthru
      _
  $region6: #{residual_block_forward.5} parent=0 // loop_footer
    %s16 = sadd.s32 1, %s12
  $region7: #{residual_block_forward.5} parent=0 // loop_footer_branch
    %11 = sbr.rel target = $region3
  $region8: #{residual_block_forward.5} parent=0 // loop_exit
    _

// kernel: residual_block_forward.3
$region0: #{residual_block_forward.3}
  #allocation0 [shape = 'u32[]', space=smem, size = 0x4, offset = 0x4, fixed_abs, tag = 'smem constant byte address 0x4 - core index']
  #allocation1 [shape = 'u32[144,128]{1,0:T(1,128)}', space=vmem, size = 0x12000, scoped, tag = 'internal scratch']
  %s0 = inlined_call_operand.vmem [shape: bf16[8,9,9,128], index: 0, kind: input, shape index: {}]
  %s1 = inlined_call_operand.vmem [shape: bf16[9,128,128], index: 1, kind: input, shape index: {}]
  %s2 = inlined_call_operand.vmem [shape: bf16[2,64,128], index: 2, kind: output, shape index: {0}]
  %s3 = inlined_call_operand.vmem [shape: f32[2,2,128], index: 3, kind: output, shape index: {1}]
  %4 = xla_tuple %s2, %s3
  %s5 = sld [smem:[#allocation0]]
  $region49: #{residual_block_forward.3} parent=0
    _
  %s7 = ssub.s32 1, %s5
  %s8 = scalar_select 0, %s7, %s5
  loop: start=0, step=1, limit=4
  $region2: #{residual_block_forward.3} parent=0 // loop_pre_header
    _
  $region3: #{residual_block_forward.3} parent=0 // loop_header
    %s10 = sphi 0, %s14
    %p11 = scmp.ge.s32.totalorder %s10, 4
    %s20 = sphi 0, %s22
    %s23 = sphi 0, %s20
    %s24 = sphi 0, %s23
    %s40 = sphi 0, %s24
    %s44 = sphi 0, %s44
    %s46 = sphi 0, %s44
    %s47 = sphi 0, %s46
    %s61 = sphi 0, %s47
    %s67 = sphi 0, %s69
    %s70 = sphi 0, %s67
    %s71 = sphi 0, %s70
    %s87 = sphi 0, %s71
    %s93 = sphi 0, %s95
    %s96 = sphi 0, %s93
    %s97 = sphi 0, %s96
    %s113 = sphi 0, %s97
  $region4: #{residual_block_forward.3} parent=0 // loop_header_branch
    %13 = sbr.rel (%p11) target = $region8
  $region5: #{residual_block_forward.3} parent=0 // loop_body
    %s15 = ssub.s32 %s10, 1
    %s16 = ssub.s32 %s10, 2
    %s17 = sadd.s32 %s10, 1
    %s18 = ssub.s32 %s10, %s17
    %p19 = scmp.eq.s32.totalorder %s18, 0
    %s21 = sadd.s32 %s20, 1
    %s22 = scalar_select %p19, %s20, %s21
    %p25 = pneg %p19
    %p26 = scmp.eq.s32.totalorder %s10, 1
    %p27 = por %p25, %p26
    %p28 = scmp.ne.s32.totalorder %s20, %s23
    %p29 = scmp.eq.s32.totalorder %s10, 0
    %p30 = por %p28, %p29
    %p31 = scmp.ne.s32.totalorder %s20, %s23
    %p32 = scmp.eq.s32.totalorder %s15, 1
    %p33 = por %p31, %p32
    %p34 = scmp.ne.s32.totalorder %s23, %s24
    %p35 = scmp.eq.s32.totalorder %s15, 0
    %p36 = por %p34, %p35
    %p37 = scmp.ne.s32.totalorder %s23, %s24
    %p38 = scmp.eq.s32.totalorder %s16, 1
    %p39 = por %p37, %p38
    %p41 = scmp.ne.s32.totalorder %s24, %s40
    %p42 = scmp.eq.s32.totalorder %s16, 0
    %p43 = por %p41, %p42
    %s45 = sadd.s32 %s44, 1
    %p48 = scmp.eq.s32.totalorder %s10, 1
    %p49 = scmp.ne.s32.totalorder %s44, %s46
    %p50 = scmp.eq.s32.totalorder %s10, 0
    %p51 = por %p49, %p50
    %p52 = scmp.ne.s32.totalorder %s44, %s46
    %p53 = scmp.eq.s32.totalorder %s15, 1
    %p54 = por %p52, %p53
    %p55 = scmp.ne.s32.totalorder %s46, %s47
    %p56 = scmp.eq.s32.totalorder %s15, 0
    %p57 = por %p55, %p56
    %p58 = scmp.ne.s32.totalorder %s46, %s47
    %p59 = scmp.eq.s32.totalorder %s16, 1
    %p60 = por %p58, %p59
    %p62 = scmp.ne.s32.totalorder %s47, %s61
    %p63 = scmp.eq.s32.totalorder %s16, 0
    %p64 = por %p62, %p63
    %s65 = ssub.s32 %s10, %s17
    %p66 = scmp.eq.s32.totalorder %s65, 0
    %s68 = sadd.s32 %s67, 1
    %s69 = scalar_select %p66, %s67, %s68
    %p72 = pneg %p66
    %p73 = scmp.eq.s32.totalorder %s10, 1
    %p74 = por %p72, %p73
    %p75 = scmp.ne.s32.totalorder %s67, %s70
    %p76 = scmp.eq.s32.totalorder %s10, 0
    %p77 = por %p75, %p76
    %p78 = scmp.ne.s32.totalorder %s67, %s70
    %p79 = scmp.eq.s32.totalorder %s15, 1
    %p80 = por %p78, %p79
    %p81 = scmp.ne.s32.totalorder %s70, %s71
    %p82 = scmp.eq.s32.totalorder %s15, 0
    %p83 = por %p81, %p82
    %p84 = scmp.ne.s32.totalorder %s70, %s71
    %p85 = scmp.eq.s32.totalorder %s16, 1
    %p86 = por %p84, %p85
    %p88 = scmp.ne.s32.totalorder %s71, %s87
    %p89 = scmp.eq.s32.totalorder %s16, 0
    %p90 = por %p88, %p89
    %s91 = ssub.s32 %s10, %s17
    %p92 = scmp.eq.s32.totalorder %s91, 0
    %s94 = sadd.s32 %s93, 1
    %s95 = scalar_select %p92, %s93, %s94
    %p98 = pneg %p92
    %p99 = scmp.eq.s32.totalorder %s10, 1
    %p100 = por %p98, %p99
    %p101 = scmp.ne.s32.totalorder %s93, %s96
    %p102 = scmp.eq.s32.totalorder %s10, 0
    %p103 = por %p101, %p102
    %p104 = scmp.ne.s32.totalorder %s93, %s96
    %p105 = scmp.eq.s32.totalorder %s15, 1
    %p106 = por %p104, %p105
    %p107 = scmp.ne.s32.totalorder %s96, %s97
    %p108 = scmp.eq.s32.totalorder %s15, 0
    %p109 = por %p107, %p108
    %p110 = scmp.ne.s32.totalorder %s96, %s97
    %p111 = scmp.eq.s32.totalorder %s16, 1
    %p112 = por %p110, %p111
    %p114 = scmp.ne.s32.totalorder %s97, %s113
    %p115 = scmp.eq.s32.totalorder %s16, 0
    %p116 = por %p114, %p115
    %p117 = scmp.le.s32.totalorder 1, %s10
    %p118 = scmp.lt.s32.totalorder %s10, 3
    %p119 = pnand %p117, %p118
    %p120 = pneg %p119
    // Predicated region
    $region9: #{residual_block_forward.3} parent=5 // pred_check
      _
    $region10: #{residual_block_forward.3} parent=5 // pred_check_branch
      %122 = sbr.rel (%p119) target = $region12
    $region11: #{residual_block_forward.3} parent=5 // pred_region
      %s123 = ssub.s32 %s10, 1
      // Predicated region
      $region13: #{residual_block_forward.3} parent=11 // pred_check
        %p124 = pneg %p57
      $region14: #{residual_block_forward.3} parent=11 // pred_check_branch
        %126 = sbr.rel (%p124) target = $region16
      $region15: #{residual_block_forward.3} parent=11 // pred_region
        _
      $region16: #{residual_block_forward.3} parent=11 // pred_fallthru
        _
    $region12: #{residual_block_forward.3} parent=5 // pred_fallthru
      _
    %p127 = scmp.lt.s32.totalorder %s10, 2
    // Predicated region
    $region17: #{residual_block_forward.3} parent=5 // pred_check
      %p128 = pneg %p127
    $region18: #{residual_block_forward.3} parent=5 // pred_check_branch
      %130 = sbr.rel (%p128) target = $region20
    $region19: #{residual_block_forward.3} parent=5 // pred_region
      // Predicated region
      $region21: #{residual_block_forward.3} parent=19 // pred_check
        %p131 = pneg %p30
      $region22: #{residual_block_forward.3} parent=19 // pred_check_branch
        %133 = sbr.rel (%p131) target = $region24
      $region23: #{residual_block_forward.3} parent=19 // pred_region
        %s134 = smul.u32 4, %s10
        %p135 = scmp.lt.s32.totalorder %s134, 7
        %s136 = scalar_select %p135, %s134, 7
        %s137 = smul.addr %s136, 18
        %s138 = smul.addr %s137, 4
        %s139 = scalar_lea.vmem %s0, %s138
        %s140 = smul.u32 4, %s10
      $region24: #{residual_block_forward.3} parent=19 // pred_fallthru
        _
    $region20: #{residual_block_forward.3} parent=5 // pred_fallthru
      _
    %p141 = scmp.le.s32.totalorder 1, %s10
    %p142 = scmp.lt.s32.totalorder %s10, 3
    %p143 = pnand %p141, %p142
    %p144 = pneg %p143
    // Predicated region
    $region25: #{residual_block_forward.3} parent=5 // pred_check
      _
    $region26: #{residual_block_forward.3} parent=5 // pred_check_branch
      %146 = sbr.rel (%p143) target = $region28
    $region27: #{residual_block_forward.3} parent=5 // pred_region
      %s147 = ssub.s32 %s10, 1
      %s148 = smul.u32 4, %s15
      %p149 = scmp.lt.s32.totalorder %s148, 7
      %s150 = scalar_select %p149, %s148, 7
      %s151 = smul.addr %s150, 18
      %s152 = smul.addr %s151, 4
      %s153 = scalar_lea.vmem %s0, %s152
      %p154 = pneg %p36
      %p155 = pneg %p33
      %p156 = pneg %p57
      %p157 = pneg %p54
      %p158 = pneg %p83
      %p159 = pneg %p80
      %p160 = scmp.lt.s32.totalorder %s15, 1
      %s161 = scalar_select %p160, %s15, 1
      %s162 = smul.addr %s161, 8
      %s163 = smul.addr %s162, 4
      %s164 = scalar_lea.vmem %s2, %s163
      %p165 = pneg %p109
      %p166 = pneg %p106
      %p167 = scmp.lt.s32.totalorder %s15, 1
      %s168 = scalar_select %p167, %s15, 1
      %s169 = smul.addr %s168, 2
      %s170 = scalar_lea.vmem %s3, %s169
      %s171 = smul.u32 4, %s15
      %p172 = scmp.lt.s32.totalorder %s171, 7
      %s173 = scalar_select %p172, %s171, 7
      %s174 = smul.addr %s173, 18
      %s175 = smul.addr %s174, 4
      %s176 = scalar_lea.vmem %s0, %s175
      %s177 = smul.u32 4, %s15
      %p178 = scmp.lt.s32.totalorder %s15, 1
      %s179 = scalar_select %p178, %s15, 1
      %s180 = smul.addr %s179, 8
      %s181 = smul.addr %s180, 4
      %s182 = scalar_lea.vmem %s2, %s181
      %p183 = scmp.lt.s32.totalorder %s15, 1
      %s184 = scalar_select %p183, %s15, 1
      %s185 = smul.addr %s184, 2
      %s186 = scalar_lea.vmem %s3, %s185
      %v188 = vld [vmem:[%s176] sm:$0xf]
      %v189 = vld [vmem:[%s176 + $0x8] sm:$0xf]
      %v190 = vld [vmem:[%s176 + $0x10] sm:$0xf]
      %v191 = vld [vmem:[%s176 + $0x18] sm:$0xf]
      %v192 = vld [vmem:[%s176 + $0x20] sm:$0xf]
      %v193 = vld [vmem:[%s176 + $0x28] sm:$0xf]
      %v194 = vld [vmem:[%s176 + $0x30] sm:$0xf]
      %v195 = vld [vmem:[%s176 + $0x38] sm:$0xf]
      %v196 = vld [vmem:[%s1] sm:$0xf]
      %v197 = vld [vmem:[%s1 + $0x4] sm:$0xf]
      %v198 = vld [vmem:[%s1 + $0x8] sm:$0xf]
      %v199 = vld [vmem:[%s1 + $0xc] sm:$0xf]
      %v200 = vld [vmem:[%s1 + $0x10] sm:$0xf]
      %v201 = vld [vmem:[%s1 + $0x14] sm:$0xf]
      %v202 = vld [vmem:[%s1 + $0x18] sm:$0xf]
      %v203 = vld [vmem:[%s1 + $0x1c] sm:$0xf]
      %v204 = vld [vmem:[%s1 + $0x20] sm:$0xf]
      %v205 = vld [vmem:[%s1 + $0x24] sm:$0xf]
      %v206 = vld [vmem:[%s1 + $0x28] sm:$0xf]
      %v207 = vld [vmem:[%s1 + $0x2c] sm:$0xf]
      %v208 = vld [vmem:[%s1 + $0x30] sm:$0xf]
      %v209 = vld [vmem:[%s1 + $0x34] sm:$0xf]
      %v210 = vld [vmem:[%s1 + $0x38] sm:$0xf]
      %v211 = vld [vmem:[%s1 + $0x3c] sm:$0xf]
      %s212 = scalar_lea.vmem %s176, 72
      %v213 = vld [vmem:[%s212] sm:$0xf]
      %v214 = vld [vmem:[%s212 + $0x8] sm:$0xf]
      %v215 = vld [vmem:[%s212 + $0x10] sm:$0xf]
      %v216 = vld [vmem:[%s212 + $0x18] sm:$0xf]
      %v217 = vld [vmem:[%s212 + $0x20] sm:$0xf]
      %v218 = vld [vmem:[%s212 + $0x28] sm:$0xf]
      %v219 = vld [vmem:[%s212 + $0x30] sm:$0xf]
      %v220 = vld [vmem:[%s212 + $0x38] sm:$0xf]
      %s221 = scalar_lea.vmem %s1, 64
      %v222 = vld [vmem:[%s221] sm:$0xf]
      %v223 = vld [vmem:[%s221 + $0x4] sm:$0xf]
      %v224 = vld [vmem:[%s221 + $0x8] sm:$0xf]
      %v225 = vld [vmem:[%s221 + $0xc] sm:$0xf]
      %v226 = vld [vmem:[%s221 + $0x10] sm:$0xf]
      %v227 = vld [vmem:[%s221 + $0x14] sm:$0xf]
      %v228 = vld [vmem:[%s221 + $0x18] sm:$0xf]
      %v229 = vld [vmem:[%s221 + $0x1c] sm:$0xf]
      %v230 = vld [vmem:[%s221 + $0x20] sm:$0xf]
      %v231 = vld [vmem:[%s221 + $0x24] sm:$0xf]
      %v232 = vld [vmem:[%s221 + $0x28] sm:$0xf]
      %v233 = vld [vmem:[%s221 + $0x2c] sm:$0xf]
      %v234 = vld [vmem:[%s221 + $0x30] sm:$0xf]
      %v235 = vld [vmem:[%s221 + $0x34] sm:$0xf]
      %v236 = vld [vmem:[%s221 + $0x38] sm:$0xf]
      %v237 = vld [vmem:[%s221 + $0x3c] sm:$0xf]
      %v246 = vunpack.c.l.b16 %v213
      %v247 = vunpack.c.l.b16 %v214
      %v248 = vunpack.c.l.b16 %v215
      %v249 = vunpack.c.l.b16 %v216
      %v250 = vunpack.c.l.b16 %v217
      %v251 = vunpack.c.l.b16 %v218
      %v252 = vunpack.c.l.b16 %v219
      %v253 = vunpack.c.l.b16 %v220
      %v254 = vpack.c.b16 %v247, %v246
      %v255 = vpack.c.b16 %v249, %v248
      %v256 = vpack.c.b16 %v251, %v250
      %v257 = vpack.c.b16 %v253, %v252
      %v278 = vunpack.c.l.b16 %v222
      %v279 = vunpack.c.l.b16 %v223
      %v280 = vunpack.c.l.b16 %v224
      %v281 = vunpack.c.l.b16 %v225
      %v282 = vunpack.c.l.b16 %v226
      %v283 = vunpack.c.l.b16 %v227
      %v284 = vunpack.c.l.b16 %v228
      %v285 = vunpack.c.l.b16 %v229
      %v286 = vunpack.c.l.b16 %v230
      %v287 = vunpack.c.l.b16 %v231
      %v288 = vunpack.c.l.b16 %v232
      %v289 = vunpack.c.l.b16 %v233
      %v290 = vunpack.c.l.b16 %v234
      %v291 = vunpack.c.l.b16 %v235
      %v292 = vunpack.c.l.b16 %v236
      %v293 = vunpack.c.l.b16 %v237
      %v294 = vpack.c.b16 %v279, %v278
      %v295 = vpack.c.b16 %v281, %v280
      %v296 = vpack.c.b16 %v283, %v282
      %v297 = vpack.c.b16 %v285, %v284
      %v298 = vpack.c.b16 %v287, %v286
      %v299 = vpack.c.b16 %v289, %v288
      %v300 = vpack.c.b16 %v291, %v290
      %v301 = vpack.c.b16 %v293, %v292
      %310 = vmatprep.subr.bf16.mxu0 0
      %311 = vmatpush1.bf16.msra.mxu0 %v294
      %312 = vmatprep.subr.bf16.mxu0 0
      %313 = vmatpush1.bf16.msra.mxu0 %v295
      %314 = vmatprep.subr.bf16.mxu0 0
      %315 = vmatpush1.bf16.msra.mxu0 %v296
      %316 = vmatprep.subr.bf16.mxu0 0
      %317 = vmatpush1.bf16.msra.mxu0 %v297
      %318 = vmatprep.subr.bf16.mxu0 0
      %319 = vmatpush1.bf16.msra.mxu0 %v298
      %320 = vmatprep.subr.bf16.mxu0 0
      %321 = vmatpush1.bf16.msra.mxu0 %v299
      %322 = vmatprep.subr.bf16.mxu0 0
      %323 = vmatpush1.bf16.msra.mxu0 %v300
      %324 = vmatprep.subr.bf16.mxu0 0
      %325 = vmatpush1.bf16.msra.mxu0 %v301
      %326 = vmatprep.subr.bf16.mxu0 0
      %327 = vmatpush1.bf16.msra.mxu0 0
      %328 = vmatprep.subr.bf16.mxu0 0
      %329 = vmatpush1.bf16.msra.mxu0 0
      %330 = vmatprep.subr.bf16.mxu0 0
      %331 = vmatpush1.bf16.msra.mxu0 0
      %332 = vmatprep.subr.bf16.mxu0 0
      %333 = vmatpush1.bf16.msra.mxu0 0
      %334 = vmatprep.subr.bf16.mxu0 0
      %335 = vmatpush1.bf16.msra.mxu0 0
      %336 = vmatprep.subr.bf16.mxu0 0
      %337 = vmatpush1.bf16.msra.mxu0 0
      %338 = vmatprep.subr.bf16.mxu0 0
      %339 = vmatpush1.bf16.msra.mxu0 0
      %340 = vmatprep.subr.bf16.mxu0 0
      %341 = vmatpush1.bf16.msra.mxu0 0
      %342 = vmatprep.mubr.bf16.mxu0 0
      %343 = vmatmul.mubr.bf16.gmra.mrb[0].mxu0 %v254
      %v344 = vpop.f32.mrb[0].mxu0
      %v345 = vadd.f32 0.0, %v344
      %v346 = vpop.f32.mrb[0].mxu0
      %v347 = vpop.f32.mrb[0].mxu0
      %v348 = vadd.f32 0.0, %v347
      %v349 = vpop.f32.mrb[0].mxu0
      %350 = vmatprep.mubr.bf16.mxu0 0
      %351 = vmatmul.mubr.bf16.gmra.mrb[0].mxu0 %v255
      %v352 = vpop.f32.mrb[0].mxu0
      %v353 = vadd.f32 0.0, %v352
      %v354 = vpop.f32.mrb[0].mxu0
      %v355 = vpop.f32.mrb[0].mxu0
      %v356 = vadd.f32 0.0, %v355
      %v357 = vpop.f32.mrb[0].mxu0
      %358 = vmatprep.mubr.bf16.mxu0 0
      %359 = vmatmul.mubr.bf16.gmra.mrb[0].mxu0 %v256
      %v360 = vpop.f32.mrb[0].mxu0
      %v361 = vadd.f32 0.0, %v360
      %v362 = vpop.f32.mrb[0].mxu0
      %v363 = vpop.f32.mrb[0].mxu0
      %v364 = vadd.f32 0.0, %v363
      %v365 = vpop.f32.mrb[0].mxu0
      %366 = vmatprep.mubr.bf16.mxu0 0
      %367 = vmatmul.mubr.bf16.gmra.mrb[0].mxu0 %v257
      %v368 = vpop.f32.mrb[0].mxu0
      %v369 = vadd.f32 0.0, %v368
      %v370 = vpop.f32.mrb[0].mxu0
      %v371 = vpop.f32.mrb[0].mxu0
      %v372 = vadd.f32 0.0, %v371
      %v373 = vpop.f32.mrb[0].mxu0
      %374 = vdwg.mxu0
      %v383 = vunpack.c.l.b16 %v188
      %v384 = vunpack.c.l.b16 %v189
      %v385 = vunpack.c.l.b16 %v190
      %v386 = vunpack.c.l.b16 %v191
      %v387 = vunpack.c.l.b16 %v192
      %v388 = vunpack.c.l.b16 %v193
      %v389 = vunpack.c.l.b16 %v194
      %v390 = vunpack.c.l.b16 %v195
      %v391 = vpack.c.b16 %v384, %v383
      %v392 = vpack.c.b16 %v386, %v385
      %v393 = vpack.c.b16 %v388, %v387
      %v394 = vpack.c.b16 %v390, %v389
      %v415 = vunpack.c.l.b16 %v196
      %v416 = vunpack.c.l.b16 %v197
      %v417 = vunpack.c.l.b16 %v198
      %v418 = vunpack.c.l.b16 %v199
      %v419 = vunpack.c.l.b16 %v200
      %v420 = vunpack.c.l.b16 %v201
      %v421 = vunpack.c.l.b16 %v202
      %v422 = vunpack.c.l.b16 %v203
      %v423 = vunpack.c.l.b16 %v204
      %v424 = vunpack.c.l.b16 %v205
      %v425 = vunpack.c.l.b16 %v206
      %v426 = vunpack.c.l.b16 %v207
      %v427 = vunpack.c.l.b16 %v208
      %v428 = vunpack.c.l.b16 %v209
      %v429 = vunpack.c.l.b16 %v210
      %v430 = vunpack.c.l.b16 %v211
      %v431 = vpack.c.b16 %v416, %v415
      %v432 = vpack.c.b16 %v418, %v417
      %v433 = vpack.c.b16 %v420, %v419
      %v434 = vpack.c.b16 %v422, %v421
      %v435 = vpack.c.b16 %v424, %v423
      %v436 = vpack.c.b16 %v426, %v425
      %v437 = vpack.c.b16 %v428, %v427
      %v438 = vpack.c.b16 %v430, %v429
      %447 = vmatprep.subr.bf16.mxu0 0
      %448 = vmatpush1.bf16.msra.mxu0 %v431
      %449 = vmatprep.subr.bf16.mxu0 0
      %450 = vmatpush1.bf16.msra.mxu0 %v432
      %451 = vmatprep.subr.bf16.mxu0 0
      %452 = vmatpush1.bf16.msra.mxu0 %v433
      %453 = vmatprep.subr.bf16.mxu0 0
      %454 = vmatpush1.bf16.msra.mxu0 %v434
      %455 = vmatprep.subr.bf16.mxu0 0
      %456 = vmatpush1.bf16.msra.mxu0 %v435
      %457 = vmatprep.subr.bf16.mxu0 0
      %458 = vmatpush1.bf16.msra.mxu0 %v436
      %459 = vmatprep.subr.bf16.mxu0 0
      %460 = vmatpush1.bf16.msra.mxu0 %v437
      %461 = vmatprep.subr.bf16.mxu0 0
      %462 = vmatpush1.bf16.msra.mxu0 %v438
      %463 = vmatprep.subr.bf16.mxu0 0
      %464 = vmatpush1.bf16.msra.mxu0 0
      %465 = vmatprep.subr.bf16.mxu0 0
      %466 = vmatpush1.bf16.msra.mxu0 0
      %467 = vmatprep.subr.bf16.mxu0 0
      %468 = vmatpush1.bf16.msra.mxu0 0
      %469 = vmatprep.subr.bf16.mxu0 0
      %470 = vmatpush1.bf16.msra.mxu0 0
      %471 = vmatprep.subr.bf16.mxu0 0
      %472 = vmatpush1.bf16.msra.mxu0 0
      %473 = vmatprep.subr.bf16.mxu0 0
      %474 = vmatpush1.bf16.msra.mxu0 0
      %475 = vmatprep.subr.bf16.mxu0 0
      %476 = vmatpush1.bf16.msra.mxu0 0
      %477 = vmatprep.subr.bf16.mxu0 0
      %478 = vmatpush1.bf16.msra.mxu0 0
      %479 = vmatprep.mubr.bf16.mxu0 0
      %480 = vmatmul.mubr.bf16.gmra.mrb[0].mxu0 %v391
      %v481 = vpop.f32.mrb[0].mxu0
      %v482 = vadd.f32 %v345, %v481
      %v483 = vpop.f32.mrb[0].mxu0
      %v484 = vpop.f32.mrb[0].mxu0
      %v485 = vadd.f32 %v348, %v484
      %v486 = vpop.f32.mrb[0].mxu0
      %487 = vmatprep.mubr.bf16.mxu0 0
      %488 = vmatmul.mubr.bf16.gmra.mrb[0].mxu0 %v392
      %v489 = vpop.f32.mrb[0].mxu0
      %v490 = vadd.f32 %v353, %v489
      %v491 = vpop.f32.mrb[0].mxu0
      %v492 = vpop.f32.mrb[0].mxu0
      %v493 = vadd.f32 %v356, %v492
      %v494 = vpop.f32.mrb[0].mxu0
      %495 = vmatprep.mubr.bf16.mxu0 0
      %496 = vmatmul.mubr.bf16.gmra.mrb[0].mxu0 %v393
      %v497 = vpop.f32.mrb[0].mxu0
      %v498 = vadd.f32 %v361, %v497
      %v499 = vpop.f32.mrb[0].mxu0
      %v500 = vpop.f32.mrb[0].mxu0
      %v501 = vadd.f32 %v364, %v500
      %v502 = vpop.f32.mrb[0].mxu0
      %503 = vmatprep.mubr.bf16.mxu0 0
      %504 = vmatmul.mubr.bf16.gmra.mrb[0].mxu0 %v394
      %v505 = vpop.f32.mrb[0].mxu0
      %v506 = vadd.f32 %v369, %v505
      %v507 = vpop.f32.mrb[0].mxu0
      %v508 = vpop.f32.mrb[0].mxu0
      %v509 = vadd.f32 %v372, %v508
      %v510 = vpop.f32.mrb[0].mxu0
      %511 = vdwg.mxu0
      %v512 = vld [vmem:[%s176] sm:$0xf]
      %v513 = vld [vmem:[%s176 + $0x4] sm:$0x1]
      %v514 = vld [vmem:[%s176 + $0x8] sm:$0xf]
      %v515 = vld [vmem:[%s176 + $0xc] sm:$0x1]
      %v516 = vld [vmem:[%s176 + $0x10] sm:$0xf]
      %v517 = vld [vmem:[%s176 + $0x14] sm:$0x1]
      %v518 = vld [vmem:[%s176 + $0x18] sm:$0xf]
      %v519 = vld [vmem:[%s176 + $0x1c] sm:$0x1]
      %v520 = vld [vmem:[%s176 + $0x20] sm:$0xf]
      %v521 = vld [vmem:[%s176 + $0x24] sm:$0x1]
      %v522 = vld [vmem:[%s176 + $0x28] sm:$0xf]
      %v523 = vld [vmem:[%s176 + $0x2c] sm:$0x1]
      %v524 = vld [vmem:[%s176 + $0x30] sm:$0xf]
      %v525 = vld [vmem:[%s176 + $0x34] sm:$0x1]
      %v526 = vld [vmem:[%s176 + $0x38] sm:$0xf]
      %v527 = vld [vmem:[%s176 + $0x3c] sm:$0x1]
      %vm528 = vsmask.f32 3328
      %vm529 = vsmask.f32 7440
      %vm530 = vmor %vm528, %vm529
      %v532 = vshrl.u32 %v512, 16
      %v534 = vrot.slane %v532, 4
      %v535 = vshll.u32 %v512, 16
      %v537 = vrot.slane %v535, 5
      %v538 = vor.u32 %v534, %v537
      %v539 = vrot.slane %v538, 4
      %v541 = vshll.u32 %v513, 16
      %v543 = vrot.slane %v541, 5
      %v544 = vsel %vm530, %v539, %v543
      %v546 = vshrl.u32 %v514, 16
      %v548 = vrot.slane %v546, 4
      %v549 = vshll.u32 %v514, 16
      %v551 = vrot.slane %v549, 5
      %v552 = vor.u32 %v548, %v551
      %v553 = vrot.slane %v552, 4
      %v555 = vshll.u32 %v515, 16
      %v557 = vrot.slane %v555, 5
      %v558 = vsel %vm530, %v553, %v557
      %v560 = vshrl.u32 %v516, 16
      %v562 = vrot.slane %v560, 4
      %v563 = vshll.u32 %v516, 16
      %v565 = vrot.slane %v563, 5
      %v566 = vor.u32 %v562, %v565
      %v567 = vrot.slane %v566, 4
      %v569 = vshll.u32 %v517, 16
      %v571 = vrot.slane %v569, 5
      %v572 = vsel %vm530, %v567, %v571
      %v574 = vshrl.u32 %v518, 16
      %v576 = vrot.slane %v574, 4
      %v577 = vshll.u32 %v518, 16
      %v579 = vrot.slane %v577, 5
      %v580 = vor.u32 %v576, %v579
      %v581 = vrot.slane %v580, 4
      %v583 = vshll.u32 %v519, 16
      %v585 = vrot.slane %v583, 5
      %v586 = vsel %vm530, %v581, %v585
      %v588 = vshrl.u32 %v520, 16
      %v590 = vrot.slane %v588, 4
      %v591 = vshll.u32 %v520, 16
      %v593 = vrot.slane %v591, 5
      %v594 = vor.u32 %v590, %v593
      %v595 = vrot.slane %v594, 4
      %v597 = vshll.u32 %v521, 16
      %v599 = vrot.slane %v597, 5
      %v600 = vsel %vm530, %v595, %v599
      %v602 = vshrl.u32 %v522, 16
      %v604 = vrot.slane %v602, 4
      %v605 = vshll.u32 %v522, 16
      %v607 = vrot.slane %v605, 5
      %v608 = vor.u32 %v604, %v607
      %v609 = vrot.slane %v608, 4
      %v611 = vshll.u32 %v523, 16
      %v613 = vrot.slane %v611, 5
      %v614 = vsel %vm530, %v609, %v613
      %v616 = vshrl.u32 %v524, 16
      %v618 = vrot.slane %v616, 4
      %v619 = vshll.u32 %v524, 16
      %v621 = vrot.slane %v619, 5
      %v622 = vor.u32 %v618, %v621
      %v623 = vrot.slane %v622, 4
      %v625 = vshll.u32 %v525, 16
      %v627 = vrot.slane %v625, 5
      %v628 = vsel %vm530, %v623, %v627
      %v630 = vshrl.u32 %v526, 16
      %v632 = vrot.slane %v630, 4
      %v633 = vshll.u32 %v526, 16
      %v635 = vrot.slane %v633, 5
      %v636 = vor.u32 %v632, %v635
      %v637 = vrot.slane %v636, 4
      %v639 = vshll.u32 %v527, 16
      %v641 = vrot.slane %v639, 5
      %v642 = vsel %vm530, %v637, %v641
      %s643 = scalar_lea.vmem %s1, 128
      %v644 = vld [vmem:[%s643] sm:$0xf]
      %v645 = vld [vmem:[%s643 + $0x4] sm:$0xf]
      %v646 = vld [vmem:[%s643 + $0x8] sm:$0xf]
      %v647 = vld [vmem:[%s643 + $0xc] sm:$0xf]
      %v648 = vld [vmem:[%s643 + $0x10] sm:$0xf]
      %v649 = vld [vmem:[%s643 + $0x14] sm:$0xf]
      %v650 = vld [vmem:[%s643 + $0x18] sm:$0xf]
      %v651 = vld [vmem:[%s643 + $0x1c] sm:$0xf]
      %v652 = vld [vmem:[%s643 + $0x20] sm:$0xf]
      %v653 = vld [vmem:[%s643 + $0x24] sm:$0xf]
      %v654 = vld [vmem:[%s643 + $0x28] sm:$0xf]
      %v655 = vld [vmem:[%s643 + $0x2c] sm:$0xf]
      %v656 = vld [vmem:[%s643 + $0x30] sm:$0xf]
      %v657 = vld [vmem:[%s643 + $0x34] sm:$0xf]
      %v658 = vld [vmem:[%s643 + $0x38] sm:$0xf]
      %v659 = vld [vmem:[%s643 + $0x3c] sm:$0xf]
      %v660 = vunpack.c.l.b16 %v544
      %v661 = vunpack.c.l.b16 %v558
      %v662 = vunpack.c.l.b16 %v572
      %v663 = vunpack.c.l.b16 %v586
      %v664 = vunpack.c.l.b16 %v600
      %v665 = vunpack.c.l.b16 %v614
      %v666 = vunpack.c.l.b16 %v628
      %v667 = vunpack.c.l.b16 %v642
      %v668 = vpack.c.b16 %v661, %v660
      %v669 = vpack.c.b16 %v663, %v662
      %v670 = vpack.c.b16 %v665, %v664
      %v671 = vpack.c.b16 %v667, %v666
      %v692 = vunpack.c.l.b16 %v644
      %v693 = vunpack.c.l.b16 %v645
      %v694 = vunpack.c.l.b16 %v646
      %v695 = vunpack.c.l.b16 %v647
      %v696 = vunpack.c.l.b16 %v648
      %v697 = vunpack.c.l.b16 %v649
      %v698 = vunpack.c.l.b16 %v650
      %v699 = vunpack.c.l.b16 %v651
      %v700 = vunpack.c.l.b16 %v652
      %v701 = vunpack.c.l.b16 %v653
      %v702 = vunpack.c.l.b16 %v654
      %v703 = vunpack.c.l.b16 %v655
      %v704 = vunpack.c.l.b16 %v656
      %v705 = vunpack.c.l.b16 %v657
      %v706 = vunpack.c.l.b16 %v658
      %v707 = vunpack.c.l.b16 %v659
      %v708 = vpack.c.b16 %v693, %v692
      %v709 = vpack.c.b16 %v695, %v694
      %v710 = vpack.c.b16 %v697, %v696
      %v711 = vpack.c.b16 %v699, %v698
      %v712 = vpack.c.b16 %v701, %v700
      %v713 = vpack.c.b16 %v703, %v702
      %v714 = vpack.c.b16 %v705, %v704
      %v715 = vpack.c.b16 %v707, %v706
      %724 = vmatprep.subr.bf16.mxu0 0
      %725 = vmatpush1.bf16.msra.mxu0 %v708
      %726 = vmatprep.subr.bf16.mxu0 0
      %727 = vmatpush1.bf16.msra.mxu0 %v709
      %728 = vmatprep.subr.bf16.mxu0 0
      %729 = vmatpush1.bf16.msra.mxu0 %v710
      %730 = vmatprep.subr.bf16.mxu0 0
      %731 = vmatpush1.bf16.msra.mxu0 %v711
      %732 = vmatprep.subr.bf16.mxu0 0
      %733 = vmatpush1.bf16.msra.mxu0 %v712
      %734 = vmatprep.subr.bf16.mxu0 0
      %735 = vmatpush1.bf16.msra.mxu0 %v713
      %736 = vmatprep.subr.bf16.mxu0 0
      %737 = vmatpush1.bf16.msra.mxu0 %v714
      %738 = vmatprep.subr.bf16.mxu0 0
      %739 = vmatpush1.bf16.msra.mxu0 %v715
      %740 = vmatprep.subr.bf16.mxu0 0
      %741 = vmatpush1.bf16.msra.mxu0 0
      %742 = vmatprep.subr.bf16.mxu0 0
      %743 = vmatpush1.bf16.msra.mxu0 0
      %744 = vmatprep.subr.bf16.mxu0 0
      %745 = vmatpush1.bf16.msra.mxu0 0
      %746 = vmatprep.subr.bf16.mxu0 0
      %747 = vmatpush1.bf16.msra.mxu0 0
      %748 = vmatprep.subr.bf16.mxu0 0
      %749 = vmatpush1.bf16.msra.mxu0 0
      %750 = vmatprep.subr.bf16.mxu0 0
      %751 = vmatpush1.bf16.msra.mxu0 0
      %752 = vmatprep.subr.bf16.mxu0 0
      %753 = vmatpush1.bf16.msra.mxu0 0
      %754 = vmatprep.subr.bf16.mxu0 0
      %755 = vmatpush1.bf16.msra.mxu0 0
      %756 = vmatprep.mubr.bf16.mxu0 0
      %757 = vmatmul.mubr.bf16.gmra.mrb[0].mxu0 %v668
      %v758 = vpop.f32.mrb[0].mxu0
      %v759 = vadd.f32 0.0, %v758
      %v760 = vpop.f32.mrb[0].mxu0
      %v761 = vpop.f32.mrb[0].mxu0
      %v762 = vadd.f32 0.0, %v761
      %v763 = vpop.f32.mrb[0].mxu0
      %764 = vmatprep.mubr.bf16.mxu0 0
      %765 = vmatmul.mubr.bf16.gmra.mrb[0].mxu0 %v669
      %v766 = vpop.f32.mrb[0].mxu0
      %v767 = vadd.f32 0.0, %v766
      %v768 = vpop.f32.mrb[0].mxu0
      %v769 = vpop.f32.mrb[0].mxu0
      %v770 = vadd.f32 0.0, %v769
      %v771 = vpop.f32.mrb[0].mxu0
      %772 = vmatprep.mubr.bf16.mxu0 0
      %773 = vmatmul.mubr.bf16.gmra.mrb[0].mxu0 %v670
      %v774 = vpop.f32.mrb[0].mxu0
      %v775 = vadd.f32 0.0, %v774
      %v776 = vpop.f32.mrb[0].mxu0
      %v777 = vpop.f32.mrb[0].mxu0
      %v778 = vadd.f32 0.0, %v777
      %v779 = vpop.f32.mrb[0].mxu0
      %780 = vmatprep.mubr.bf16.mxu0 0
      %781 = vmatmul.mubr.bf16.gmra.mrb[0].mxu0 %v671
      %v782 = vpop.f32.mrb[0].mxu0
      %v783 = vadd.f32 0.0, %v782
      %v784 = vpop.f32.mrb[0].mxu0
      %v785 = vpop.f32.mrb[0].mxu0
      %v786 = vadd.f32 0.0, %v785
      %v787 = vpop.f32.mrb[0].mxu0
      %788 = vdwg.mxu0
      %v789 = vadd.f32 %v482, %v759
      %v790 = vadd.f32 %v485, %v762
      %v791 = vadd.f32 %v490, %v767
      %v792 = vadd.f32 %v493, %v770
      %v793 = vadd.f32 %v498, %v775
      %v794 = vadd.f32 %v501, %v778
      %v795 = vadd.f32 %v506, %v783
      %v796 = vadd.f32 %v509, %v786
      %s797 = scalar_lea.vmem %s176, 144
      %v798 = vld [vmem:[%s797] sm:$0xf]
      %v799 = vld [vmem:[%s797 + $0x8] sm:$0xf]
      %v800 = vld [vmem:[%s797 + $0x10] sm:$0xf]
      %v801 = vld [vmem:[%s797 + $0x18] sm:$0xf]
      %v802 = vld [vmem:[%s797 + $0x20] sm:$0xf]
      %v803 = vld [vmem:[%s797 + $0x28] sm:$0xf]
      %v804 = vld [vmem:[%s797 + $0x30] sm:$0xf]
      %v805 = vld [vmem:[%s797 + $0x38] sm:$0xf]
      %s806 = scalar_lea.vmem %s1, 192
      %v807 = vld [vmem:[%s806] sm:$0xf]
      %v808 = vld [vmem:[%s806 + $0x4] sm:$0xf]
      %v809 = vld [vmem:[%s806 + $0x8] sm:$0xf]
      %v810 = vld [vmem:[%s806 + $0xc] sm:$0xf]
      %v811 = vld [vmem:[%s806 + $0x10] sm:$0xf]
      %v812 = vld [vmem:[%s806 + $0x14] sm:$0xf]
      %v813 = vld [vmem:[%s806 + $0x18] sm:$0xf]
      %v814 = vld [vmem:[%s806 + $0x1c] sm:$0xf]
      %v815 = vld [vmem:[%s806 + $0x20] sm:$0xf]
      %v816 = vld [vmem:[%s806 + $0x24] sm:$0xf]
      %v817 = vld [vmem:[%s806 + $0x28] sm:$0xf]
      %v818 = vld [vmem:[%s806 + $0x2c] sm:$0xf]
      %v819 = vld [vmem:[%s806 + $0x30] sm:$0xf]
      %v820 = vld [vmem:[%s806 + $0x34] sm:$0xf]
      %v821 = vld [vmem:[%s806 + $0x38] sm:$0xf]
      %v822 = vld [vmem:[%s806 + $0x3c] sm:$0xf]
      %v831 = vunpack.c.l.b16 %v798
      %v832 = vunpack.c.l.b16 %v799
      %v833 = vunpack.c.l.b16 %v800
      %v834 = vunpack.c.l.b16 %v801
      %v835 = vunpack.c.l.b16 %v802
      %v836 = vunpack.c.l.b16 %v803
      %v837 = vunpack.c.l.b16 %v804
      %v838 = vunpack.c.l.b16 %v805
      %v839 = vpack.c.b16 %v832, %v831
      %v840 = vpack.c.b16 %v834, %v833
      %v841 = vpack.c.b16 %v836, %v835
      %v842 = vpack.c.b16 %v838, %v837
      %v863 = vunpack.c.l.b16 %v807
      %v864 = vunpack.c.l.b16 %v808
      %v865 = vunpack.c.l.b16 %v809
      %v866 = vunpack.c.l.b16 %v810
      %v867 = vunpack.c.l.b16 %v811
      %v868 = vunpack.c.l.b16 %v812
      %v869 = vunpack.c.l.b16 %v813
      %v870 = vunpack.c.l.b16 %v814
      %v871 = vunpack.c.l.b16 %v815
      %v872 = vunpack.c.l.b16 %v816
      %v873 = vunpack.c.l.b16 %v817
      %v874 = vunpack.c.l.b16 %v818
      %v875 = vunpack.c.l.b16 %v819
      %v876 = vunpack.c.l.b16 %v820
      %v877 = vunpack.c.l.b16 %v821
      %v878 = vunpack.c.l.b16 %v822
      %v879 = vpack.c.b16 %v864, %v863
      %v880 = vpack.c.b16 %v866, %v865
      %v881 = vpack.c.b16 %v868, %v867
      %v882 = vpack.c.b16 %v870, %v869
      %v883 = vpack.c.b16 %v872, %v871
      %v884 = vpack.c.b16 %v874, %v873
      %v885 = vpack.c.b16 %v876, %v875
      %v886 = vpack.c.b16 %v878, %v877
      %895 = vmatprep.subr.bf16.mxu0 0
      %896 = vmatpush1.bf16.msra.mxu0 %v879
      %897 = vmatprep.subr.bf16.mxu0 0
      %898 = vmatpush1.bf16.msra.mxu0 %v880
      %899 = vmatprep.subr.bf16.mxu0 0
      %900 = vmatpush1.bf16.msra.mxu0 %v881
      %901 = vmatprep.subr.bf16.mxu0 0
      %902 = vmatpush1.bf16.msra.mxu0 %v882
      %903 = vmatprep.subr.bf16.mxu0 0
      %904 = vmatpush1.bf16.msra.mxu0 %v883
      %905 = vmatprep.subr.bf16.mxu0 0
      %906 = vmatpush1.bf16.msra.mxu0 %v884
      %907 = vmatprep.subr.bf16.mxu0 0
      %908 = vmatpush1.bf16.msra.mxu0 %v885
      %909 = vmatprep.subr.bf16.mxu0 0
      %910 = vmatpush1.bf16.msra.mxu0 %v886
      %911 = vmatprep.subr.bf16.mxu0 0
      %912 = vmatpush1.bf16.msra.mxu0 0
      %913 = vmatprep.subr.bf16.mxu0 0
      %914 = vmatpush1.bf16.msra.mxu0 0
      %915 = vmatprep.subr.bf16.mxu0 0
      %916 = vmatpush1.bf16.msra.mxu0 0
      %917 = vmatprep.subr.bf16.mxu0 0
      %918 = vmatpush1.bf16.msra.mxu0 0
      %919 = vmatprep.subr.bf16.mxu0 0
      %920 = vmatpush1.bf16.msra.mxu0 0
      %921 = vmatprep.subr.bf16.mxu0 0
      %922 = vmatpush1.bf16.msra.mxu0 0
      %923 = vmatprep.subr.bf16.mxu0 0
      %924 = vmatpush1.bf16.msra.mxu0 0
      %925 = vmatprep.subr.bf16.mxu0 0
      %926 = vmatpush1.bf16.msra.mxu0 0
      %927 = vmatprep.mubr.bf16.mxu0 0
      %928 = vmatmul.mubr.bf16.gmra.mrb[0].mxu0 %v839
      %v929 = vpop.f32.mrb[0].mxu0
      %v930 = vadd.f32 0.0, %v929
      %v931 = vpop.f32.mrb[0].mxu0
      %v932 = vpop.f32.mrb[0].mxu0
      %v933 = vadd.f32 0.0, %v932
      %v934 = vpop.f32.mrb[0].mxu0
      %935 = vmatprep.mubr.bf16.mxu0 0
      %936 = vmatmul.mubr.bf16.gmra.mrb[0].mxu0 %v840
      %v937 = vpop.f32.mrb[0].mxu0
      %v938 = vadd.f32 0.0, %v937
      %v939 = vpop.f32.mrb[0].mxu0
      %v940 = vpop.f32.mrb[0].mxu0
      %v941 = vadd.f32 0.0, %v940
      %v942 = vpop.f32.mrb[0].mxu0
      %943 = vmatprep.mubr.bf16.mxu0 0
      %944 = vmatmul.mubr.bf16.gmra.mrb[0].mxu0 %v841
      %v945 = vpop.f32.mrb[0].mxu0
      %v946 = vadd.f32 0.0, %v945
      %v947 = vpop.f32.mrb[0].mxu0
      %v948 = vpop.f32.mrb[0].mxu0
      %v949 = vadd.f32 0.0, %v948
      %v950 = vpop.f32.mrb[0].mxu0
      %951 = vmatprep.mubr.bf16.mxu0 0
      %952 = vmatmul.mubr.bf16.gmra.mrb[0].mxu0 %v842
      %v953 = vpop.f32.mrb[0].mxu0
      %v954 = vadd.f32 0.0, %v953
      %v955 = vpop.f32.mrb[0].mxu0
      %v956 = vpop.f32.mrb[0].mxu0
      %v957 = vadd.f32 0.0, %v956
      %v958 = vpop.f32.mrb[0].mxu0
      %959 = vdwg.mxu0
      %v960 = vadd.f32 %v789, %v930
      %v961 = vadd.f32 %v790, %v933
      %v962 = vadd.f32 %v791, %v938
      %v963 = vadd.f32 %v792, %v941
      %v964 = vadd.f32 %v793, %v946
      %v965 = vadd.f32 %v794, %v949
      %v966 = vadd.f32 %v795, %v954
      %v967 = vadd.f32 %v796, %v957
      %s968 = scalar_lea.vmem %s176, 216
      %v969 = vld [vmem:[%s968] sm:$0xf]
      %v970 = vld [vmem:[%s968 + $0x8] sm:$0xf]
      %v971 = vld [vmem:[%s968 + $0x10] sm:$0xf]
      %v972 = vld [vmem:[%s968 + $0x18] sm:$0xf]
      %v973 = vld [vmem:[%s968 + $0x20] sm:$0xf]
      %v974 = vld [vmem:[%s968 + $0x28] sm:$0xf]
      %v975 = vld [vmem:[%s968 + $0x30] sm:$0xf]
      %v976 = vld [vmem:[%s968 + $0x38] sm:$0xf]
      %s977 = scalar_lea.vmem %s1, 256
      %v978 = vld [vmem:[%s977] sm:$0xf]
      %v979 = vld [vmem:[%s977 + $0x4] sm:$0xf]
      %v980 = vld [vmem:[%s977 + $0x8] sm:$0xf]
      %v981 = vld [vmem:[%s977 + $0xc] sm:$0xf]
      %v982 = vld [vmem:[%s977 + $0x10] sm:$0xf]
      %v983 = vld [vmem:[%s977 + $0x14] sm:$0xf]
      %v984 = vld [vmem:[%s977 + $0x18] sm:$0xf]
      %v985 = vld [vmem:[%s977 + $0x1c] sm:$0xf]
      %v986 = vld [vmem:[%s977 + $0x20] sm:$0xf]
      %v987 = vld [vmem:[%s977 + $0x24] sm:$0xf]
      %v988 = vld [vmem:[%s977 + $0x28] sm:$0xf]
      %v989 = vld [vmem:[%s977 + $0x2c] sm:$0xf]
      %v990 = vld [vmem:[%s977 + $0x30] sm:$0xf]
      %v991 = vld [vmem:[%s977 + $0x34] sm:$0xf]
      %v992 = vld [vmem:[%s977 + $0x38] sm:$0xf]
      %v993 = vld [vmem:[%s977 + $0x3c] sm:$0xf]
      %v1002 = vunpack.c.l.b16 %v969
      %v1003 = vunpack.c.l.b16 %v970
      %v1004 = vunpack.c.l.b16 %v971
      %v1005 = vunpack.c.l.b16 %v972
      %v1006 = vunpack.c.l.b16 %v973
      %v1007 = vunpack.c.l.b16 %v974
      %v1008 = vunpack.c.l.b16 %v975
      %v1009 = vunpack.c.l.b16 %v976
      %v1010 = vpack.c.b16 %v1003, %v1002
      %v1011 = vpack.c.b16 %v1005, %v1004
      %v1012 = vpack.c.b16 %v1007, %v1006
      %v1013 = vpack.c.b16 %v1009, %v1008
      %v1034 = vunpack.c.l.b16 %v978
      %v1035 = vunpack.c.l.b16 %v979
      %v1036 = vunpack.c.l.b16 %v980
      %v1037 = vunpack.c.l.b16 %v981
      %v1038 = vunpack.c.l.b16 %v982
      %v1039 = vunpack.c.l.b16 %v983
      %v1040 = vunpack.c.l.b16 %v984
      %v1041 = vunpack.c.l.b16 %v985
      %v1042 = vunpack.c.l.b16 %v986
      %v1043 = vunpack.c.l.b16 %v987
      %v1044 = vunpack.c.l.b16 %v988
      %v1045 = vunpack.c.l.b16 %v989
      %v1046 = vunpack.c.l.b16 %v990
      %v1047 = vunpack.c.l.b16 %v991
      %v1048 = vunpack.c.l.b16 %v992
      %v1049 = vunpack.c.l.b16 %v993
      %v1050 = vpack.c.b16 %v1035, %v1034
      %v1051 = vpack.c.b16 %v1037, %v1036
      %v1052 = vpack.c.b16 %v1039, %v1038
      %v1053 = vpack.c.b16 %v1041, %v1040
      %v1054 = vpack.c.b16 %v1043, %v1042
      %v1055 = vpack.c.b16 %v1045, %v1044
      %v1056 = vpack.c.b16 %v1047, %v1046
      %v1057 = vpack.c.b16 %v1049, %v1048
      %1066 = vmatprep.subr.bf16.mxu0 0
      %1067 = vmatpush1.bf16.msra.mxu0 %v1050
      %1068 = vmatprep.subr.bf16.mxu0 0
      %1069 = vmatpush1.bf16.msra.mxu0 %v1051
      %1070 = vmatprep.subr.bf16.mxu0 0
      %1071 = vmatpush1.bf16.msra.mxu0 %v1052
      %1072 = vmatprep.subr.bf16.mxu0 0
      %1073 = vmatpush1.bf16.msra.mxu0 %v1053
      %1074 = vmatprep.subr.bf16.mxu0 0
      %1075 = vmatpush1.bf16.msra.mxu0 %v1054
      %1076 = vmatprep.subr.bf16.mxu0 0
      %1077 = vmatpush1.bf16.msra.mxu0 %v1055
      %1078 = vmatprep.subr.bf16.mxu0 0
      %1079 = vmatpush1.bf16.msra.mxu0 %v1056
      %1080 = vmatprep.subr.bf16.mxu0 0
      %1081 = vmatpush1.bf16.msra.mxu0 %v1057
      %1082 = vmatprep.subr.bf16.mxu0 0
      %1083 = vmatpush1.bf16.msra.mxu0 0
      %1084 = vmatprep.subr.bf16.mxu0 0
      %1085 = vmatpush1.bf16.msra.mxu0 0
      %1086 = vmatprep.subr.bf16.mxu0 0
      %1087 = vmatpush1.bf16.msra.mxu0 0
      %1088 = vmatprep.subr.bf16.mxu0 0
      %1089 = vmatpush1.bf16.msra.mxu0 0
      %1090 = vmatprep.subr.bf16.mxu0 0
      %1091 = vmatpush1.bf16.msra.mxu0 0
      %1092 = vmatprep.subr.bf16.mxu0 0
      %1093 = vmatpush1.bf16.msra.mxu0 0
      %1094 = vmatprep.subr.bf16.mxu0 0
      %1095 = vmatpush1.bf16.msra.mxu0 0
      %1096 = vmatprep.subr.bf16.mxu0 0
      %1097 = vmatpush1.bf16.msra.mxu0 0
      %1098 = vmatprep.mubr.bf16.mxu0 0
      %1099 = vmatmul.mubr.bf16.gmra.mrb[0].mxu0 %v1010
      %v1100 = vpop.f32.mrb[0].mxu0
      %v1101 = vadd.f32 0.0, %v1100
      %v1102 = vpop.f32.mrb[0].mxu0
      %v1103 = vpop.f32.mrb[0].mxu0
      %v1104 = vadd.f32 0.0, %v1103
      %v1105 = vpop.f32.mrb[0].mxu0
      %1106 = vmatprep.mubr.bf16.mxu0 0
      %1107 = vmatmul.mubr.bf16.gmra.mrb[0].mxu0 %v1011
      %v1108 = vpop.f32.mrb[0].mxu0
      %v1109 = vadd.f32 0.0, %v1108
      %v1110 = vpop.f32.mrb[0].mxu0
      %v1111 = vpop.f32.mrb[0].mxu0
      %v1112 = vadd.f32 0.0, %v1111
      %v1113 = vpop.f32.mrb[0].mxu0
      %1114 = vmatprep.mubr.bf16.mxu0 0
      %1115 = vmatmul.mubr.bf16.gmra.mrb[0].mxu0 %v1012
      %v1116 = vpop.f32.mrb[0].mxu0
      %v1117 = vadd.f32 0.0, %v1116
      %v1118 = vpop.f32.mrb[0].mxu0
      %v1119 = vpop.f32.mrb[0].mxu0
      %v1120 = vadd.f32 0.0, %v1119
      %v1121 = vpop.f32.mrb[0].mxu0
      %1122 = vmatprep.mubr.bf16.mxu0 0
      %1123 = vmatmul.mubr.bf16.gmra.mrb[0].mxu0 %v1013
      %v1124 = vpop.f32.mrb[0].mxu0
      %v1125 = vadd.f32 0.0, %v1124
      %v1126 = vpop.f32.mrb[0].mxu0
      %v1127 = vpop.f32.mrb[0].mxu0
      %v1128 = vadd.f32 0.0, %v1127
      %v1129 = vpop.f32.mrb[0].mxu0
      %1130 = vdwg.mxu0
      %v1131 = vadd.f32 %v960, %v1101
      %v1132 = vadd.f32 %v961, %v1104
      %v1133 = vadd.f32 %v962, %v1109
      %v1134 = vadd.f32 %v963, %v1112
      %v1135 = vadd.f32 %v964, %v1117
      %v1136 = vadd.f32 %v965, %v1120
      %v1137 = vadd.f32 %v966, %v1125
      %v1138 = vadd.f32 %v967, %v1128
      %v1139 = vld [vmem:[%s797] sm:$0xf]
      %v1140 = vld [vmem:[%s797 + $0x4] sm:$0x1]
      %v1141 = vld [vmem:[%s797 + $0x8] sm:$0xf]
      %v1142 = vld [vmem:[%s797 + $0xc] sm:$0x1]
      %v1143 = vld [vmem:[%s797 + $0x10] sm:$0xf]
      %v1144 = vld [vmem:[%s797 + $0x14] sm:$0x1]
      %v1145 = vld [vmem:[%s797 + $0x18] sm:$0xf]
      %v1146 = vld [vmem:[%s797 + $0x1c] sm:$0x1]
      %v1147 = vld [vmem:[%s797 + $0x20] sm:$0xf]
      %v1148 = vld [vmem:[%s797 + $0x24] sm:$0x1]
      %v1149 = vld [vmem:[%s797 + $0x28] sm:$0xf]
      %v1150 = vld [vmem:[%s797 + $0x2c] sm:$0x1]
      %v1151 = vld [vmem:[%s797 + $0x30] sm:$0xf]
      %v1152 = vld [vmem:[%s797 + $0x34] sm:$0x1]
      %v1153 = vld [vmem:[%s797 + $0x38] sm:$0xf]
      %v1154 = vld [vmem:[%s797 + $0x3c] sm:$0x1]
      %v1156 = vshrl.u32 %v1139, 16
      %v1158 = vrot.slane %v1156, 4
      %v1159 = vshll.u32 %v1139, 16
      %v1161 = vrot.slane %v1159, 5
      %v1162 = vor.u32 %v1158, %v1161
      %v1163 = vrot.slane %v1162, 4
      %v1165 = vshll.u32 %v1140, 16
      %v1167 = vrot.slane %v1165, 5
      %v1168 = vsel %vm530, %v1163, %v1167
      %v1170 = vshrl.u32 %v1141, 16
      %v1172 = vrot.slane %v1170, 4
      %v1173 = vshll.u32 %v1141, 16
      %v1175 = vrot.slane %v1173, 5
      %v1176 = vor.u32 %v1172, %v1175
      %v1177 = vrot.slane %v1176, 4
      %v1179 = vshll.u32 %v1142, 16
      %v1181 = vrot.slane %v1179, 5
      %v1182 = vsel %vm530, %v1177, %v1181
      %v1184 = vshrl.u32 %v1143, 16
      %v1186 = vrot.slane %v1184, 4
      %v1187 = vshll.u32 %v1143, 16
      %v1189 = vrot.slane %v1187, 5
      %v1190 = vor.u32 %v1186, %v1189
      %v1191 = vrot.slane %v1190, 4
      %v1193 = vshll.u32 %v1144, 16
      %v1195 = vrot.slane %v1193, 5
      %v1196 = vsel %vm530, %v1191, %v1195
      %v1198 = vshrl.u32 %v1145, 16
      %v1200 = vrot.slane %v1198, 4
      %v1201 = vshll.u32 %v1145, 16
      %v1203 = vrot.slane %v1201, 5
      %v1204 = vor.u32 %v1200, %v1203
      %v1205 = vrot.slane %v1204, 4
      %v1207 = vshll.u32 %v1146, 16
      %v1209 = vrot.slane %v1207, 5
      %v1210 = vsel %vm530, %v1205, %v1209
      %v1212 = vshrl.u32 %v1147, 16
      %v1214 = vrot.slane %v1212, 4
      %v1215 = vshll.u32 %v1147, 16
      %v1217 = vrot.slane %v1215, 5
      %v1218 = vor.u32 %v1214, %v1217
      %v1219 = vrot.slane %v1218, 4
      %v1221 = vshll.u32 %v1148, 16
      %v1223 = vrot.slane %v1221, 5
      %v1224 = vsel %vm530, %v1219, %v1223
      %v1226 = vshrl.u32 %v1149, 16
      %v1228 = vrot.slane %v1226, 4
      %v1229 = vshll.u32 %v1149, 16
      %v1231 = vrot.slane %v1229, 5
      %v1232 = vor.u32 %v1228, %v1231
      %v1233 = vrot.slane %v1232, 4
      %v1235 = vshll.u32 %v1150, 16
      %v1237 = vrot.slane %v1235, 5
      %v1238 = vsel %vm530, %v1233, %v1237
      %v1240 = vshrl.u32 %v1151, 16
      %v1242 = vrot.slane %v1240, 4
      %v1243 = vshll.u32 %v1151, 16
      %v1245 = vrot.slane %v1243, 5
      %v1246 = vor.u32 %v1242, %v1245
      %v1247 = vrot.slane %v1246, 4
      %v1249 = vshll.u32 %v1152, 16
      %v1251 = vrot.slane %v1249, 5
      %v1252 = vsel %vm530, %v1247, %v1251
      %v1254 = vshrl.u32 %v1153, 16
      %v1256 = vrot.slane %v1254, 4
      %v1257 = vshll.u32 %v1153, 16
      %v1259 = vrot.slane %v1257, 5
      %v1260 = vor.u32 %v1256, %v1259
      %v1261 = vrot.slane %v1260, 4
      %v1263 = vshll.u32 %v1154, 16
      %v1265 = vrot.slane %v1263, 5
      %v1266 = vsel %vm530, %v1261, %v1265
      %s1267 = scalar_lea.vmem %s1, 320
      %v1268 = vld [vmem:[%s1267] sm:$0xf]
      %v1269 = vld [vmem:[%s1267 + $0x4] sm:$0xf]
      %v1270 = vld [vmem:[%s1267 + $0x8] sm:$0xf]
      %v1271 = vld [vmem:[%s1267 + $0xc] sm:$0xf]
      %v1272 = vld [vmem:[%s1267 + $0x10] sm:$0xf]
      %v1273 = vld [vmem:[%s1267 + $0x14] sm:$0xf]
      %v1274 = vld [vmem:[%s1267 + $0x18] sm:$0xf]
      %v1275 = vld [vmem:[%s1267 + $0x1c] sm:$0xf]
      %v1276 = vld [vmem:[%s1267 + $0x20] sm:$0xf]
      %v1277 = vld [vmem:[%s1267 + $0x24] sm:$0xf]
      %v1278 = vld [vmem:[%s1267 + $0x28] sm:$0xf]
      %v1279 = vld [vmem:[%s1267 + $0x2c] sm:$0xf]
      %v1280 = vld [vmem:[%s1267 + $0x30] sm:$0xf]
      %v1281 = vld [vmem:[%s1267 + $0x34] sm:$0xf]
      %v1282 = vld [vmem:[%s1267 + $0x38] sm:$0xf]
      %v1283 = vld [vmem:[%s1267 + $0x3c] sm:$0xf]
      %v1284 = vunpack.c.l.b16 %v1168
      %v1285 = vunpack.c.l.b16 %v1182
      %v1286 = vunpack.c.l.b16 %v1196
      %v1287 = vunpack.c.l.b16 %v1210
      %v1288 = vunpack.c.l.b16 %v1224
      %v1289 = vunpack.c.l.b16 %v1238
      %v1290 = vunpack.c.l.b16 %v1252
      %v1291 = vunpack.c.l.b16 %v1266
      %v1292 = vpack.c.b16 %v1285, %v1284
      %v1293 = vpack.c.b16 %v1287, %v1286
      %v1294 = vpack.c.b16 %v1289, %v1288
      %v1295 = vpack.c.b16 %v1291, %v1290
      %v1316 = vunpack.c.l.b16 %v1268
      %v1317 = vunpack.c.l.b16 %v1269
      %v1318 = vunpack.c.l.b16 %v1270
      %v1319 = vunpack.c.l.b16 %v1271
      %v1320 = vunpack.c.l.b16 %v1272
      %v1321 = vunpack.c.l.b16 %v1273
      %v1322 = vunpack.c.l.b16 %v1274
      %v1323 = vunpack.c.l.b16 %v1275
      %v1324 = vunpack.c.l.b16 %v1276
      %v1325 = vunpack.c.l.b16 %v1277
      %v1326 = vunpack.c.l.b16 %v1278
      %v1327 = vunpack.c.l.b16 %v1279
      %v1328 = vunpack.c.l.b16 %v1280
      %v1329 = vunpack.c.l.b16 %v1281
      %v1330 = vunpack.c.l.b16 %v1282
      %v1331 = vunpack.c.l.b16 %v1283
      %v1332 = vpack.c.b16 %v1317, %v1316
      %v1333 = vpack.c.b16 %v1319, %v1318
      %v1334 = vpack.c.b16 %v1321, %v1320
      %v1335 = vpack.c.b16 %v1323, %v1322
      %v1336 = vpack.c.b16 %v1325, %v1324
      %v1337 = vpack.c.b16 %v1327, %v1326
      %v1338 = vpack.c.b16 %v1329, %v1328
      %v1339 = vpack.c.b16 %v1331, %v1330
      %1348 = vmatprep.subr.bf16.mxu0 0
      %1349 = vmatpush1.bf16.msra.mxu0 %v1332
      %1350 = vmatprep.subr.bf16.mxu0 0
      %1351 = vmatpush1.bf16.msra.mxu0 %v1333
      %1352 = vmatprep.subr.bf16.mxu0 0
      %1353 = vmatpush1.bf16.msra.mxu0 %v1334
      %1354 = vmatprep.subr.bf16.mxu0 0
      %1355 = vmatpush1.bf16.msra.mxu0 %v1335
      %1356 = vmatprep.subr.bf16.mxu0 0
      %1357 = vmatpush1.bf16.msra.mxu0 %v1336
      %1358 = vmatprep.subr.bf16.mxu0 0
      %1359 = vmatpush1.bf16.msra.mxu0 %v1337
      %1360 = vmatprep.subr.bf16.mxu0 0
      %1361 = vmatpush1.bf16.msra.mxu0 %v1338
      %1362 = vmatprep.subr.bf16.mxu0 0
      %1363 = vmatpush1.bf16.msra.mxu0 %v1339
      %1364 = vmatprep.subr.bf16.mxu0 0
      %1365 = vmatpush1.bf16.msra.mxu0 0
      %1366 = vmatprep.subr.bf16.mxu0 0
      %1367 = vmatpush1.bf16.msra.mxu0 0
      %1368 = vmatprep.subr.bf16.mxu0 0
      %1369 = vmatpush1.bf16.msra.mxu0 0
      %1370 = vmatprep.subr.bf16.mxu0 0
      %1371 = vmatpush1.bf16.msra.mxu0 0
      %1372 = vmatprep.subr.bf16.mxu0 0
      %1373 = vmatpush1.bf16.msra.mxu0 0
      %1374 = vmatprep.subr.bf16.mxu0 0
      %1375 = vmatpush1.bf16.msra.mxu0 0
      %1376 = vmatprep.subr.bf16.mxu0 0
      %1377 = vmatpush1.bf16.msra.mxu0 0
      %1378 = vmatprep.subr.bf16.mxu0 0
      %1379 = vmatpush1.bf16.msra.mxu0 0
      %1380 = vmatprep.mubr.bf16.mxu0 0
      %1381 = vmatmul.mubr.bf16.gmra.mrb[0].mxu0 %v1292
      %v1382 = vpop.f32.mrb[0].mxu0
      %v1383 = vadd.f32 0.0, %v1382
      %v1384 = vpop.f32.mrb[0].mxu0
      %v1385 = vpop.f32.mrb[0].mxu0
      %v1386 = vadd.f32 0.0, %v1385
      %v1387 = vpop.f32.mrb[0].mxu0
      %1388 = vmatprep.mubr.bf16.mxu0 0
      %1389 = vmatmul.mubr.bf16.gmra.mrb[0].mxu0 %v1293
      %v1390 = vpop.f32.mrb[0].mxu0
      %v1391 = vadd.f32 0.0, %v1390
      %v1392 = vpop.f32.mrb[0].mxu0
      %v1393 = vpop.f32.mrb[0].mxu0
      %v1394 = vadd.f32 0.0, %v1393
      %v1395 = vpop.f32.mrb[0].mxu0
      %1396 = vmatprep.mubr.bf16.mxu0 0
      %1397 = vmatmul.mubr.bf16.gmra.mrb[0].mxu0 %v1294
      %v1398 = vpop.f32.mrb[0].mxu0
      %v1399 = vadd.f32 0.0, %v1398
      %v1400 = vpop.f32.mrb[0].mxu0
      %v1401 = vpop.f32.mrb[0].mxu0
      %v1402 = vadd.f32 0.0, %v1401
      %v1403 = vpop.f32.mrb[0].mxu0
      %1404 = vmatprep.mubr.bf16.mxu0 0
      %1405 = vmatmul.mubr.bf16.gmra.mrb[0].mxu0 %v1295
      %v1406 = vpop.f32.mrb[0].mxu0
      %v1407 = vadd.f32 0.0, %v1406
      %v1408 = vpop.f32.mrb[0].mxu0
      %v1409 = vpop.f32.mrb[0].mxu0
      %v1410 = vadd.f32 0.0, %v1409
      %v1411 = vpop.f32.mrb[0].mxu0
      %1412 = vdwg.mxu0
      %v1413 = vadd.f32 %v1131, %v1383
      %v1414 = vadd.f32 %v1132, %v1386
      %v1415 = vadd.f32 %v1133, %v1391
      %v1416 = vadd.f32 %v1134, %v1394
      %v1417 = vadd.f32 %v1135, %v1399
      %v1418 = vadd.f32 %v1136, %v1402
      %v1419 = vadd.f32 %v1137, %v1407
      %v1420 = vadd.f32 %v1138, %v1410
      %s1421 = scalar_lea.vmem %s176, 8
      %v1422 = vld [vmem:[%s1421] sm:$0xf]
      %v1423 = vld [vmem:[%s1421 + $0x8] sm:$0xf]
      %v1424 = vld [vmem:[%s1421 + $0x10] sm:$0xf]
      %v1425 = vld [vmem:[%s1421 + $0x18] sm:$0xf]
      %v1426 = vld [vmem:[%s1421 + $0x20] sm:$0xf]
      %v1427 = vld [vmem:[%s1421 + $0x28] sm:$0xf]
      %v1428 = vld [vmem:[%s1421 + $0x30] sm:$0xf]
      %v1429 = vld [vmem:[%s1421 + $0x38] sm:$0xf]
      %s1430 = scalar_lea.vmem %s1, 384
      %v1431 = vld [vmem:[%s1430] sm:$0xf]
      %v1432 = vld [vmem:[%s1430 + $0x4] sm:$0xf]
      %v1433 = vld [vmem:[%s1430 + $0x8] sm:$0xf]
      %v1434 = vld [vmem:[%s1430 + $0xc] sm:$0xf]
      %v1435 = vld [vmem:[%s1430 + $0x10] sm:$0xf]
      %v1436 = vld [vmem:[%s1430 + $0x14] sm:$0xf]
      %v1437 = vld [vmem:[%s1430 + $0x18] sm:$0xf]
      %v1438 = vld [vmem:[%s1430 + $0x1c] sm:$0xf]
      %v1439 = vld [vmem:[%s1430 + $0x20] sm:$0xf]
      %v1440 = vld [vmem:[%s1430 + $0x24] sm:$0xf]
      %v1441 = vld [vmem:[%s1430 + $0x28] sm:$0xf]
      %v1442 = vld [vmem:[%s1430 + $0x2c] sm:$0xf]
      %v1443 = vld [vmem:[%s1430 + $0x30] sm:$0xf]
      %v1444 = vld [vmem:[%s1430 + $0x34] sm:$0xf]
      %v1445 = vld [vmem:[%s1430 + $0x38] sm:$0xf]
      %v1446 = vld [vmem:[%s1430 + $0x3c] sm:$0xf]
      %v1455 = vunpack.c.l.b16 %v1422
      %v1456 = vunpack.c.l.b16 %v1423
      %v1457 = vunpack.c.l.b16 %v1424
      %v1458 = vunpack.c.l.b16 %v1425
      %v1459 = vunpack.c.l.b16 %v1426
      %v1460 = vunpack.c.l.b16 %v1427
      %v1461 = vunpack.c.l.b16 %v1428
      %v1462 = vunpack.c.l.b16 %v1429
      %v1463 = vpack.c.b16 %v1456, %v1455
      %v1464 = vpack.c.b16 %v1458, %v1457
      %v1465 = vpack.c.b16 %v1460, %v1459
      %v1466 = vpack.c.b16 %v1462, %v1461
      %v1487 = vunpack.c.l.b16 %v1431
      %v1488 = vunpack.c.l.b16 %v1432
      %v1489 = vunpack.c.l.b16 %v1433
      %v1490 = vunpack.c.l.b16 %v1434
      %v1491 = vunpack.c.l.b16 %v1435
      %v1492 = vunpack.c.l.b16 %v1436
      %v1493 = vunpack.c.l.b16 %v1437
      %v1494 = vunpack.c.l.b16 %v1438
      %v1495 = vunpack.c.l.b16 %v1439
      %v1496 = vunpack.c.l.b16 %v1440
      %v1497 = vunpack.c.l.b16 %v1441
      %v1498 = vunpack.c.l.b16 %v1442
      %v1499 = vunpack.c.l.b16 %v1443
      %v1500 = vunpack.c.l.b16 %v1444
      %v1501 = vunpack.c.l.b16 %v1445
      %v1502 = vunpack.c.l.b16 %v1446
      %v1503 = vpack.c.b16 %v1488, %v1487
      %v1504 = vpack.c.b16 %v1490, %v1489
      %v1505 = vpack.c.b16 %v1492, %v1491
      %v1506 = vpack.c.b16 %v1494, %v1493
      %v1507 = vpack.c.b16 %v1496, %v1495
      %v1508 = vpack.c.b16 %v1498, %v1497
      %v1509 = vpack.c.b16 %v1500, %v1499
      %v1510 = vpack.c.b16 %v1502, %v1501
      %1519 = vmatprep.subr.bf16.mxu0 0
      %1520 = vmatpush1.bf16.msra.mxu0 %v1503
      %1521 = vmatprep.subr.bf16.mxu0 0
      %1522 = vmatpush1.bf16.msra.mxu0 %v1504
      %1523 = vmatprep.subr.bf16.mxu0 0
      %1524 = vmatpush1.bf16.msra.mxu0 %v1505
      %1525 = vmatprep.subr.bf16.mxu0 0
      %1526 = vmatpush1.bf16.msra.mxu0 %v1506
      %1527 = vmatprep.subr.bf16.mxu0 0
      %1528 = vmatpush1.bf16.msra.mxu0 %v1507
      %1529 = vmatprep.subr.bf16.mxu0 0
      %1530 = vmatpush1.bf16.msra.mxu0 %v1508
      %1531 = vmatprep.subr.bf16.mxu0 0
      %1532 = vmatpush1.bf16.msra.mxu0 %v1509
      %1533 = vmatprep.subr.bf16.mxu0 0
      %1534 = vmatpush1.bf16.msra.mxu0 %v1510
      %1535 = vmatprep.subr.bf16.mxu0 0
      %1536 = vmatpush1.bf16.msra.mxu0 0
      %1537 = vmatprep.subr.bf16.mxu0 0
      %1538 = vmatpush1.bf16.msra.mxu0 0
      %1539 = vmatprep.subr.bf16.mxu0 0
      %1540 = vmatpush1.bf16.msra.mxu0 0
      %1541 = vmatprep.subr.bf16.mxu0 0
      %1542 = vmatpush1.bf16.msra.mxu0 0
      %1543 = vmatprep.subr.bf16.mxu0 0
      %1544 = vmatpush1.bf16.msra.mxu0 0
      %1545 = vmatprep.subr.bf16.mxu0 0
      %1546 = vmatpush1.bf16.msra.mxu0 0
      %1547 = vmatprep.subr.bf16.mxu0 0
      %1548 = vmatpush1.bf16.msra.mxu0 0
      %1549 = vmatprep.subr.bf16.mxu0 0
      %1550 = vmatpush1.bf16.msra.mxu0 0
      %1551 = vmatprep.mubr.bf16.mxu0 0
      %1552 = vmatmul.mubr.bf16.gmra.mrb[0].mxu0 %v1463
      %v1553 = vpop.f32.mrb[0].mxu0
      %v1554 = vadd.f32 0.0, %v1553
      %v1555 = vpop.f32.mrb[0].mxu0
      %v1556 = vpop.f32.mrb[0].mxu0
      %v1557 = vadd.f32 0.0, %v1556
      %v1558 = vpop.f32.mrb[0].mxu0
      %1559 = vmatprep.mubr.bf16.mxu0 0
      %1560 = vmatmul.mubr.bf16.gmra.mrb[0].mxu0 %v1464
      %v1561 = vpop.f32.mrb[0].mxu0
      %v1562 = vadd.f32 0.0, %v1561
      %v1563 = vpop.f32.mrb[0].mxu0
      %v1564 = vpop.f32.mrb[0].mxu0
      %v1565 = vadd.f32 0.0, %v1564
      %v1566 = vpop.f32.mrb[0].mxu0
      %1567 = vmatprep.mubr.bf16.mxu0 0
      %1568 = vmatmul.mubr.bf16.gmra.mrb[0].mxu0 %v1465
      %v1569 = vpop.f32.mrb[0].mxu0
      %v1570 = vadd.f32 0.0, %v1569
      %v1571 = vpop.f32.mrb[0].mxu0
      %v1572 = vpop.f32.mrb[0].mxu0
      %v1573 = vadd.f32 0.0, %v1572
      %v1574 = vpop.f32.mrb[0].mxu0
      %1575 = vmatprep.mubr.bf16.mxu0 0
      %1576 = vmatmul.mubr.bf16.gmra.mrb[0].mxu0 %v1466
      %v1577 = vpop.f32.mrb[0].mxu0
      %v1578 = vadd.f32 0.0, %v1577
      %v1579 = vpop.f32.mrb[0].mxu0
      %v1580 = vpop.f32.mrb[0].mxu0
      %v1581 = vadd.f32 0.0, %v1580
      %v1582 = vpop.f32.mrb[0].mxu0
      %1583 = vdwg.mxu0
      %v1584 = vadd.f32 %v1413, %v1554
      %v1585 = vadd.f32 %v1414, %v1557
      %v1586 = vadd.f32 %v1415, %v1562
      %v1587 = vadd.f32 %v1416, %v1565
      %v1588 = vadd.f32 %v1417, %v1570
      %v1589 = vadd.f32 %v1418, %v1573
      %v1590 = vadd.f32 %v1419, %v1578
      %v1591 = vadd.f32 %v1420, %v1581
      %s1592 = scalar_lea.vmem %s176, 80
      %v1593 = vld [vmem:[%s1592] sm:$0xf]
      %v1594 = vld [vmem:[%s1592 + $0x8] sm:$0xf]
      %v1595 = vld [vmem:[%s1592 + $0x10] sm:$0xf]
      %v1596 = vld [vmem:[%s1592 + $0x18] sm:$0xf]
      %v1597 = vld [vmem:[%s1592 + $0x20] sm:$0xf]
      %v1598 = vld [vmem:[%s1592 + $0x28] sm:$0xf]
      %v1599 = vld [vmem:[%s1592 + $0x30] sm:$0xf]
      %v1600 = vld [vmem:[%s1592 + $0x38] sm:$0xf]
      %s1601 = scalar_lea.vmem %s1, 448
      %v1602 = vld [vmem:[%s1601] sm:$0xf]
      %v1603 = vld [vmem:[%s1601 + $0x4] sm:$0xf]
      %v1604 = vld [vmem:[%s1601 + $0x8] sm:$0xf]
      %v1605 = vld [vmem:[%s1601 + $0xc] sm:$0xf]
      %v1606 = vld [vmem:[%s1601 + $0x10] sm:$0xf]
      %v1607 = vld [vmem:[%s1601 + $0x14] sm:$0xf]
      %v1608 = vld [vmem:[%s1601 + $0x18] sm:$0xf]
      %v1609 = vld [vmem:[%s1601 + $0x1c] sm:$0xf]
      %v1610 = vld [vmem:[%s1601 + $0x20] sm:$0xf]
      %v1611 = vld [vmem:[%s1601 + $0x24] sm:$0xf]
      %v1612 = vld [vmem:[%s1601 + $0x28] sm:$0xf]
      %v1613 = vld [vmem:[%s1601 + $0x2c] sm:$0xf]
      %v1614 = vld [vmem:[%s1601 + $0x30] sm:$0xf]
      %v1615 = vld [vmem:[%s1601 + $0x34] sm:$0xf]
      %v1616 = vld [vmem:[%s1601 + $0x38] sm:$0xf]
      %v1617 = vld [vmem:[%s1601 + $0x3c] sm:$0xf]
      %v1626 = vunpack.c.l.b16 %v1593
      %v1627 = vunpack.c.l.b16 %v1594
      %v1628 = vunpack.c.l.b16 %v1595
      %v1629 = vunpack.c.l.b16 %v1596
      %v1630 = vunpack.c.l.b16 %v1597
      %v1631 = vunpack.c.l.b16 %v1598
      %v1632 = vunpack.c.l.b16 %v1599
      %v1633 = vunpack.c.l.b16 %v1600
      %v1634 = vpack.c.b16 %v1627, %v1626
      %v1635 = vpack.c.b16 %v1629, %v1628
      %v1636 = vpack.c.b16 %v1631, %v1630
      %v1637 = vpack.c.b16 %v1633, %v1632
      %v1658 = vunpack.c.l.b16 %v1602
      %v1659 = vunpack.c.l.b16 %v1603
      %v1660 = vunpack.c.l.b16 %v1604
      %v1661 = vunpack.c.l.b16 %v1605
      %v1662 = vunpack.c.l.b16 %v1606
      %v1663 = vunpack.c.l.b16 %v1607
      %v1664 = vunpack.c.l.b16 %v1608
      %v1665 = vunpack.c.l.b16 %v1609
      %v1666 = vunpack.c.l.b16 %v1610
      %v1667 = vunpack.c.l.b16 %v1611
      %v1668 = vunpack.c.l.b16 %v1612
      %v1669 = vunpack.c.l.b16 %v1613
      %v1670 = vunpack.c.l.b16 %v1614
      %v1671 = vunpack.c.l.b16 %v1615
      %v1672 = vunpack.c.l.b16 %v1616
      %v1673 = vunpack.c.l.b16 %v1617
      %v1674 = vpack.c.b16 %v1659, %v1658
      %v1675 = vpack.c.b16 %v1661, %v1660
      %v1676 = vpack.c.b16 %v1663, %v1662
      %v1677 = vpack.c.b16 %v1665, %v1664
      %v1678 = vpack.c.b16 %v1667, %v1666
      %v1679 = vpack.c.b16 %v1669, %v1668
      %v1680 = vpack.c.b16 %v1671, %v1670
      %v1681 = vpack.c.b16 %v1673, %v1672
      %1690 = vmatprep.subr.bf16.mxu0 0
      %1691 = vmatpush1.bf16.msra.mxu0 %v1674
      %1692 = vmatprep.subr.bf16.mxu0 0
      %1693 = vmatpush1.bf16.msra.mxu0 %v1675
      %1694 = vmatprep.subr.bf16.mxu0 0
      %1695 = vmatpush1.bf16.msra.mxu0 %v1676
      %1696 = vmatprep.subr.bf16.mxu0 0
      %1697 = vmatpush1.bf16.msra.mxu0 %v1677
      %1698 = vmatprep.subr.bf16.mxu0 0
      %1699 = vmatpush1.bf16.msra.mxu0 %v1678
      %1700 = vmatprep.subr.bf16.mxu0 0
      %1701 = vmatpush1.bf16.msra.mxu0 %v1679
      %1702 = vmatprep.subr.bf16.mxu0 0
      %1703 = vmatpush1.bf16.msra.mxu0 %v1680
      %1704 = vmatprep.subr.bf16.mxu0 0
      %1705 = vmatpush1.bf16.msra.mxu0 %v1681
      %1706 = vmatprep.subr.bf16.mxu0 0
      %1707 = vmatpush1.bf16.msra.mxu0 0
      %1708 = vmatprep.subr.bf16.mxu0 0
      %1709 = vmatpush1.bf16.msra.mxu0 0
      %1710 = vmatprep.subr.bf16.mxu0 0
      %1711 = vmatpush1.bf16.msra.mxu0 0
      %1712 = vmatprep.subr.bf16.mxu0 0
      %1713 = vmatpush1.bf16.msra.mxu0 0
      %1714 = vmatprep.subr.bf16.mxu0 0
      %1715 = vmatpush1.bf16.msra.mxu0 0
      %1716 = vmatprep.subr.bf16.mxu0 0
      %1717 = vmatpush1.bf16.msra.mxu0 0
      %1718 = vmatprep.subr.bf16.mxu0 0
      %1719 = vmatpush1.bf16.msra.mxu0 0
      %1720 = vmatprep.subr.bf16.mxu0 0
      %1721 = vmatpush1.bf16.msra.mxu0 0
      %1722 = vmatprep.mubr.bf16.mxu0 0
      %1723 = vmatmul.mubr.bf16.gmra.mrb[0].mxu0 %v1634
      %v1724 = vpop.f32.mrb[0].mxu0
      %v1725 = vadd.f32 0.0, %v1724
      %v1726 = vpop.f32.mrb[0].mxu0
      %v1727 = vpop.f32.mrb[0].mxu0
      %v1728 = vadd.f32 0.0, %v1727
      %v1729 = vpop.f32.mrb[0].mxu0
      %1730 = vmatprep.mubr.bf16.mxu0 0
      %1731 = vmatmul.mubr.bf16.gmra.mrb[0].mxu0 %v1635
      %v1732 = vpop.f32.mrb[0].mxu0
      %v1733 = vadd.f32 0.0, %v1732
      %v1734 = vpop.f32.mrb[0].mxu0
      %v1735 = vpop.f32.mrb[0].mxu0
      %v1736 = vadd.f32 0.0, %v1735
      %v1737 = vpop.f32.mrb[0].mxu0
      %1738 = vmatprep.mubr.bf16.mxu0 0
      %1739 = vmatmul.mubr.bf16.gmra.mrb[0].mxu0 %v1636
      %v1740 = vpop.f32.mrb[0].mxu0
      %v1741 = vadd.f32 0.0, %v1740
      %v1742 = vpop.f32.mrb[0].mxu0
      %v1743 = vpop.f32.mrb[0].mxu0
      %v1744 = vadd.f32 0.0, %v1743
      %v1745 = vpop.f32.mrb[0].mxu0
      %1746 = vmatprep.mubr.bf16.mxu0 0
      %1747 = vmatmul.mubr.bf16.gmra.mrb[0].mxu0 %v1637
      %v1748 = vpop.f32.mrb[0].mxu0
      %v1749 = vadd.f32 0.0, %v1748
      %v1750 = vpop.f32.mrb[0].mxu0
      %v1751 = vpop.f32.mrb[0].mxu0
      %v1752 = vadd.f32 0.0, %v1751
      %v1753 = vpop.f32.mrb[0].mxu0
      %1754 = vdwg.mxu0
      %v1755 = vadd.f32 %v1584, %v1725
      %v1756 = vadd.f32 %v1585, %v1728
      %v1757 = vadd.f32 %v1586, %v1733
      %v1758 = vadd.f32 %v1587, %v1736
      %v1759 = vadd.f32 %v1588, %v1741
      %v1760 = vadd.f32 %v1589, %v1744
      %v1761 = vadd.f32 %v1590, %v1749
      %v1762 = vadd.f32 %v1591, %v1752
      %v1763 = vld [vmem:[%s1421] sm:$0xf]
      %v1764 = vld [vmem:[%s1421 + $0x4] sm:$0x1]
      %v1765 = vld [vmem:[%s1421 + $0x8] sm:$0xf]
      %v1766 = vld [vmem:[%s1421 + $0xc] sm:$0x1]
      %v1767 = vld [vmem:[%s1421 + $0x10] sm:$0xf]
      %v1768 = vld [vmem:[%s1421 + $0x14] sm:$0x1]
      %v1769 = vld [vmem:[%s1421 + $0x18] sm:$0xf]
      %v1770 = vld [vmem:[%s1421 + $0x1c] sm:$0x1]
      %v1771 = vld [vmem:[%s1421 + $0x20] sm:$0xf]
      %v1772 = vld [vmem:[%s1421 + $0x24] sm:$0x1]
      %v1773 = vld [vmem:[%s1421 + $0x28] sm:$0xf]
      %v1774 = vld [vmem:[%s1421 + $0x2c] sm:$0x1]
      %v1775 = vld [vmem:[%s1421 + $0x30] sm:$0xf]
      %v1776 = vld [vmem:[%s1421 + $0x34] sm:$0x1]
      %v1777 = vld [vmem:[%s1421 + $0x38] sm:$0xf]
      %v1778 = vld [vmem:[%s1421 + $0x3c] sm:$0x1]
      %v1780 = vshrl.u32 %v1763, 16
      %v1782 = vrot.slane %v1780, 4
      %v1783 = vshll.u32 %v1763, 16
      %v1785 = vrot.slane %v1783, 5
      %v1786 = vor.u32 %v1782, %v1785
      %v1787 = vrot.slane %v1786, 4
      %v1789 = vshll.u32 %v1764, 16
      %v1791 = vrot.slane %v1789, 5
      %v1792 = vsel %vm530, %v1787, %v1791
      %v1794 = vshrl.u32 %v1765, 16
      %v1796 = vrot.slane %v1794, 4
      %v1797 = vshll.u32 %v1765, 16
      %v1799 = vrot.slane %v1797, 5
      %v1800 = vor.u32 %v1796, %v1799
      %v1801 = vrot.slane %v1800, 4
      %v1803 = vshll.u32 %v1766, 16
      %v1805 = vrot.slane %v1803, 5
      %v1806 = vsel %vm530, %v1801, %v1805
      %v1808 = vshrl.u32 %v1767, 16
      %v1810 = vrot.slane %v1808, 4
      %v1811 = vshll.u32 %v1767, 16
      %v1813 = vrot.slane %v1811, 5
      %v1814 = vor.u32 %v1810, %v1813
      %v1815 = vrot.slane %v1814, 4
      %v1817 = vshll.u32 %v1768, 16
      %v1819 = vrot.slane %v1817, 5
      %v1820 = vsel %vm530, %v1815, %v1819
      %v1822 = vshrl.u32 %v1769, 16
      %v1824 = vrot.slane %v1822, 4
      %v1825 = vshll.u32 %v1769, 16
      %v1827 = vrot.slane %v1825, 5
      %v1828 = vor.u32 %v1824, %v1827
      %v1829 = vrot.slane %v1828, 4
      %v1831 = vshll.u32 %v1770, 16
      %v1833 = vrot.slane %v1831, 5
      %v1834 = vsel %vm530, %v1829, %v1833
      %v1836 = vshrl.u32 %v1771, 16
      %v1838 = vrot.slane %v1836, 4
      %v1839 = vshll.u32 %v1771, 16
      %v1841 = vrot.slane %v1839, 5
      %v1842 = vor.u32 %v1838, %v1841
      %v1843 = vrot.slane %v1842, 4
      %v1845 = vshll.u32 %v1772, 16
      %v1847 = vrot.slane %v1845, 5
      %v1848 = vsel %vm530, %v1843, %v1847
      %v1850 = vshrl.u32 %v1773, 16
      %v1852 = vrot.slane %v1850, 4
      %v1853 = vshll.u32 %v1773, 16
      %v1855 = vrot.slane %v1853, 5
      %v1856 = vor.u32 %v1852, %v1855
      %v1857 = vrot.slane %v1856, 4
      %v1859 = vshll.u32 %v1774, 16
      %v1861 = vrot.slane %v1859, 5
      %v1862 = vsel %vm530, %v1857, %v1861
      %v1864 = vshrl.u32 %v1775, 16
      %v1866 = vrot.slane %v1864, 4
      %v1867 = vshll.u32 %v1775, 16
      %v1869 = vrot.slane %v1867, 5
      %v1870 = vor.u32 %v1866, %v1869
      %v1871 = vrot.slane %v1870, 4
      %v1873 = vshll.u32 %v1776, 16
      %v1875 = vrot.slane %v1873, 5
      %v1876 = vsel %vm530, %v1871, %v1875
      %v1878 = vshrl.u32 %v1777, 16
      %v1880 = vrot.slane %v1878, 4
      %v1881 = vshll.u32 %v1777, 16
      %v1883 = vrot.slane %v1881, 5
      %v1884 = vor.u32 %v1880, %v1883
      %v1885 = vrot.slane %v1884, 4
      %v1887 = vshll.u32 %v1778, 16
      %v1889 = vrot.slane %v1887, 5
      %v1890 = vsel %vm530, %v1885, %v1889
      %s1891 = scalar_lea.vmem %s1, 512
      %v1892 = vld [vmem:[%s1891] sm:$0xf]
      %v1893 = vld [vmem:[%s1891 + $0x4] sm:$0xf]
      %v1894 = vld [vmem:[%s1891 + $0x8] sm:$0xf]
      %v1895 = vld [vmem:[%s1891 + $0xc] sm:$0xf]
      %v1896 = vld [vmem:[%s1891 + $0x10] sm:$0xf]
      %v1897 = vld [vmem:[%s1891 + $0x14] sm:$0xf]
      %v1898 = vld [vmem:[%s1891 + $0x18] sm:$0xf]
      %v1899 = vld [vmem:[%s1891 + $0x1c] sm:$0xf]
      %v1900 = vld [vmem:[%s1891 + $0x20] sm:$0xf]
      %v1901 = vld [vmem:[%s1891 + $0x24] sm:$0xf]
      %v1902 = vld [vmem:[%s1891 + $0x28] sm:$0xf]
      %v1903 = vld [vmem:[%s1891 + $0x2c] sm:$0xf]
      %v1904 = vld [vmem:[%s1891 + $0x30] sm:$0xf]
      %v1905 = vld [vmem:[%s1891 + $0x34] sm:$0xf]
      %v1906 = vld [vmem:[%s1891 + $0x38] sm:$0xf]
      %v1907 = vld [vmem:[%s1891 + $0x3c] sm:$0xf]
      %v1908 = vunpack.c.l.b16 %v1792
      %v1909 = vunpack.c.l.b16 %v1806
      %v1910 = vunpack.c.l.b16 %v1820
      %v1911 = vunpack.c.l.b16 %v1834
      %v1912 = vunpack.c.l.b16 %v1848
      %v1913 = vunpack.c.l.b16 %v1862
      %v1914 = vunpack.c.l.b16 %v1876
      %v1915 = vunpack.c.l.b16 %v1890
      %v1916 = vpack.c.b16 %v1909, %v1908
      %v1917 = vpack.c.b16 %v1911, %v1910
      %v1918 = vpack.c.b16 %v1913, %v1912
      %v1919 = vpack.c.b16 %v1915, %v1914
      %v1940 = vunpack.c.l.b16 %v1892
      %v1941 = vunpack.c.l.b16 %v1893
      %v1942 = vunpack.c.l.b16 %v1894
      %v1943 = vunpack.c.l.b16 %v1895
      %v1944 = vunpack.c.l.b16 %v1896
      %v1945 = vunpack.c.l.b16 %v1897
      %v1946 = vunpack.c.l.b16 %v1898
      %v1947 = vunpack.c.l.b16 %v1899
      %v1948 = vunpack.c.l.b16 %v1900
      %v1949 = vunpack.c.l.b16 %v1901
      %v1950 = vunpack.c.l.b16 %v1902
      %v1951 = vunpack.c.l.b16 %v1903
      %v1952 = vunpack.c.l.b16 %v1904
      %v1953 = vunpack.c.l.b16 %v1905
      %v1954 = vunpack.c.l.b16 %v1906
      %v1955 = vunpack.c.l.b16 %v1907
      %v1956 = vpack.c.b16 %v1941, %v1940
      %v1957 = vpack.c.b16 %v1943, %v1942
      %v1958 = vpack.c.b16 %v1945, %v1944
      %v1959 = vpack.c.b16 %v1947, %v1946
      %v1960 = vpack.c.b16 %v1949, %v1948
      %v1961 = vpack.c.b16 %v1951, %v1950
      %v1962 = vpack.c.b16 %v1953, %v1952
      %v1963 = vpack.c.b16 %v1955, %v1954
      %1972 = vmatprep.subr.bf16.mxu0 0
      %1973 = vmatpush1.bf16.msra.mxu0 %v1956
      %1974 = vmatprep.subr.bf16.mxu0 0
      %1975 = vmatpush1.bf16.msra.mxu0 %v1957
      %1976 = vmatprep.subr.bf16.mxu0 0
      %1977 = vmatpush1.bf16.msra.mxu0 %v1958
      %1978 = vmatprep.subr.bf16.mxu0 0
      %1979 = vmatpush1.bf16.msra.mxu0 %v1959
      %1980 = vmatprep.subr.bf16.mxu0 0
      %1981 = vmatpush1.bf16.msra.mxu0 %v1960
      %1982 = vmatprep.subr.bf16.mxu0 0
      %1983 = vmatpush1.bf16.msra.mxu0 %v1961
      %1984 = vmatprep.subr.bf16.mxu0 0
      %1985 = vmatpush1.bf16.msra.mxu0 %v1962
      %1986 = vmatprep.subr.bf16.mxu0 0
      %1987 = vmatpush1.bf16.msra.mxu0 %v1963
      %1988 = vmatprep.subr.bf16.mxu0 0
      %1989 = vmatpush1.bf16.msra.mxu0 0
      %1990 = vmatprep.subr.bf16.mxu0 0
      %1991 = vmatpush1.bf16.msra.mxu0 0
      %1992 = vmatprep.subr.bf16.mxu0 0
      %1993 = vmatpush1.bf16.msra.mxu0 0
      %1994 = vmatprep.subr.bf16.mxu0 0
      %1995 = vmatpush1.bf16.msra.mxu0 0
      %1996 = vmatprep.subr.bf16.mxu0 0
      %1997 = vmatpush1.bf16.msra.mxu0 0
      %1998 = vmatprep.subr.bf16.mxu0 0
      %1999 = vmatpush1.bf16.msra.mxu0 0
      %2000 = vmatprep.subr.bf16.mxu0 0
      %2001 = vmatpush1.bf16.msra.mxu0 0
      %2002 = vmatprep.subr.bf16.mxu0 0
      %2003 = vmatpush1.bf16.msra.mxu0 0
      %2004 = vmatprep.mubr.bf16.mxu0 0
      %2005 = vmatmul.mubr.bf16.gmra.mrb[0].mxu0 %v1916
      %v2006 = vpop.f32.mrb[0].mxu0
      %v2007 = vadd.f32 0.0, %v2006
      %v2008 = vpop.f32.mrb[0].mxu0
      %v2009 = vpop.f32.mrb[0].mxu0
      %v2010 = vadd.f32 0.0, %v2009
      %v2011 = vpop.f32.mrb[0].mxu0
      %2012 = vmatprep.mubr.bf16.mxu0 0
      %2013 = vmatmul.mubr.bf16.gmra.mrb[0].mxu0 %v1917
      %v2014 = vpop.f32.mrb[0].mxu0
      %v2015 = vadd.f32 0.0, %v2014
      %v2016 = vpop.f32.mrb[0].mxu0
      %v2017 = vpop.f32.mrb[0].mxu0
      %v2018 = vadd.f32 0.0, %v2017
      %v2019 = vpop.f32.mrb[0].mxu0
      %2020 = vmatprep.mubr.bf16.mxu0 0
      %2021 = vmatmul.mubr.bf16.gmra.mrb[0].mxu0 %v1918
      %v2022 = vpop.f32.mrb[0].mxu0
      %v2023 = vadd.f32 0.0, %v2022
      %v2024 = vpop.f32.mrb[0].mxu0
      %v2025 = vpop.f32.mrb[0].mxu0
      %v2026 = vadd.f32 0.0, %v2025
      %v2027 = vpop.f32.mrb[0].mxu0
      %2028 = vmatprep.mubr.bf16.mxu0 0
      %2029 = vmatmul.mubr.bf16.gmra.mrb[0].mxu0 %v1919
      %v2030 = vpop.f32.mrb[0].mxu0
      %v2031 = vadd.f32 0.0, %v2030
      %v2032 = vpop.f32.mrb[0].mxu0
      %v2033 = vpop.f32.mrb[0].mxu0
      %v2034 = vadd.f32 0.0, %v2033
      %v2035 = vpop.f32.mrb[0].mxu0
      %2036 = vdwg.mxu0
      %v2037 = vadd.f32 %v1755, %v2007
      %v2038 = vadd.f32 %v1756, %v2010
      %v2039 = vadd.f32 %v1757, %v2015
      %v2040 = vadd.f32 %v1758, %v2018
      %v2041 = vadd.f32 %v1759, %v2023
      %v2042 = vadd.f32 %v1760, %v2026
      %v2043 = vadd.f32 %v1761, %v2031
      %v2044 = vadd.f32 %v1762, %v2034
      %v2045 = vpack.c.bf16 %v2038, %v2037
      %v2046 = vpack.c.bf16 %v2040, %v2039
      %v2047 = vpack.c.bf16 %v2042, %v2041
      %v2048 = vpack.c.bf16 %v2044, %v2043
      %v2053 = vunpack.c.l.b16 %v2045
      %v2054 = vunpack.c.h.b16 %v2045
      %v2055 = vunpack.c.l.b16 %v2046
      %v2056 = vunpack.c.h.b16 %v2046
      %v2057 = vunpack.c.l.b16 %v2047
      %v2058 = vunpack.c.h.b16 %v2047
      %v2059 = vunpack.c.l.b16 %v2048
      %v2060 = vunpack.c.h.b16 %v2048
      %v2061 = vpack.c.b16 %v2053, %v2053
      %v2062 = vpack.c.b16 %v2054, %v2054
      %v2063 = vpack.c.b16 %v2055, %v2055
      %v2064 = vpack.c.b16 %v2056, %v2056
      %v2065 = vpack.c.b16 %v2057, %v2057
      %v2066 = vpack.c.b16 %v2058, %v2058
      %v2067 = vpack.c.b16 %v2059, %v2059
      %v2068 = vpack.c.b16 %v2060, %v2060
      %2077 = vst [vmem:[%s182] sm:$0xf] %v2061
      %2078 = vst [vmem:[%s182 + $0x4] sm:$0xf] %v2062
      %2079 = vst [vmem:[%s182 + $0x8] sm:$0xf] %v2063
      %2080 = vst [vmem:[%s182 + $0xc] sm:$0xf] %v2064
      %2081 = vst [vmem:[%s182 + $0x10] sm:$0xf] %v2065
      %2082 = vst [vmem:[%s182 + $0x14] sm:$0xf] %v2066
      %2083 = vst [vmem:[%s182 + $0x18] sm:$0xf] %v2067
      %2084 = vst [vmem:[%s182 + $0x1c] sm:$0xf] %v2068
      %v2085 = vadd.f32 %v2037, %v2038
      %v2086 = vadd.f32 %v2085, %v2039
      %v2087 = vadd.f32 %v2086, %v2040
      %v2088 = vadd.f32 %v2087, %v2041
      %v2089 = vadd.f32 %v2088, %v2042
      %v2090 = vadd.f32 %v2089, %v2043
      %v2091 = vadd.f32 %v2090, %v2044
      %v2092 = vrot.slane %v2091, 4
      %v2093 = vadd.f32 %v2091, %v2092
      %v2094 = vrot.slane %v2093, 2
      %v2095 = vadd.f32 %v2093, %v2094
      %v2096 = vrot.slane %v2095, 1
      %v2097 = vadd.f32 %v2095, %v2096
      %2098 = vst [vmem:[%s186] sm:$0x1] %v2097
      %v2099 = vmul.f32 %v2037, %v2037
      %v2100 = vmul.f32 %v2038, %v2038
      %v2101 = vmul.f32 %v2039, %v2039
      %v2102 = vmul.f32 %v2040, %v2040
      %v2103 = vmul.f32 %v2041, %v2041
      %v2104 = vmul.f32 %v2042, %v2042
      %v2105 = vmul.f32 %v2043, %v2043
      %v2106 = vmul.f32 %v2044, %v2044
      %v2107 = vadd.f32 %v2099, %v2100
      %v2108 = vadd.f32 %v2107, %v2101
      %v2109 = vadd.f32 %v2108, %v2102
      %v2110 = vadd.f32 %v2109, %v2103
      %v2111 = vadd.f32 %v2110, %v2104
      %v2112 = vadd.f32 %v2111, %v2105
      %v2113 = vadd.f32 %v2112, %v2106
      %v2114 = vrot.slane %v2113, 4
      %v2115 = vadd.f32 %v2113, %v2114
      %v2116 = vrot.slane %v2115, 2
      %v2117 = vadd.f32 %v2115, %v2116
      %v2118 = vrot.slane %v2117, 1
      %v2119 = vadd.f32 %v2117, %v2118
      %2120 = vst [vmem:[%s186 + $0x1] sm:$0x1] %v2119
      %p2121 = scmp.lt.s32.totalorder %s15, 1
      %s2122 = scalar_select %p2121, %s15, 1
      %s2123 = smul.addr %s2122, 8
      %s2124 = smul.addr %s2123, 4
      %s2125 = scalar_lea.vmem %s2, %s2124
      %p2126 = scmp.lt.s32.totalorder %s15, 1
      %s2127 = scalar_select %p2126, %s15, 1
      %s2128 = smul.addr %s2127, 2
      %s2129 = scalar_lea.vmem %s3, %s2128
      // Predicated region
      $region29: #{residual_block_forward.3} parent=27 // pred_check
        %p2130 = pneg %p80
      $region30: #{residual_block_forward.3} parent=27 // pred_check_branch
        %2132 = sbr.rel (%p2130) target = $region32
      $region31: #{residual_block_forward.3} parent=27 // pred_region
        _
      $region32: #{residual_block_forward.3} parent=27 // pred_fallthru
        _
      // Predicated region
      $region33: #{residual_block_forward.3} parent=27 // pred_check
        %p2133 = pneg %p106
      $region34: #{residual_block_forward.3} parent=27 // pred_check_branch
        %2135 = sbr.rel (%p2133) target = $region36
      $region35: #{residual_block_forward.3} parent=27 // pred_region
        _
      $region36: #{residual_block_forward.3} parent=27 // pred_fallthru
        _
    $region28: #{residual_block_forward.3} parent=5 // pred_fallthru
      _
    %p2136 = scmp.le.s32.totalorder 2, %s10
    // Predicated region
    $region37: #{residual_block_forward.3} parent=5 // pred_check
      %p2137 = pneg %p2136
    $region38: #{residual_block_forward.3} parent=5 // pred_check_branch
      %2139 = sbr.rel (%p2137) target = $region40
    $region39: #{residual_block_forward.3} parent=5 // pred_region
      %s2140 = ssub.s32 %s10, 2
      // Predicated region
      $region41: #{residual_block_forward.3} parent=39 // pred_check
        %p2141 = pneg %p86
      $region42: #{residual_block_forward.3} parent=39 // pred_check_branch
        %2143 = sbr.rel (%p2141) target = $region44
      $region43: #{residual_block_forward.3} parent=39 // pred_region
        %p2144 = scmp.lt.s32.totalorder %s16, 1
        %s2145 = scalar_select %p2144, %s16, 1
        %s2146 = smul.addr %s2145, 8
        %s2147 = smul.addr %s2146, 4
        %s2148 = scalar_lea.vmem %s2, %s2147
      $region44: #{residual_block_forward.3} parent=39 // pred_fallthru
        _
      // Predicated region
      $region45: #{residual_block_forward.3} parent=39 // pred_check
        %p2149 = pneg %p112
      $region46: #{residual_block_forward.3} parent=39 // pred_check_branch
        %2151 = sbr.rel (%p2149) target = $region48
      $region47: #{residual_block_forward.3} parent=39 // pred_region
        %p2152 = scmp.lt.s32.totalorder %s16, 1
        %s2153 = scalar_select %p2152, %s16, 1
        %s2154 = smul.addr %s2153, 2
        %s2155 = scalar_lea.vmem %s3, %s2154
      $region48: #{residual_block_forward.3} parent=39 // pred_fallthru
        _
    $region40: #{residual_block_forward.3} parent=5 // pred_fallthru
      _
  $region6: #{residual_block_forward.3} parent=0 // loop_footer
    %s14 = sadd.s32 1, %s10
  $region7: #{residual_block_forward.3} parent=0 // loop_footer_branch
    %9 = sbr.rel target = $region3
  $region8: #{residual_block_forward.3} parent=0 // loop_exit
    _

// kernel: residual_block_forward.4
$region0: #{residual_block_forward.4}
  #allocation0 [shape = 'u32[]', space=smem, size = 0x4, offset = 0x4, fixed_abs, tag = 'smem constant byte address 0x4 - core index']
  #allocation1 [shape = 'u32[144,128]{1,0:T(1,128)}', space=vmem, size = 0x12000, scoped, tag = 'internal scratch']
  #allocation2 [shape = 'f32[10,10,128]{2,1,0:T(8,128)}', space=vmem, size = 0x14000, scoped, tag = 'scratch operand']
  %s0 = inlined_call_operand.vmem [shape: bf16[2,64,128], index: 0, kind: input, shape index: {}]
  %s1 = inlined_call_operand.vmem [shape: bf16[8,9,9,128], index: 1, kind: input, shape index: {}]
  %s2 = inlined_call_operand.vmem [shape: bf16[9,128,128], index: 2, kind: input, shape index: {}]
  %s3 = inlined_call_operand.vmem [shape: bf16[128,128], index: 3, kind: input, shape index: {}]
  %s4 = inlined_call_operand.vmem [shape: f32[1,128], index: 4, kind: input, shape index: {}]
  %s5 = inlined_call_operand.vmem [shape: f32[1,128], index: 5, kind: input, shape index: {}]
  %s6 = inlined_call_operand.vmem [shape: bf16[2,64,128], index: 6, kind: output, shape index: {0}]
  %s7 = inlined_call_operand.vmem [shape: bf16[2,64,128], index: 7, kind: output, shape index: {1}]
  %s8 = inlined_call_operand.vmem [shape: f32[2,2,128], index: 8, kind: output, shape index: {2}]
  %s9 = inlined_call_operand.vmem [shape: f32[2,2,128], index: 9, kind: output, shape index: {3}]
  %10 = xla_tuple %s6, %s7, %s8, %s9
  %s11 = sld [smem:[#allocation0]]
  $region81: #{residual_block_forward.4} parent=0
    _
  %s13 = ssub.s32 1, %s11
  %s14 = scalar_select 0, %s13, %s11
  loop: start=0, step=1, limit=4
  $region2: #{residual_block_forward.4} parent=0 // loop_pre_header
    _
  $region3: #{residual_block_forward.4} parent=0 // loop_header
    %s16 = sphi 0, %s20
    %p17 = scmp.ge.s32.totalorder %s16, 4
    %s26 = sphi 0, %s28
    %s29 = sphi 0, %s26
    %s30 = sphi 0, %s29
    %s46 = sphi 0, %s30
    %s52 = sphi 0, %s54
    %s55 = sphi 0, %s52
    %s56 = sphi 0, %s55
    %s72 = sphi 0, %s56
    %s76 = sphi 0, %s76
    %s78 = sphi 0, %s76
    %s79 = sphi 0, %s78
    %s93 = sphi 0, %s79
    %s97 = sphi 0, %s97
    %s99 = sphi 0, %s97
    %s100 = sphi 0, %s99
    %s114 = sphi 0, %s100
    %s118 = sphi 0, %s118
    %s120 = sphi 0, %s118
    %s121 = sphi 0, %s120
    %s135 = sphi 0, %s121
    %s139 = sphi 0, %s139
    %s141 = sphi 0, %s139
    %s142 = sphi 0, %s141
    %s156 = sphi 0, %s142
    %s162 = sphi 0, %s164
    %s165 = sphi 0, %s162
    %s166 = sphi 0, %s165
    %s182 = sphi 0, %s166
    %s188 = sphi 0, %s190
    %s191 = sphi 0, %s188
    %s192 = sphi 0, %s191
    %s208 = sphi 0, %s192
    %s214 = sphi 0, %s216
    %s217 = sphi 0, %s214
    %s218 = sphi 0, %s217
    %s234 = sphi 0, %s218
    %s240 = sphi 0, %s242
    %s243 = sphi 0, %s240
    %s244 = sphi 0, %s243
    %s260 = sphi 0, %s244
  $region4: #{residual_block_forward.4} parent=0 // loop_header_branch
    %19 = sbr.rel (%p17) target = $region8
  $region5: #{residual_block_forward.4} parent=0 // loop_body
    %s21 = ssub.s32 %s16, 1
    %s22 = ssub.s32 %s16, 2
    %s23 = sadd.s32 %s16, 1
    %s24 = ssub.s32 %s16, %s23
    %p25 = scmp.eq.s32.totalorder %s24, 0
    %s27 = sadd.s32 %s26, 1
    %s28 = scalar_select %p25, %s26, %s27
    %p31 = pneg %p25
    %p32 = scmp.eq.s32.totalorder %s16, 1
    %p33 = por %p31, %p32
    %p34 = scmp.ne.s32.totalorder %s26, %s29
    %p35 = scmp.eq.s32.totalorder %s16, 0
    %p36 = por %p34, %p35
    %p37 = scmp.ne.s32.totalorder %s26, %s29
    %p38 = scmp.eq.s32.totalorder %s21, 1
    %p39 = por %p37, %p38
    %p40 = scmp.ne.s32.totalorder %s29, %s30
    %p41 = scmp.eq.s32.totalorder %s21, 0
    %p42 = por %p40, %p41
    %p43 = scmp.ne.s32.totalorder %s29, %s30
    %p44 = scmp.eq.s32.totalorder %s22, 1
    %p45 = por %p43, %p44
    %p47 = scmp.ne.s32.totalorder %s30, %s46
    %p48 = scmp.eq.s32.totalorder %s22, 0
    %p49 = por %p47, %p48
    %s50 = ssub.s32 %s16, %s23
    %p51 = scmp.eq.s32.totalorder %s50, 0
    %s53 = sadd.s32 %s52, 1
    %s54 = scalar_select %p51, %s52, %s53
    %p57 = pneg %p51
    %p58 = scmp.eq.s32.totalorder %s16, 1
    %p59 = por %p57, %p58
    %p60 = scmp.ne.s32.totalorder %s52, %s55
    %p61 = scmp.eq.s32.totalorder %s16, 0
    %p62 = por %p60, %p61
    %p63 = scmp.ne.s32.totalorder %s52, %s55
    %p64 = scmp.eq.s32.totalorder %s21, 1
    %p65 = por %p63, %p64
    %p66 = scmp.ne.s32.totalorder %s55, %s56
    %p67 = scmp.eq.s32.totalorder %s21, 0
    %p68 = por %p66, %p67
    %p69 = scmp.ne.s32.totalorder %s55, %s56
    %p70 = scmp.eq.s32.totalorder %s22, 1
    %p71 = por %p69, %p70
    %p73 = scmp.ne.s32.totalorder %s56, %s72
    %p74 = scmp.eq.s32.totalorder %s22, 0
    %p75 = por %p73, %p74
    %s77 = sadd.s32 %s76, 1
    %p80 = scmp.eq.s32.totalorder %s16, 1
    %p81 = scmp.ne.s32.totalorder %s76, %s78
    %p82 = scmp.eq.s32.totalorder %s16, 0
    %p83 = por %p81, %p82
    %p84 = scmp.ne.s32.totalorder %s76, %s78
    %p85 = scmp.eq.s32.totalorder %s21, 1
    %p86 = por %p84, %p85
    %p87 = scmp.ne.s32.totalorder %s78, %s79
    %p88 = scmp.eq.s32.totalorder %s21, 0
    %p89 = por %p87, %p88
    %p90 = scmp.ne.s32.totalorder %s78, %s79
    %p91 = scmp.eq.s32.totalorder %s22, 1
    %p92 = por %p90, %p91
    %p94 = scmp.ne.s32.totalorder %s79, %s93
    %p95 = scmp.eq.s32.totalorder %s22, 0
    %p96 = por %p94, %p95
    %s98 = sadd.s32 %s97, 1
    %p101 = scmp.eq.s32.totalorder %s16, 1
    %p102 = scmp.ne.s32.totalorder %s97, %s99
    %p103 = scmp.eq.s32.totalorder %s16, 0
    %p104 = por %p102, %p103
    %p105 = scmp.ne.s32.totalorder %s97, %s99
    %p106 = scmp.eq.s32.totalorder %s21, 1
    %p107 = por %p105, %p106
    %p108 = scmp.ne.s32.totalorder %s99, %s100
    %p109 = scmp.eq.s32.totalorder %s21, 0
    %p110 = por %p108, %p109
    %p111 = scmp.ne.s32.totalorder %s99, %s100
    %p112 = scmp.eq.s32.totalorder %s22, 1
    %p113 = por %p111, %p112
    %p115 = scmp.ne.s32.totalorder %s100, %s114
    %p116 = scmp.eq.s32.totalorder %s22, 0
    %p117 = por %p115, %p116
    %s119 = sadd.s32 %s118, 1
    %p122 = scmp.eq.s32.totalorder %s16, 1
    %p123 = scmp.ne.s32.totalorder %s118, %s120
    %p124 = scmp.eq.s32.totalorder %s16, 0
    %p125 = por %p123, %p124
    %p126 = scmp.ne.s32.totalorder %s118, %s120
    %p127 = scmp.eq.s32.totalorder %s21, 1
    %p128 = por %p126, %p127
    %p129 = scmp.ne.s32.totalorder %s120, %s121
    %p130 = scmp.eq.s32.totalorder %s21, 0
    %p131 = por %p129, %p130
    %p132 = scmp.ne.s32.totalorder %s120, %s121
    %p133 = scmp.eq.s32.totalorder %s22, 1
    %p134 = por %p132, %p133
    %p136 = scmp.ne.s32.totalorder %s121, %s135
    %p137 = scmp.eq.s32.totalorder %s22, 0
    %p138 = por %p136, %p137
    %s140 = sadd.s32 %s139, 1
    %p143 = scmp.eq.s32.totalorder %s16, 1
    %p144 = scmp.ne.s32.totalorder %s139, %s141
    %p145 = scmp.eq.s32.totalorder %s16, 0
    %p146 = por %p144, %p145
    %p147 = scmp.ne.s32.totalorder %s139, %s141
    %p148 = scmp.eq.s32.totalorder %s21, 1
    %p149 = por %p147, %p148
    %p150 = scmp.ne.s32.totalorder %s141, %s142
    %p151 = scmp.eq.s32.totalorder %s21, 0
    %p152 = por %p150, %p151
    %p153 = scmp.ne.s32.totalorder %s141, %s142
    %p154 = scmp.eq.s32.totalorder %s22, 1
    %p155 = por %p153, %p154
    %p157 = scmp.ne.s32.totalorder %s142, %s156
    %p158 = scmp.eq.s32.totalorder %s22, 0
    %p159 = por %p157, %p158
    %s160 = ssub.s32 %s16, %s23
    %p161 = scmp.eq.s32.totalorder %s160, 0
    %s163 = sadd.s32 %s162, 1
    %s164 = scalar_select %p161, %s162, %s163
    %p167 = pneg %p161
    %p168 = scmp.eq.s32.totalorder %s16, 1
    %p169 = por %p167, %p168
    %p170 = scmp.ne.s32.totalorder %s162, %s165
    %p171 = scmp.eq.s32.totalorder %s16, 0
    %p172 = por %p170, %p171
    %p173 = scmp.ne.s32.totalorder %s162, %s165
    %p174 = scmp.eq.s32.totalorder %s21, 1
    %p175 = por %p173, %p174
    %p176 = scmp.ne.s32.totalorder %s165, %s166
    %p177 = scmp.eq.s32.totalorder %s21, 0
    %p178 = por %p176, %p177
    %p179 = scmp.ne.s32.totalorder %s165, %s166
    %p180 = scmp.eq.s32.totalorder %s22, 1
    %p181 = por %p179, %p180
    %p183 = scmp.ne.s32.totalorder %s166, %s182
    %p184 = scmp.eq.s32.totalorder %s22, 0
    %p185 = por %p183, %p184
    %s186 = ssub.s32 %s16, %s23
    %p187 = scmp.eq.s32.totalorder %s186, 0
    %s189 = sadd.s32 %s188, 1
    %s190 = scalar_select %p187, %s188, %s189
    %p193 = pneg %p187
    %p194 = scmp.eq.s32.totalorder %s16, 1
    %p195 = por %p193, %p194
    %p196 = scmp.ne.s32.totalorder %s188, %s191
    %p197 = scmp.eq.s32.totalorder %s16, 0
    %p198 = por %p196, %p197
    %p199 = scmp.ne.s32.totalorder %s188, %s191
    %p200 = scmp.eq.s32.totalorder %s21, 1
    %p201 = por %p199, %p200
    %p202 = scmp.ne.s32.totalorder %s191, %s192
    %p203 = scmp.eq.s32.totalorder %s21, 0
    %p204 = por %p202, %p203
    %p205 = scmp.ne.s32.totalorder %s191, %s192
    %p206 = scmp.eq.s32.totalorder %s22, 1
    %p207 = por %p205, %p206
    %p209 = scmp.ne.s32.totalorder %s192, %s208
    %p210 = scmp.eq.s32.totalorder %s22, 0
    %p211 = por %p209, %p210
    %s212 = ssub.s32 %s16, %s23
    %p213 = scmp.eq.s32.totalorder %s212, 0
    %s215 = sadd.s32 %s214, 1
    %s216 = scalar_select %p213, %s214, %s215
    %p219 = pneg %p213
    %p220 = scmp.eq.s32.totalorder %s16, 1
    %p221 = por %p219, %p220
    %p222 = scmp.ne.s32.totalorder %s214, %s217
    %p223 = scmp.eq.s32.totalorder %s16, 0
    %p224 = por %p222, %p223
    %p225 = scmp.ne.s32.totalorder %s214, %s217
    %p226 = scmp.eq.s32.totalorder %s21, 1
    %p227 = por %p225, %p226
    %p228 = scmp.ne.s32.totalorder %s217, %s218
    %p229 = scmp.eq.s32.totalorder %s21, 0
    %p230 = por %p228, %p229
    %p231 = scmp.ne.s32.totalorder %s217, %s218
    %p232 = scmp.eq.s32.totalorder %s22, 1
    %p233 = por %p231, %p232
    %p235 = scmp.ne.s32.totalorder %s218, %s234
    %p236 = scmp.eq.s32.totalorder %s22, 0
    %p237 = por %p235, %p236
    %s238 = ssub.s32 %s16, %s23
    %p239 = scmp.eq.s32.totalorder %s238, 0
    %s241 = sadd.s32 %s240, 1
    %s242 = scalar_select %p239, %s240, %s241
    %p245 = pneg %p239
    %p246 = scmp.eq.s32.totalorder %s16, 1
    %p247 = por %p245, %p246
    %p248 = scmp.ne.s32.totalorder %s240, %s243
    %p249 = scmp.eq.s32.totalorder %s16, 0
    %p250 = por %p248, %p249
    %p251 = scmp.ne.s32.totalorder %s240, %s243
    %p252 = scmp.eq.s32.totalorder %s21, 1
    %p253 = por %p251, %p252
    %p254 = scmp.ne.s32.totalorder %s243, %s244
    %p255 = scmp.eq.s32.totalorder %s21, 0
    %p256 = por %p254, %p255
    %p257 = scmp.ne.s32.totalorder %s243, %s244
    %p258 = scmp.eq.s32.totalorder %s22, 1
    %p259 = por %p257, %p258
    %p261 = scmp.ne.s32.totalorder %s244, %s260
    %p262 = scmp.eq.s32.totalorder %s22, 0
    %p263 = por %p261, %p262
    %p264 = scmp.le.s32.totalorder 1, %s16
    %p265 = scmp.lt.s32.totalorder %s16, 3
    %p266 = pnand %p264, %p265
    %p267 = pneg %p266
    // Predicated region
    $region9: #{residual_block_forward.4} parent=5 // pred_check
      _
    $region10: #{residual_block_forward.4} parent=5 // pred_check_branch
      %269 = sbr.rel (%p266) target = $region12
    $region11: #{residual_block_forward.4} parent=5 // pred_region
      %s270 = ssub.s32 %s16, 1
      // Predicated region
      $region13: #{residual_block_forward.4} parent=11 // pred_check
        %p271 = pneg %p89
      $region14: #{residual_block_forward.4} parent=11 // pred_check_branch
        %273 = sbr.rel (%p271) target = $region16
      $region15: #{residual_block_forward.4} parent=11 // pred_region
        _
      $region16: #{residual_block_forward.4} parent=11 // pred_fallthru
        _
      // Predicated region
      $region17: #{residual_block_forward.4} parent=11 // pred_check
        %p274 = pneg %p110
      $region18: #{residual_block_forward.4} parent=11 // pred_check_branch
        %276 = sbr.rel (%p274) target = $region20
      $region19: #{residual_block_forward.4} parent=11 // pred_region
        _
      $region20: #{residual_block_forward.4} parent=11 // pred_fallthru
        _
      // Predicated region
      $region21: #{residual_block_forward.4} parent=11 // pred_check
        %p277 = pneg %p131
      $region22: #{residual_block_forward.4} parent=11 // pred_check_branch
        %279 = sbr.rel (%p277) target = $region24
      $region23: #{residual_block_forward.4} parent=11 // pred_region
        _
      $region24: #{residual_block_forward.4} parent=11 // pred_fallthru
        _
      // Predicated region
      $region25: #{residual_block_forward.4} parent=11 // pred_check
        %p280 = pneg %p152
      $region26: #{residual_block_forward.4} parent=11 // pred_check_branch
        %282 = sbr.rel (%p280) target = $region28
      $region27: #{residual_block_forward.4} parent=11 // pred_region
        _
      $region28: #{residual_block_forward.4} parent=11 // pred_fallthru
        _
    $region12: #{residual_block_forward.4} parent=5 // pred_fallthru
      _
    %p283 = scmp.lt.s32.totalorder %s16, 2
    // Predicated region
    $region29: #{residual_block_forward.4} parent=5 // pred_check
      %p284 = pneg %p283
    $region30: #{residual_block_forward.4} parent=5 // pred_check_branch
      %286 = sbr.rel (%p284) target = $region32
    $region31: #{residual_block_forward.4} parent=5 // pred_region
      // Predicated region
      $region33: #{residual_block_forward.4} parent=31 // pred_check
        %p287 = pneg %p36
      $region34: #{residual_block_forward.4} parent=31 // pred_check_branch
        %289 = sbr.rel (%p287) target = $region36
      $region35: #{residual_block_forward.4} parent=31 // pred_region
        %p290 = scmp.lt.s32.totalorder %s16, 1
        %s291 = scalar_select %p290, %s16, 1
        %s292 = smul.addr %s291, 8
        %s293 = smul.addr %s292, 4
        %s294 = scalar_lea.vmem %s0, %s293
      $region36: #{residual_block_forward.4} parent=31 // pred_fallthru
        _
      // Predicated region
      $region37: #{residual_block_forward.4} parent=31 // pred_check
        %p295 = pneg %p62
      $region38: #{residual_block_forward.4} parent=31 // pred_check_branch
        %297 = sbr.rel (%p295) target = $region40
      $region39: #{residual_block_forward.4} parent=31 // pred_region
        %s298 = smul.u32 4, %s16
        %p299 = scmp.lt.s32.totalorder %s298, 7
        %s300 = scalar_select %p299, %s298, 7
        %s301 = smul.addr %s300, 18
        %s302 = smul.addr %s301, 4
        %s303 = scalar_lea.vmem %s1, %s302
        %s304 = smul.u32 4, %s16
      $region40: #{residual_block_forward.4} parent=31 // pred_fallthru
        _
    $region32: #{residual_block_forward.4} parent=5 // pred_fallthru
      _
    %p305 = scmp.le.s32.totalorder 1, %s16
    %p306 = scmp.lt.s32.totalorder %s16, 3
    %p307 = pnand %p305, %p306
    %p308 = pneg %p307
    // Predicated region
    $region41: #{residual_block_forward.4} parent=5 // pred_check
      _
    $region42: #{residual_block_forward.4} parent=5 // pred_check_branch
      %310 = sbr.rel (%p307) target = $region44
    $region43: #{residual_block_forward.4} parent=5 // pred_region
      %s311 = ssub.s32 %s16, 1
      %p312 = scmp.lt.s32.totalorder %s21, 1
      %s313 = scalar_select %p312, %s21, 1
      %s314 = smul.addr %s313, 8
      %s315 = smul.addr %s314, 4
      %s316 = scalar_lea.vmem %s0, %s315
      %p317 = pneg %p42
      %p318 = pneg %p39
      %s319 = smul.u32 4, %s21
      %p320 = scmp.lt.s32.totalorder %s319, 7
      %s321 = scalar_select %p320, %s319, 7
      %s322 = smul.addr %s321, 18
      %s323 = smul.addr %s322, 4
      %s324 = scalar_lea.vmem %s1, %s323
      %p325 = pneg %p68
      %p326 = pneg %p65
      %p327 = pneg %p89
      %p328 = pneg %p86
      %p329 = pneg %p110
      %p330 = pneg %p107
      %p331 = pneg %p131
      %p332 = pneg %p128
      %p333 = pneg %p152
      %p334 = pneg %p149
      %p335 = pneg %p178
      %p336 = pneg %p175
      %p337 = scmp.lt.s32.totalorder %s21, 1
      %s338 = scalar_select %p337, %s21, 1
      %s339 = smul.addr %s338, 8
      %s340 = smul.addr %s339, 4
      %s341 = scalar_lea.vmem %s6, %s340
      %p342 = pneg %p204
      %p343 = pneg %p201
      %p344 = scmp.lt.s32.totalorder %s21, 1
      %s345 = scalar_select %p344, %s21, 1
      %s346 = smul.addr %s345, 8
      %s347 = smul.addr %s346, 4
      %s348 = scalar_lea.vmem %s7, %s347
      %p349 = pneg %p230
      %p350 = pneg %p227
      %p351 = scmp.lt.s32.totalorder %s21, 1
      %s352 = scalar_select %p351, %s21, 1
      %s353 = smul.addr %s352, 2
      %s354 = scalar_lea.vmem %s8, %s353
      %p355 = pneg %p256
      %p356 = pneg %p253
      %p357 = scmp.lt.s32.totalorder %s21, 1
      %s358 = scalar_select %p357, %s21, 1
      %s359 = smul.addr %s358, 2
      %s360 = scalar_lea.vmem %s9, %s359
      %p361 = scmp.lt.s32.totalorder %s21, 1
      %s362 = scalar_select %p361, %s21, 1
      %s363 = smul.addr %s362, 8
      %s364 = smul.addr %s363, 4
      %s365 = scalar_lea.vmem %s0, %s364
      %s366 = smul.u32 4, %s21
      %p367 = scmp.lt.s32.totalorder %s366, 7
      %s368 = scalar_select %p367, %s366, 7
      %s369 = smul.addr %s368, 18
      %s370 = smul.addr %s369, 4
      %s371 = scalar_lea.vmem %s1, %s370
      %s372 = smul.u32 4, %s21
      %p373 = scmp.lt.s32.totalorder %s21, 1
      %s374 = scalar_select %p373, %s21, 1
      %s375 = smul.addr %s374, 8
      %s376 = smul.addr %s375, 4
      %s377 = scalar_lea.vmem %s6, %s376
      %p378 = scmp.lt.s32.totalorder %s21, 1
      %s379 = scalar_select %p378, %s21, 1
      %s380 = smul.addr %s379, 8
      %s381 = smul.addr %s380, 4
      %s382 = scalar_lea.vmem %s7, %s381
      %p383 = scmp.lt.s32.totalorder %s21, 1
      %s384 = scalar_select %p383, %s21, 1
      %s385 = smul.addr %s384, 2
      %s386 = scalar_lea.vmem %s8, %s385
      %p387 = scmp.lt.s32.totalorder %s21, 1
      %s388 = scalar_select %p387, %s21, 1
      %s389 = smul.addr %s388, 2
      %s390 = scalar_lea.vmem %s9, %s389
      %v392 = vld [vmem:[%s365] sm:$0xf]
      %v393 = vld [vmem:[%s365 + $0x4] sm:$0xf]
      %v394 = vld [vmem:[%s365 + $0x8] sm:$0xf]
      %v395 = vld [vmem:[%s365 + $0xc] sm:$0xf]
      %v396 = vld [vmem:[%s365 + $0x10] sm:$0xf]
      %v397 = vld [vmem:[%s365 + $0x14] sm:$0xf]
      %v398 = vld [vmem:[%s365 + $0x18] sm:$0xf]
      %v399 = vld [vmem:[%s365 + $0x1c] sm:$0xf]
      %v400 = vunpack.c.l.bf16 %v392
      %v401 = vunpack.c.l.bf16 %v393
      %v402 = vunpack.c.l.bf16 %v394
      %v403 = vunpack.c.l.bf16 %v395
      %v404 = vunpack.c.l.bf16 %v396
      %v405 = vunpack.c.l.bf16 %v397
      %v406 = vunpack.c.l.bf16 %v398
      %v407 = vunpack.c.l.bf16 %v399
      %v408 = vld [vmem:[%s4] sm:$0x1]
      %v410 = vlaneseq
      %v411 = vshrl.u32 %v410, 7
      %v412 = vsub.s32 0, %v411
      %v413 = vrot.slane %v408, %v412
      %v415 = vmul.f32 %v400, %v413
      %v416 = vmul.f32 %v401, %v413
      %v417 = vmul.f32 %v402, %v413
      %v418 = vmul.f32 %v403, %v413
      %v419 = vmul.f32 %v404, %v413
      %v420 = vmul.f32 %v405, %v413
      %v421 = vmul.f32 %v406, %v413
      %v422 = vmul.f32 %v407, %v413
      %v423 = vld [vmem:[%s5] sm:$0x1]
      %v425 = vlaneseq
      %v426 = vshrl.u32 %v425, 7
      %v427 = vsub.s32 0, %v426
      %v428 = vrot.slane %v423, %v427
      %v430 = vadd.f32 %v415, %v428
      %v431 = vadd.f32 %v416, %v428
      %v432 = vadd.f32 %v417, %v428
      %v433 = vadd.f32 %v418, %v428
      %v434 = vadd.f32 %v419, %v428
      %v435 = vadd.f32 %v420, %v428
      %v436 = vadd.f32 %v421, %v428
      %v437 = vadd.f32 %v422, %v428
      %v438 = vmax.f32 %v430, 0.0
      %v439 = vmax.f32 %v431, 0.0
      %v440 = vmax.f32 %v432, 0.0
      %v441 = vmax.f32 %v433, 0.0
      %v442 = vmax.f32 %v434, 0.0
      %v443 = vmax.f32 %v435, 0.0
      %v444 = vmax.f32 %v436, 0.0
      %v445 = vmax.f32 %v437, 0.0
      %446 = vst [vmem:[#allocation2] sm:$0xff] 0.0
      %447 = vst [vmem:[#allocation2 + $0x8] sm:$0x3] 0.0
      %s448 = scalar_lea.vmem [#allocation2], 144
      %449 = vst [vmem:[%s448] sm:$0xff] 0.0
      %450 = vst [vmem:[%s448 + $0x8] sm:$0x3] 0.0
      %451 = vst [vmem:[#allocation2] sm:$0x1] 0.0
      %452 = vst [vmem:[#allocation2 + $0x10] sm:$0x1] 0.0
      %453 = vst [vmem:[#allocation2 + $0x20] sm:$0x1] 0.0
      %454 = vst [vmem:[#allocation2 + $0x30] sm:$0x1] 0.0
      %455 = vst [vmem:[#allocation2 + $0x40] sm:$0x1] 0.0
      %456 = vst [vmem:[#allocation2 + $0x50] sm:$0x1] 0.0
      %457 = vst [vmem:[#allocation2 + $0x60] sm:$0x1] 0.0
      %458 = vst [vmem:[#allocation2 + $0x70] sm:$0x1] 0.0
      %459 = vst [vmem:[#allocation2 + $0x80] sm:$0x1] 0.0
      %460 = vst [vmem:[#allocation2 + $0x90] sm:$0x1] 0.0
      %461 = vst [vmem:[#allocation2 + $0x9] sm:$0x1] 0.0
      %462 = vst [vmem:[#allocation2 + $0x19] sm:$0x1] 0.0
      %463 = vst [vmem:[#allocation2 + $0x29] sm:$0x1] 0.0
      %464 = vst [vmem:[#allocation2 + $0x39] sm:$0x1] 0.0
      %465 = vst [vmem:[#allocation2 + $0x49] sm:$0x1] 0.0
      %466 = vst [vmem:[#allocation2 + $0x59] sm:$0x1] 0.0
      %467 = vst [vmem:[#allocation2 + $0x69] sm:$0x1] 0.0
      %468 = vst [vmem:[#allocation2 + $0x79] sm:$0x1] 0.0
      %469 = vst [vmem:[#allocation2 + $0x89] sm:$0x1] 0.0
      %470 = vst [vmem:[#allocation2 + $0x99] sm:$0x1] 0.0
      %s471 = scalar_lea.vmem [#allocation2], 16
      %472 = vst [vmem:[%s471 + $0x1] sm:$0xff] %v438
      %473 = vst [vmem:[%s471 + $0x11] sm:$0xff] %v439
      %474 = vst [vmem:[%s471 + $0x21] sm:$0xff] %v440
      %475 = vst [vmem:[%s471 + $0x31] sm:$0xff] %v441
      %476 = vst [vmem:[%s471 + $0x41] sm:$0xff] %v442
      %477 = vst [vmem:[%s471 + $0x51] sm:$0xff] %v443
      %478 = vst [vmem:[%s471 + $0x61] sm:$0xff] %v444
      %479 = vst [vmem:[%s471 + $0x71] sm:$0xff] %v445
      %v480 = vld [vmem:[#allocation2] sm:$0xff]
      %v481 = vld [vmem:[#allocation2 + $0x10] sm:$0xff]
      %v482 = vld [vmem:[#allocation2 + $0x20] sm:$0xff]
      %v483 = vld [vmem:[#allocation2 + $0x30] sm:$0xff]
      %v484 = vld [vmem:[#allocation2 + $0x40] sm:$0xff]
      %v485 = vld [vmem:[#allocation2 + $0x50] sm:$0xff]
      %v486 = vld [vmem:[#allocation2 + $0x60] sm:$0xff]
      %v487 = vld [vmem:[#allocation2 + $0x70] sm:$0xff]
      %v488 = vpack.c.bf16 %v481, %v480
      %v489 = vpack.c.bf16 %v483, %v482
      %v490 = vpack.c.bf16 %v485, %v484
      %v491 = vpack.c.bf16 %v487, %v486
      %v492 = vld [vmem:[%s2] sm:$0xf]
      %v493 = vld [vmem:[%s2 + $0x4] sm:$0xf]
      %v494 = vld [vmem:[%s2 + $0x8] sm:$0xf]
      %v495 = vld [vmem:[%s2 + $0xc] sm:$0xf]
      %v496 = vld [vmem:[%s2 + $0x10] sm:$0xf]
      %v497 = vld [vmem:[%s2 + $0x14] sm:$0xf]
      %v498 = vld [vmem:[%s2 + $0x18] sm:$0xf]
      %v499 = vld [vmem:[%s2 + $0x1c] sm:$0xf]
      %v500 = vld [vmem:[%s2 + $0x20] sm:$0xf]
      %v501 = vld [vmem:[%s2 + $0x24] sm:$0xf]
      %v502 = vld [vmem:[%s2 + $0x28] sm:$0xf]
      %v503 = vld [vmem:[%s2 + $0x2c] sm:$0xf]
      %v504 = vld [vmem:[%s2 + $0x30] sm:$0xf]
      %v505 = vld [vmem:[%s2 + $0x34] sm:$0xf]
      %v506 = vld [vmem:[%s2 + $0x38] sm:$0xf]
      %v507 = vld [vmem:[%s2 + $0x3c] sm:$0xf]
      %v508 = vld [vmem:[#allocation2 + $0x1] sm:$0xff]
      %v509 = vld [vmem:[#allocation2 + $0x11] sm:$0xff]
      %v510 = vld [vmem:[#allocation2 + $0x21] sm:$0xff]
      %v511 = vld [vmem:[#allocation2 + $0x31] sm:$0xff]
      %v512 = vld [vmem:[#allocation2 + $0x41] sm:$0xff]
      %v513 = vld [vmem:[#allocation2 + $0x51] sm:$0xff]
      %v514 = vld [vmem:[#allocation2 + $0x61] sm:$0xff]
      %v515 = vld [vmem:[#allocation2 + $0x71] sm:$0xff]
      %v516 = vpack.c.bf16 %v509, %v508
      %v517 = vpack.c.bf16 %v511, %v510
      %v518 = vpack.c.bf16 %v513, %v512
      %v519 = vpack.c.bf16 %v515, %v514
      %s520 = scalar_lea.vmem %s2, 64
      %v521 = vld [vmem:[%s520] sm:$0xf]
      %v522 = vld [vmem:[%s520 + $0x4] sm:$0xf]
      %v523 = vld [vmem:[%s520 + $0x8] sm:$0xf]
      %v524 = vld [vmem:[%s520 + $0xc] sm:$0xf]
      %v525 = vld [vmem:[%s520 + $0x10] sm:$0xf]
      %v526 = vld [vmem:[%s520 + $0x14] sm:$0xf]
      %v527 = vld [vmem:[%s520 + $0x18] sm:$0xf]
      %v528 = vld [vmem:[%s520 + $0x1c] sm:$0xf]
      %v529 = vld [vmem:[%s520 + $0x20] sm:$0xf]
      %v530 = vld [vmem:[%s520 + $0x24] sm:$0xf]
      %v531 = vld [vmem:[%s520 + $0x28] sm:$0xf]
      %v532 = vld [vmem:[%s520 + $0x2c] sm:$0xf]
      %v533 = vld [vmem:[%s520 + $0x30] sm:$0xf]
      %v534 = vld [vmem:[%s520 + $0x34] sm:$0xf]
      %v535 = vld [vmem:[%s520 + $0x38] sm:$0xf]
      %v536 = vld [vmem:[%s520 + $0x3c] sm:$0xf]
      %v553 = vunpack.c.l.b16 %v521
      %v554 = vunpack.c.l.b16 %v522
      %v555 = vunpack.c.l.b16 %v523
      %v556 = vunpack.c.l.b16 %v524
      %v557 = vunpack.c.l.b16 %v525
      %v558 = vunpack.c.l.b16 %v526
      %v559 = vunpack.c.l.b16 %v527
      %v560 = vunpack.c.l.b16 %v528
      %v561 = vunpack.c.l.b16 %v529
      %v562 = vunpack.c.l.b16 %v530
      %v563 = vunpack.c.l.b16 %v531
      %v564 = vunpack.c.l.b16 %v532
      %v565 = vunpack.c.l.b16 %v533
      %v566 = vunpack.c.l.b16 %v534
      %v567 = vunpack.c.l.b16 %v535
      %v568 = vunpack.c.l.b16 %v536
      %v569 = vpack.c.b16 %v554, %v553
      %v570 = vpack.c.b16 %v556, %v555
      %v571 = vpack.c.b16 %v558, %v557
      %v572 = vpack.c.b16 %v560, %v559
      %v573 = vpack.c.b16 %v562, %v561
      %v574 = vpack.c.b16 %v564, %v563
      %v575 = vpack.c.b16 %v566, %v565
      %v576 = vpack.c.b16 %v568, %v567
      %585 = vmatprep.subr.bf16.mxu0 0
      %586 = vmatpush1.bf16.msra.mxu0 %v569
      %587 = vmatprep.subr.bf16.mxu0 0
      %588 = vmatpush1.bf16.msra.mxu0 %v570
      %589 = vmatprep.subr.bf16.mxu0 0
      %590 = vmatpush1.bf16.msra.mxu0 %v571
      %591 = vmatprep.subr.bf16.mxu0 0
      %592 = vmatpush1.bf16.msra.mxu0 %v572
      %593 = vmatprep.subr.bf16.mxu0 0
      %594 = vmatpush1.bf16.msra.mxu0 %v573
      %595 = vmatprep.subr.bf16.mxu0 0
      %596 = vmatpush1.bf16.msra.mxu0 %v574
      %597 = vmatprep.subr.bf16.mxu0 0
      %598 = vmatpush1.bf16.msra.mxu0 %v575
      %599 = vmatprep.subr.bf16.mxu0 0
      %600 = vmatpush1.bf16.msra.mxu0 %v576
      %601 = vmatprep.subr.bf16.mxu0 0
      %602 = vmatpush1.bf16.msra.mxu0 0
      %603 = vmatprep.subr.bf16.mxu0 0
      %604 = vmatpush1.bf16.msra.mxu0 0
      %605 = vmatprep.subr.bf16.mxu0 0
      %606 = vmatpush1.bf16.msra.mxu0 0
      %607 = vmatprep.subr.bf16.mxu0 0
      %608 = vmatpush1.bf16.msra.mxu0 0
      %609 = vmatprep.subr.bf16.mxu0 0
      %610 = vmatpush1.bf16.msra.mxu0 0
      %611 = vmatprep.subr.bf16.mxu0 0
      %612 = vmatpush1.bf16.msra.mxu0 0
      %613 = vmatprep.subr.bf16.mxu0 0
      %614 = vmatpush1.bf16.msra.mxu0 0
      %615 = vmatprep.subr.bf16.mxu0 0
      %616 = vmatpush1.bf16.msra.mxu0 0
      %617 = vmatprep.mubr.bf16.mxu0 0
      %618 = vmatmul.mubr.bf16.gmra.mrb[0].mxu0 %v516
      %v619 = vpop.f32.mrb[0].mxu0
      %v620 = vadd.f32 0.0, %v619
      %v621 = vpop.f32.mrb[0].mxu0
      %v622 = vpop.f32.mrb[0].mxu0
      %v623 = vadd.f32 0.0, %v622
      %v624 = vpop.f32.mrb[0].mxu0
      %625 = vmatprep.mubr.bf16.mxu0 0
      %626 = vmatmul.mubr.bf16.gmra.mrb[0].mxu0 %v517
      %v627 = vpop.f32.mrb[0].mxu0
      %v628 = vadd.f32 0.0, %v627
      %v629 = vpop.f32.mrb[0].mxu0
      %v630 = vpop.f32.mrb[0].mxu0
      %v631 = vadd.f32 0.0, %v630
      %v632 = vpop.f32.mrb[0].mxu0
      %633 = vmatprep.mubr.bf16.mxu0 0
      %634 = vmatmul.mubr.bf16.gmra.mrb[0].mxu0 %v518
      %v635 = vpop.f32.mrb[0].mxu0
      %v636 = vadd.f32 0.0, %v635
      %v637 = vpop.f32.mrb[0].mxu0
      %v638 = vpop.f32.mrb[0].mxu0
      %v639 = vadd.f32 0.0, %v638
      %v640 = vpop.f32.mrb[0].mxu0
      %641 = vmatprep.mubr.bf16.mxu0 0
      %642 = vmatmul.mubr.bf16.gmra.mrb[0].mxu0 %v519
      %v643 = vpop.f32.mrb[0].mxu0
      %v644 = vadd.f32 0.0, %v643
      %v645 = vpop.f32.mrb[0].mxu0
      %v646 = vpop.f32.mrb[0].mxu0
      %v647 = vadd.f32 0.0, %v646
      %v648 = vpop.f32.mrb[0].mxu0
      %649 = vdwg.mxu0
      %v666 = vunpack.c.l.b16 %v492
      %v667 = vunpack.c.l.b16 %v493
      %v668 = vunpack.c.l.b16 %v494
      %v669 = vunpack.c.l.b16 %v495
      %v670 = vunpack.c.l.b16 %v496
      %v671 = vunpack.c.l.b16 %v497
      %v672 = vunpack.c.l.b16 %v498
      %v673 = vunpack.c.l.b16 %v499
      %v674 = vunpack.c.l.b16 %v500
      %v675 = vunpack.c.l.b16 %v501
      %v676 = vunpack.c.l.b16 %v502
      %v677 = vunpack.c.l.b16 %v503
      %v678 = vunpack.c.l.b16 %v504
      %v679 = vunpack.c.l.b16 %v505
      %v680 = vunpack.c.l.b16 %v506
      %v681 = vunpack.c.l.b16 %v507
      %v682 = vpack.c.b16 %v667, %v666
      %v683 = vpack.c.b16 %v669, %v668
      %v684 = vpack.c.b16 %v671, %v670
      %v685 = vpack.c.b16 %v673, %v672
      %v686 = vpack.c.b16 %v675, %v674
      %v687 = vpack.c.b16 %v677, %v676
      %v688 = vpack.c.b16 %v679, %v678
      %v689 = vpack.c.b16 %v681, %v680
      %698 = vmatprep.subr.bf16.mxu0 0
      %699 = vmatpush1.bf16.msra.mxu0 %v682
      %700 = vmatprep.subr.bf16.mxu0 0
      %701 = vmatpush1.bf16.msra.mxu0 %v683
      %702 = vmatprep.subr.bf16.mxu0 0
      %703 = vmatpush1.bf16.msra.mxu0 %v684
      %704 = vmatprep.subr.bf16.mxu0 0
      %705 = vmatpush1.bf16.msra.mxu0 %v685
      %706 = vmatprep.subr.bf16.mxu0 0
      %707 = vmatpush1.bf16.msra.mxu0 %v686
      %708 = vmatprep.subr.bf16.mxu0 0
      %709 = vmatpush1.bf16.msra.mxu0 %v687
      %710 = vmatprep.subr.bf16.mxu0 0
      %711 = vmatpush1.bf16.msra.mxu0 %v688
      %712 = vmatprep.subr.bf16.mxu0 0
      %713 = vmatpush1.bf16.msra.mxu0 %v689
      %714 = vmatprep.subr.bf16.mxu0 0
      %715 = vmatpush1.bf16.msra.mxu0 0
      %716 = vmatprep.subr.bf16.mxu0 0
      %717 = vmatpush1.bf16.msra.mxu0 0
      %718 = vmatprep.subr.bf16.mxu0 0
      %719 = vmatpush1.bf16.msra.mxu0 0
      %720 = vmatprep.subr.bf16.mxu0 0
      %721 = vmatpush1.bf16.msra.mxu0 0
      %722 = vmatprep.subr.bf16.mxu0 0
      %723 = vmatpush1.bf16.msra.mxu0 0
      %724 = vmatprep.subr.bf16.mxu0 0
      %725 = vmatpush1.bf16.msra.mxu0 0
      %726 = vmatprep.subr.bf16.mxu0 0
      %727 = vmatpush1.bf16.msra.mxu0 0
      %728 = vmatprep.subr.bf16.mxu0 0
      %729 = vmatpush1.bf16.msra.mxu0 0
      %730 = vmatprep.mubr.bf16.mxu0 0
      %731 = vmatmul.mubr.bf16.gmra.mrb[0].mxu0 %v488
      %v732 = vpop.f32.mrb[0].mxu0
      %v733 = vadd.f32 %v620, %v732
      %v734 = vpop.f32.mrb[0].mxu0
      %v735 = vpop.f32.mrb[0].mxu0
      %v736 = vadd.f32 %v623, %v735
      %v737 = vpop.f32.mrb[0].mxu0
      %738 = vmatprep.mubr.bf16.mxu0 0
      %739 = vmatmul.mubr.bf16.gmra.mrb[0].mxu0 %v489
      %v740 = vpop.f32.mrb[0].mxu0
      %v741 = vadd.f32 %v628, %v740
      %v742 = vpop.f32.mrb[0].mxu0
      %v743 = vpop.f32.mrb[0].mxu0
      %v744 = vadd.f32 %v631, %v743
      %v745 = vpop.f32.mrb[0].mxu0
      %746 = vmatprep.mubr.bf16.mxu0 0
      %747 = vmatmul.mubr.bf16.gmra.mrb[0].mxu0 %v490
      %v748 = vpop.f32.mrb[0].mxu0
      %v749 = vadd.f32 %v636, %v748
      %v750 = vpop.f32.mrb[0].mxu0
      %v751 = vpop.f32.mrb[0].mxu0
      %v752 = vadd.f32 %v639, %v751
      %v753 = vpop.f32.mrb[0].mxu0
      %754 = vmatprep.mubr.bf16.mxu0 0
      %755 = vmatmul.mubr.bf16.gmra.mrb[0].mxu0 %v491
      %v756 = vpop.f32.mrb[0].mxu0
      %v757 = vadd.f32 %v644, %v756
      %v758 = vpop.f32.mrb[0].mxu0
      %v759 = vpop.f32.mrb[0].mxu0
      %v760 = vadd.f32 %v647, %v759
      %v761 = vpop.f32.mrb[0].mxu0
      %762 = vdwg.mxu0
      %v763 = vld [vmem:[#allocation2 + $0x2] sm:$0xff]
      %v764 = vld [vmem:[#allocation2 + $0x12] sm:$0xff]
      %v765 = vld [vmem:[#allocation2 + $0x22] sm:$0xff]
      %v766 = vld [vmem:[#allocation2 + $0x32] sm:$0xff]
      %v767 = vld [vmem:[#allocation2 + $0x42] sm:$0xff]
      %v768 = vld [vmem:[#allocation2 + $0x52] sm:$0xff]
      %v769 = vld [vmem:[#allocation2 + $0x62] sm:$0xff]
      %v770 = vld [vmem:[#allocation2 + $0x72] sm:$0xff]
      %v771 = vpack.c.bf16 %v764, %v763
      %v772 = vpack.c.bf16 %v766, %v765
      %v773 = vpack.c.bf16 %v768, %v767
      %v774 = vpack.c.bf16 %v770, %v769
      %s775 = scalar_lea.vmem %s2, 128
      %v776 = vld [vmem:[%s775] sm:$0xf]
      %v777 = vld [vmem:[%s775 + $0x4] sm:$0xf]
      %v778 = vld [vmem:[%s775 + $0x8] sm:$0xf]
      %v779 = vld [vmem:[%s775 + $0xc] sm:$0xf]
      %v780 = vld [vmem:[%s775 + $0x10] sm:$0xf]
      %v781 = vld [vmem:[%s775 + $0x14] sm:$0xf]
      %v782 = vld [vmem:[%s775 + $0x18] sm:$0xf]
      %v783 = vld [vmem:[%s775 + $0x1c] sm:$0xf]
      %v784 = vld [vmem:[%s775 + $0x20] sm:$0xf]
      %v785 = vld [vmem:[%s775 + $0x24] sm:$0xf]
      %v786 = vld [vmem:[%s775 + $0x28] sm:$0xf]
      %v787 = vld [vmem:[%s775 + $0x2c] sm:$0xf]
      %v788 = vld [vmem:[%s775 + $0x30] sm:$0xf]
      %v789 = vld [vmem:[%s775 + $0x34] sm:$0xf]
      %v790 = vld [vmem:[%s775 + $0x38] sm:$0xf]
      %v791 = vld [vmem:[%s775 + $0x3c] sm:$0xf]
      %v808 = vunpack.c.l.b16 %v776
      %v809 = vunpack.c.l.b16 %v777
      %v810 = vunpack.c.l.b16 %v778
      %v811 = vunpack.c.l.b16 %v779
      %v812 = vunpack.c.l.b16 %v780
      %v813 = vunpack.c.l.b16 %v781
      %v814 = vunpack.c.l.b16 %v782
      %v815 = vunpack.c.l.b16 %v783
      %v816 = vunpack.c.l.b16 %v784
      %v817 = vunpack.c.l.b16 %v785
      %v818 = vunpack.c.l.b16 %v786
      %v819 = vunpack.c.l.b16 %v787
      %v820 = vunpack.c.l.b16 %v788
      %v821 = vunpack.c.l.b16 %v789
      %v822 = vunpack.c.l.b16 %v790
      %v823 = vunpack.c.l.b16 %v791
      %v824 = vpack.c.b16 %v809, %v808
      %v825 = vpack.c.b16 %v811, %v810
      %v826 = vpack.c.b16 %v813, %v812
      %v827 = vpack.c.b16 %v815, %v814
      %v828 = vpack.c.b16 %v817, %v816
      %v829 = vpack.c.b16 %v819, %v818
      %v830 = vpack.c.b16 %v821, %v820
      %v831 = vpack.c.b16 %v823, %v822
      %840 = vmatprep.subr.bf16.mxu0 0
      %841 = vmatpush1.bf16.msra.mxu0 %v824
      %842 = vmatprep.subr.bf16.mxu0 0
      %843 = vmatpush1.bf16.msra.mxu0 %v825
      %844 = vmatprep.subr.bf16.mxu0 0
      %845 = vmatpush1.bf16.msra.mxu0 %v826
      %846 = vmatprep.subr.bf16.mxu0 0
      %847 = vmatpush1.bf16.msra.mxu0 %v827
      %848 = vmatprep.subr.bf16.mxu0 0
      %849 = vmatpush1.bf16.msra.mxu0 %v828
      %850 = vmatprep.subr.bf16.mxu0 0
      %851 = vmatpush1.bf16.msra.mxu0 %v829
      %852 = vmatprep.subr.bf16.mxu0 0
      %853 = vmatpush1.bf16.msra.mxu0 %v830
      %854 = vmatprep.subr.bf16.mxu0 0
      %855 = vmatpush1.bf16.msra.mxu0 %v831
      %856 = vmatprep.subr.bf16.mxu0 0
      %857 = vmatpush1.bf16.msra.mxu0 0
      %858 = vmatprep.subr.bf16.mxu0 0
      %859 = vmatpush1.bf16.msra.mxu0 0
      %860 = vmatprep.subr.bf16.mxu0 0
      %861 = vmatpush1.bf16.msra.mxu0 0
      %862 = vmatprep.subr.bf16.mxu0 0
      %863 = vmatpush1.bf16.msra.mxu0 0
      %864 = vmatprep.subr.bf16.mxu0 0
      %865 = vmatpush1.bf16.msra.mxu0 0
      %866 = vmatprep.subr.bf16.mxu0 0
      %867 = vmatpush1.bf16.msra.mxu0 0
      %868 = vmatprep.subr.bf16.mxu0 0
      %869 = vmatpush1.bf16.msra.mxu0 0
      %870 = vmatprep.subr.bf16.mxu0 0
      %871 = vmatpush1.bf16.msra.mxu0 0
      %872 = vmatprep.mubr.bf16.mxu0 0
      %873 = vmatmul.mubr.bf16.gmra.mrb[0].mxu0 %v771
      %v874 = vpop.f32.mrb[0].mxu0
      %v875 = vadd.f32 0.0, %v874
      %v876 = vpop.f32.mrb[0].mxu0
      %v877 = vpop.f32.mrb[0].mxu0
      %v878 = vadd.f32 0.0, %v877
      %v879 = vpop.f32.mrb[0].mxu0
      %880 = vmatprep.mubr.bf16.mxu0 0
      %881 = vmatmul.mubr.bf16.gmra.mrb[0].mxu0 %v772
      %v882 = vpop.f32.mrb[0].mxu0
      %v883 = vadd.f32 0.0, %v882
      %v884 = vpop.f32.mrb[0].mxu0
      %v885 = vpop.f32.mrb[0].mxu0
      %v886 = vadd.f32 0.0, %v885
      %v887 = vpop.f32.mrb[0].mxu0
      %888 = vmatprep.mubr.bf16.mxu0 0
      %889 = vmatmul.mubr.bf16.gmra.mrb[0].mxu0 %v773
      %v890 = vpop.f32.mrb[0].mxu0
      %v891 = vadd.f32 0.0, %v890
      %v892 = vpop.f32.mrb[0].mxu0
      %v893 = vpop.f32.mrb[0].mxu0
      %v894 = vadd.f32 0.0, %v893
      %v895 = vpop.f32.mrb[0].mxu0
      %896 = vmatprep.mubr.bf16.mxu0 0
      %897 = vmatmul.mubr.bf16.gmra.mrb[0].mxu0 %v774
      %v898 = vpop.f32.mrb[0].mxu0
      %v899 = vadd.f32 0.0, %v898
      %v900 = vpop.f32.mrb[0].mxu0
      %v901 = vpop.f32.mrb[0].mxu0
      %v902 = vadd.f32 0.0, %v901
      %v903 = vpop.f32.mrb[0].mxu0
      %904 = vdwg.mxu0
      %v905 = vadd.f32 %v733, %v875
      %v906 = vadd.f32 %v736, %v878
      %v907 = vadd.f32 %v741, %v883
      %v908 = vadd.f32 %v744, %v886
      %v909 = vadd.f32 %v749, %v891
      %v910 = vadd.f32 %v752, %v894
      %v911 = vadd.f32 %v757, %v899
      %v912 = vadd.f32 %v760, %v902
      %v913 = vld [vmem:[%s471] sm:$0xff]
      %v914 = vld [vmem:[%s471 + $0x10] sm:$0xff]
      %v915 = vld [vmem:[%s471 + $0x20] sm:$0xff]
      %v916 = vld [vmem:[%s471 + $0x30] sm:$0xff]
      %v917 = vld [vmem:[%s471 + $0x40] sm:$0xff]
      %v918 = vld [vmem:[%s471 + $0x50] sm:$0xff]
      %v919 = vld [vmem:[%s471 + $0x60] sm:$0xff]
      %v920 = vld [vmem:[%s471 + $0x70] sm:$0xff]
      %v921 = vpack.c.bf16 %v914, %v913
      %v922 = vpack.c.bf16 %v916, %v915
      %v923 = vpack.c.bf16 %v918, %v917
      %v924 = vpack.c.bf16 %v920, %v919
      %s925 = scalar_lea.vmem %s2, 192
      %v926 = vld [vmem:[%s925] sm:$0xf]
      %v927 = vld [vmem:[%s925 + $0x4] sm:$0xf]
      %v928 = vld [vmem:[%s925 + $0x8] sm:$0xf]
      %v929 = vld [vmem:[%s925 + $0xc] sm:$0xf]
      %v930 = vld [vmem:[%s925 + $0x10] sm:$0xf]
      %v931 = vld [vmem:[%s925 + $0x14] sm:$0xf]
      %v932 = vld [vmem:[%s925 + $0x18] sm:$0xf]
      %v933 = vld [vmem:[%s925 + $0x1c] sm:$0xf]
      %v934 = vld [vmem:[%s925 + $0x20] sm:$0xf]
      %v935 = vld [vmem:[%s925 + $0x24] sm:$0xf]
      %v936 = vld [vmem:[%s925 + $0x28] sm:$0xf]
      %v937 = vld [vmem:[%s925 + $0x2c] sm:$0xf]
      %v938 = vld [vmem:[%s925 + $0x30] sm:$0xf]
      %v939 = vld [vmem:[%s925 + $0x34] sm:$0xf]
      %v940 = vld [vmem:[%s925 + $0x38] sm:$0xf]
      %v941 = vld [vmem:[%s925 + $0x3c] sm:$0xf]
      %v958 = vunpack.c.l.b16 %v926
      %v959 = vunpack.c.l.b16 %v927
      %v960 = vunpack.c.l.b16 %v928
      %v961 = vunpack.c.l.b16 %v929
      %v962 = vunpack.c.l.b16 %v930
      %v963 = vunpack.c.l.b16 %v931
      %v964 = vunpack.c.l.b16 %v932
      %v965 = vunpack.c.l.b16 %v933
      %v966 = vunpack.c.l.b16 %v934
      %v967 = vunpack.c.l.b16 %v935
      %v968 = vunpack.c.l.b16 %v936
      %v969 = vunpack.c.l.b16 %v937
      %v970 = vunpack.c.l.b16 %v938
      %v971 = vunpack.c.l.b16 %v939
      %v972 = vunpack.c.l.b16 %v940
      %v973 = vunpack.c.l.b16 %v941
      %v974 = vpack.c.b16 %v959, %v958
      %v975 = vpack.c.b16 %v961, %v960
      %v976 = vpack.c.b16 %v963, %v962
      %v977 = vpack.c.b16 %v965, %v964
      %v978 = vpack.c.b16 %v967, %v966
      %v979 = vpack.c.b16 %v969, %v968
      %v980 = vpack.c.b16 %v971, %v970
      %v981 = vpack.c.b16 %v973, %v972
      %990 = vmatprep.subr.bf16.mxu0 0
      %991 = vmatpush1.bf16.msra.mxu0 %v974
      %992 = vmatprep.subr.bf16.mxu0 0
      %993 = vmatpush1.bf16.msra.mxu0 %v975
      %994 = vmatprep.subr.bf16.mxu0 0
      %995 = vmatpush1.bf16.msra.mxu0 %v976
      %996 = vmatprep.subr.bf16.mxu0 0
      %997 = vmatpush1.bf16.msra.mxu0 %v977
      %998 = vmatprep.subr.bf16.mxu0 0
      %999 = vmatpush1.bf16.msra.mxu0 %v978
      %1000 = vmatprep.subr.bf16.mxu0 0
      %1001 = vmatpush1.bf16.msra.mxu0 %v979
      %1002 = vmatprep.subr.bf16.mxu0 0
      %1003 = vmatpush1.bf16.msra.mxu0 %v980
      %1004 = vmatprep.subr.bf16.mxu0 0
      %1005 = vmatpush1.bf16.msra.mxu0 %v981
      %1006 = vmatprep.subr.bf16.mxu0 0
      %1007 = vmatpush1.bf16.msra.mxu0 0
      %1008 = vmatprep.subr.bf16.mxu0 0
      %1009 = vmatpush1.bf16.msra.mxu0 0
      %1010 = vmatprep.subr.bf16.mxu0 0
      %1011 = vmatpush1.bf16.msra.mxu0 0
      %1012 = vmatprep.subr.bf16.mxu0 0
      %1013 = vmatpush1.bf16.msra.mxu0 0
      %1014 = vmatprep.subr.bf16.mxu0 0
      %1015 = vmatpush1.bf16.msra.mxu0 0
      %1016 = vmatprep.subr.bf16.mxu0 0
      %1017 = vmatpush1.bf16.msra.mxu0 0
      %1018 = vmatprep.subr.bf16.mxu0 0
      %1019 = vmatpush1.bf16.msra.mxu0 0
      %1020 = vmatprep.subr.bf16.mxu0 0
      %1021 = vmatpush1.bf16.msra.mxu0 0
      %1022 = vmatprep.mubr.bf16.mxu0 0
      %1023 = vmatmul.mubr.bf16.gmra.mrb[0].mxu0 %v921
      %v1024 = vpop.f32.mrb[0].mxu0
      %v1025 = vadd.f32 0.0, %v1024
      %v1026 = vpop.f32.mrb[0].mxu0
      %v1027 = vpop.f32.mrb[0].mxu0
      %v1028 = vadd.f32 0.0, %v1027
      %v1029 = vpop.f32.mrb[0].mxu0
      %1030 = vmatprep.mubr.bf16.mxu0 0
      %1031 = vmatmul.mubr.bf16.gmra.mrb[0].mxu0 %v922
      %v1032 = vpop.f32.mrb[0].mxu0
      %v1033 = vadd.f32 0.0, %v1032
      %v1034 = vpop.f32.mrb[0].mxu0
      %v1035 = vpop.f32.mrb[0].mxu0
      %v1036 = vadd.f32 0.0, %v1035
      %v1037 = vpop.f32.mrb[0].mxu0
      %1038 = vmatprep.mubr.bf16.mxu0 0
      %1039 = vmatmul.mubr.bf16.gmra.mrb[0].mxu0 %v923
      %v1040 = vpop.f32.mrb[0].mxu0
      %v1041 = vadd.f32 0.0, %v1040
      %v1042 = vpop.f32.mrb[0].mxu0
      %v1043 = vpop.f32.mrb[0].mxu0
      %v1044 = vadd.f32 0.0, %v1043
      %v1045 = vpop.f32.mrb[0].mxu0
      %1046 = vmatprep.mubr.bf16.mxu0 0
      %1047 = vmatmul.mubr.bf16.gmra.mrb[0].mxu0 %v924
      %v1048 = vpop.f32.mrb[0].mxu0
      %v1049 = vadd.f32 0.0, %v1048
      %v1050 = vpop.f32.mrb[0].mxu0
      %v1051 = vpop.f32.mrb[0].mxu0
      %v1052 = vadd.f32 0.0, %v1051
      %v1053 = vpop.f32.mrb[0].mxu0
      %1054 = vdwg.mxu0
      %v1055 = vadd.f32 %v905, %v1025
      %v1056 = vadd.f32 %v906, %v1028
      %v1057 = vadd.f32 %v907, %v1033
      %v1058 = vadd.f32 %v908, %v1036
      %v1059 = vadd.f32 %v909, %v1041
      %v1060 = vadd.f32 %v910, %v1044
      %v1061 = vadd.f32 %v911, %v1049
      %v1062 = vadd.f32 %v912, %v1052
      %v1063 = vld [vmem:[%s471 + $0x1] sm:$0xff]
      %v1064 = vld [vmem:[%s471 + $0x11] sm:$0xff]
      %v1065 = vld [vmem:[%s471 + $0x21] sm:$0xff]
      %v1066 = vld [vmem:[%s471 + $0x31] sm:$0xff]
      %v1067 = vld [vmem:[%s471 + $0x41] sm:$0xff]
      %v1068 = vld [vmem:[%s471 + $0x51] sm:$0xff]
      %v1069 = vld [vmem:[%s471 + $0x61] sm:$0xff]
      %v1070 = vld [vmem:[%s471 + $0x71] sm:$0xff]
      %v1071 = vpack.c.bf16 %v1064, %v1063
      %v1072 = vpack.c.bf16 %v1066, %v1065
      %v1073 = vpack.c.bf16 %v1068, %v1067
      %v1074 = vpack.c.bf16 %v1070, %v1069
      %s1075 = scalar_lea.vmem %s2, 256
      %v1076 = vld [vmem:[%s1075] sm:$0xf]
      %v1077 = vld [vmem:[%s1075 + $0x4] sm:$0xf]
      %v1078 = vld [vmem:[%s1075 + $0x8] sm:$0xf]
      %v1079 = vld [vmem:[%s1075 + $0xc] sm:$0xf]
      %v1080 = vld [vmem:[%s1075 + $0x10] sm:$0xf]
      %v1081 = vld [vmem:[%s1075 + $0x14] sm:$0xf]
      %v1082 = vld [vmem:[%s1075 + $0x18] sm:$0xf]
      %v1083 = vld [vmem:[%s1075 + $0x1c] sm:$0xf]
      %v1084 = vld [vmem:[%s1075 + $0x20] sm:$0xf]
      %v1085 = vld [vmem:[%s1075 + $0x24] sm:$0xf]
      %v1086 = vld [vmem:[%s1075 + $0x28] sm:$0xf]
      %v1087 = vld [vmem:[%s1075 + $0x2c] sm:$0xf]
      %v1088 = vld [vmem:[%s1075 + $0x30] sm:$0xf]
      %v1089 = vld [vmem:[%s1075 + $0x34] sm:$0xf]
      %v1090 = vld [vmem:[%s1075 + $0x38] sm:$0xf]
      %v1091 = vld [vmem:[%s1075 + $0x3c] sm:$0xf]
      %v1108 = vunpack.c.l.b16 %v1076
      %v1109 = vunpack.c.l.b16 %v1077
      %v1110 = vunpack.c.l.b16 %v1078
      %v1111 = vunpack.c.l.b16 %v1079
      %v1112 = vunpack.c.l.b16 %v1080
      %v1113 = vunpack.c.l.b16 %v1081
      %v1114 = vunpack.c.l.b16 %v1082
      %v1115 = vunpack.c.l.b16 %v1083
      %v1116 = vunpack.c.l.b16 %v1084
      %v1117 = vunpack.c.l.b16 %v1085
      %v1118 = vunpack.c.l.b16 %v1086
      %v1119 = vunpack.c.l.b16 %v1087
      %v1120 = vunpack.c.l.b16 %v1088
      %v1121 = vunpack.c.l.b16 %v1089
      %v1122 = vunpack.c.l.b16 %v1090
      %v1123 = vunpack.c.l.b16 %v1091
      %v1124 = vpack.c.b16 %v1109, %v1108
      %v1125 = vpack.c.b16 %v1111, %v1110
      %v1126 = vpack.c.b16 %v1113, %v1112
      %v1127 = vpack.c.b16 %v1115, %v1114
      %v1128 = vpack.c.b16 %v1117, %v1116
      %v1129 = vpack.c.b16 %v1119, %v1118
      %v1130 = vpack.c.b16 %v1121, %v1120
      %v1131 = vpack.c.b16 %v1123, %v1122
      %1140 = vmatprep.subr.bf16.mxu0 0
      %1141 = vmatpush1.bf16.msra.mxu0 %v1124
      %1142 = vmatprep.subr.bf16.mxu0 0
      %1143 = vmatpush1.bf16.msra.mxu0 %v1125
      %1144 = vmatprep.subr.bf16.mxu0 0
      %1145 = vmatpush1.bf16.msra.mxu0 %v1126
      %1146 = vmatprep.subr.bf16.mxu0 0
      %1147 = vmatpush1.bf16.msra.mxu0 %v1127
      %1148 = vmatprep.subr.bf16.mxu0 0
      %1149 = vmatpush1.bf16.msra.mxu0 %v1128
      %1150 = vmatprep.subr.bf16.mxu0 0
      %1151 = vmatpush1.bf16.msra.mxu0 %v1129
      %1152 = vmatprep.subr.bf16.mxu0 0
      %1153 = vmatpush1.bf16.msra.mxu0 %v1130
      %1154 = vmatprep.subr.bf16.mxu0 0
      %1155 = vmatpush1.bf16.msra.mxu0 %v1131
      %1156 = vmatprep.subr.bf16.mxu0 0
      %1157 = vmatpush1.bf16.msra.mxu0 0
      %1158 = vmatprep.subr.bf16.mxu0 0
      %1159 = vmatpush1.bf16.msra.mxu0 0
      %1160 = vmatprep.subr.bf16.mxu0 0
      %1161 = vmatpush1.bf16.msra.mxu0 0
      %1162 = vmatprep.subr.bf16.mxu0 0
      %1163 = vmatpush1.bf16.msra.mxu0 0
      %1164 = vmatprep.subr.bf16.mxu0 0
      %1165 = vmatpush1.bf16.msra.mxu0 0
      %1166 = vmatprep.subr.bf16.mxu0 0
      %1167 = vmatpush1.bf16.msra.mxu0 0
      %1168 = vmatprep.subr.bf16.mxu0 0
      %1169 = vmatpush1.bf16.msra.mxu0 0
      %1170 = vmatprep.subr.bf16.mxu0 0
      %1171 = vmatpush1.bf16.msra.mxu0 0
      %1172 = vmatprep.mubr.bf16.mxu0 0
      %1173 = vmatmul.mubr.bf16.gmra.mrb[0].mxu0 %v1071
      %v1174 = vpop.f32.mrb[0].mxu0
      %v1175 = vadd.f32 0.0, %v1174
      %v1176 = vpop.f32.mrb[0].mxu0
      %v1177 = vpop.f32.mrb[0].mxu0
      %v1178 = vadd.f32 0.0, %v1177
      %v1179 = vpop.f32.mrb[0].mxu0
      %1180 = vmatprep.mubr.bf16.mxu0 0
      %1181 = vmatmul.mubr.bf16.gmra.mrb[0].mxu0 %v1072
      %v1182 = vpop.f32.mrb[0].mxu0
      %v1183 = vadd.f32 0.0, %v1182
      %v1184 = vpop.f32.mrb[0].mxu0
      %v1185 = vpop.f32.mrb[0].mxu0
      %v1186 = vadd.f32 0.0, %v1185
      %v1187 = vpop.f32.mrb[0].mxu0
      %1188 = vmatprep.mubr.bf16.mxu0 0
      %1189 = vmatmul.mubr.bf16.gmra.mrb[0].mxu0 %v1073
      %v1190 = vpop.f32.mrb[0].mxu0
      %v1191 = vadd.f32 0.0, %v1190
      %v1192 = vpop.f32.mrb[0].mxu0
      %v1193 = vpop.f32.mrb[0].mxu0
      %v1194 = vadd.f32 0.0, %v1193
      %v1195 = vpop.f32.mrb[0].mxu0
      %1196 = vmatprep.mubr.bf16.mxu0 0
      %1197 = vmatmul.mubr.bf16.gmra.mrb[0].mxu0 %v1074
      %v1198 = vpop.f32.mrb[0].mxu0
      %v1199 = vadd.f32 0.0, %v1198
      %v1200 = vpop.f32.mrb[0].mxu0
      %v1201 = vpop.f32.mrb[0].mxu0
      %v1202 = vadd.f32 0.0, %v1201
      %v1203 = vpop.f32.mrb[0].mxu0
      %1204 = vdwg.mxu0
      %v1205 = vadd.f32 %v1055, %v1175
      %v1206 = vadd.f32 %v1056, %v1178
      %v1207 = vadd.f32 %v1057, %v1183
      %v1208 = vadd.f32 %v1058, %v1186
      %v1209 = vadd.f32 %v1059, %v1191
      %v1210 = vadd.f32 %v1060, %v1194
      %v1211 = vadd.f32 %v1061, %v1199
      %v1212 = vadd.f32 %v1062, %v1202
      %v1213 = vld [vmem:[%s471 + $0x2] sm:$0xff]
      %v1214 = vld [vmem:[%s471 + $0x12] sm:$0xff]
      %v1215 = vld [vmem:[%s471 + $0x22] sm:$0xff]
      %v1216 = vld [vmem:[%s471 + $0x32] sm:$0xff]
      %v1217 = vld [vmem:[%s471 + $0x42] sm:$0xff]
      %v1218 = vld [vmem:[%s471 + $0x52] sm:$0xff]
      %v1219 = vld [vmem:[%s471 + $0x62] sm:$0xff]
      %v1220 = vld [vmem:[%s471 + $0x72] sm:$0xff]
      %v1221 = vpack.c.bf16 %v1214, %v1213
      %v1222 = vpack.c.bf16 %v1216, %v1215
      %v1223 = vpack.c.bf16 %v1218, %v1217
      %v1224 = vpack.c.bf16 %v1220, %v1219
      %s1225 = scalar_lea.vmem %s2, 320
      %v1226 = vld [vmem:[%s1225] sm:$0xf]
      %v1227 = vld [vmem:[%s1225 + $0x4] sm:$0xf]
      %v1228 = vld [vmem:[%s1225 + $0x8] sm:$0xf]
      %v1229 = vld [vmem:[%s1225 + $0xc] sm:$0xf]
      %v1230 = vld [vmem:[%s1225 + $0x10] sm:$0xf]
      %v1231 = vld [vmem:[%s1225 + $0x14] sm:$0xf]
      %v1232 = vld [vmem:[%s1225 + $0x18] sm:$0xf]
      %v1233 = vld [vmem:[%s1225 + $0x1c] sm:$0xf]
      %v1234 = vld [vmem:[%s1225 + $0x20] sm:$0xf]
      %v1235 = vld [vmem:[%s1225 + $0x24] sm:$0xf]
      %v1236 = vld [vmem:[%s1225 + $0x28] sm:$0xf]
      %v1237 = vld [vmem:[%s1225 + $0x2c] sm:$0xf]
      %v1238 = vld [vmem:[%s1225 + $0x30] sm:$0xf]
      %v1239 = vld [vmem:[%s1225 + $0x34] sm:$0xf]
      %v1240 = vld [vmem:[%s1225 + $0x38] sm:$0xf]
      %v1241 = vld [vmem:[%s1225 + $0x3c] sm:$0xf]
      %v1258 = vunpack.c.l.b16 %v1226
      %v1259 = vunpack.c.l.b16 %v1227
      %v1260 = vunpack.c.l.b16 %v1228
      %v1261 = vunpack.c.l.b16 %v1229
      %v1262 = vunpack.c.l.b16 %v1230
      %v1263 = vunpack.c.l.b16 %v1231
      %v1264 = vunpack.c.l.b16 %v1232
      %v1265 = vunpack.c.l.b16 %v1233
      %v1266 = vunpack.c.l.b16 %v1234
      %v1267 = vunpack.c.l.b16 %v1235
      %v1268 = vunpack.c.l.b16 %v1236
      %v1269 = vunpack.c.l.b16 %v1237
      %v1270 = vunpack.c.l.b16 %v1238
      %v1271 = vunpack.c.l.b16 %v1239
      %v1272 = vunpack.c.l.b16 %v1240
      %v1273 = vunpack.c.l.b16 %v1241
      %v1274 = vpack.c.b16 %v1259, %v1258
      %v1275 = vpack.c.b16 %v1261, %v1260
      %v1276 = vpack.c.b16 %v1263, %v1262
      %v1277 = vpack.c.b16 %v1265, %v1264
      %v1278 = vpack.c.b16 %v1267, %v1266
      %v1279 = vpack.c.b16 %v1269, %v1268
      %v1280 = vpack.c.b16 %v1271, %v1270
      %v1281 = vpack.c.b16 %v1273, %v1272
      %1290 = vmatprep.subr.bf16.mxu0 0
      %1291 = vmatpush1.bf16.msra.mxu0 %v1274
      %1292 = vmatprep.subr.bf16.mxu0 0
      %1293 = vmatpush1.bf16.msra.mxu0 %v1275
      %1294 = vmatprep.subr.bf16.mxu0 0
      %1295 = vmatpush1.bf16.msra.mxu0 %v1276
      %1296 = vmatprep.subr.bf16.mxu0 0
      %1297 = vmatpush1.bf16.msra.mxu0 %v1277
      %1298 = vmatprep.subr.bf16.mxu0 0
      %1299 = vmatpush1.bf16.msra.mxu0 %v1278
      %1300 = vmatprep.subr.bf16.mxu0 0
      %1301 = vmatpush1.bf16.msra.mxu0 %v1279
      %1302 = vmatprep.subr.bf16.mxu0 0
      %1303 = vmatpush1.bf16.msra.mxu0 %v1280
      %1304 = vmatprep.subr.bf16.mxu0 0
      %1305 = vmatpush1.bf16.msra.mxu0 %v1281
      %1306 = vmatprep.subr.bf16.mxu0 0
      %1307 = vmatpush1.bf16.msra.mxu0 0
      %1308 = vmatprep.subr.bf16.mxu0 0
      %1309 = vmatpush1.bf16.msra.mxu0 0
      %1310 = vmatprep.subr.bf16.mxu0 0
      %1311 = vmatpush1.bf16.msra.mxu0 0
      %1312 = vmatprep.subr.bf16.mxu0 0
      %1313 = vmatpush1.bf16.msra.mxu0 0
      %1314 = vmatprep.subr.bf16.mxu0 0
      %1315 = vmatpush1.bf16.msra.mxu0 0
      %1316 = vmatprep.subr.bf16.mxu0 0
      %1317 = vmatpush1.bf16.msra.mxu0 0
      %1318 = vmatprep.subr.bf16.mxu0 0
      %1319 = vmatpush1.bf16.msra.mxu0 0
      %1320 = vmatprep.subr.bf16.mxu0 0
      %1321 = vmatpush1.bf16.msra.mxu0 0
      %1322 = vmatprep.mubr.bf16.mxu0 0
      %1323 = vmatmul.mubr.bf16.gmra.mrb[0].mxu0 %v1221
      %v1324 = vpop.f32.mrb[0].mxu0
      %v1325 = vadd.f32 0.0, %v1324
      %v1326 = vpop.f32.mrb[0].mxu0
      %v1327 = vpop.f32.mrb[0].mxu0
      %v1328 = vadd.f32 0.0, %v1327
      %v1329 = vpop.f32.mrb[0].mxu0
      %1330 = vmatprep.mubr.bf16.mxu0 0
      %1331 = vmatmul.mubr.bf16.gmra.mrb[0].mxu0 %v1222
      %v1332 = vpop.f32.mrb[0].mxu0
      %v1333 = vadd.f32 0.0, %v1332
      %v1334 = vpop.f32.mrb[0].mxu0
      %v1335 = vpop.f32.mrb[0].mxu0
      %v1336 = vadd.f32 0.0, %v1335
      %v1337 = vpop.f32.mrb[0].mxu0
      %1338 = vmatprep.mubr.bf16.mxu0 0
      %1339 = vmatmul.mubr.bf16.gmra.mrb[0].mxu0 %v1223
      %v1340 = vpop.f32.mrb[0].mxu0
      %v1341 = vadd.f32 0.0, %v1340
      %v1342 = vpop.f32.mrb[0].mxu0
      %v1343 = vpop.f32.mrb[0].mxu0
      %v1344 = vadd.f32 0.0, %v1343
      %v1345 = vpop.f32.mrb[0].mxu0
      %1346 = vmatprep.mubr.bf16.mxu0 0
      %1347 = vmatmul.mubr.bf16.gmra.mrb[0].mxu0 %v1224
      %v1348 = vpop.f32.mrb[0].mxu0
      %v1349 = vadd.f32 0.0, %v1348
      %v1350 = vpop.f32.mrb[0].mxu0
      %v1351 = vpop.f32.mrb[0].mxu0
      %v1352 = vadd.f32 0.0, %v1351
      %v1353 = vpop.f32.mrb[0].mxu0
      %1354 = vdwg.mxu0
      %v1355 = vadd.f32 %v1205, %v1325
      %v1356 = vadd.f32 %v1206, %v1328
      %v1357 = vadd.f32 %v1207, %v1333
      %v1358 = vadd.f32 %v1208, %v1336
      %v1359 = vadd.f32 %v1209, %v1341
      %v1360 = vadd.f32 %v1210, %v1344
      %v1361 = vadd.f32 %v1211, %v1349
      %v1362 = vadd.f32 %v1212, %v1352
      %s1363 = scalar_lea.vmem [#allocation2], 32
      %v1364 = vld [vmem:[%s1363] sm:$0xff]
      %v1365 = vld [vmem:[%s1363 + $0x10] sm:$0xff]
      %v1366 = vld [vmem:[%s1363 + $0x20] sm:$0xff]
      %v1367 = vld [vmem:[%s1363 + $0x30] sm:$0xff]
      %v1368 = vld [vmem:[%s1363 + $0x40] sm:$0xff]
      %v1369 = vld [vmem:[%s1363 + $0x50] sm:$0xff]
      %v1370 = vld [vmem:[%s1363 + $0x60] sm:$0xff]
      %v1371 = vld [vmem:[%s1363 + $0x70] sm:$0xff]
      %v1372 = vpack.c.bf16 %v1365, %v1364
      %v1373 = vpack.c.bf16 %v1367, %v1366
      %v1374 = vpack.c.bf16 %v1369, %v1368
      %v1375 = vpack.c.bf16 %v1371, %v1370
      %s1376 = scalar_lea.vmem %s2, 384
      %v1377 = vld [vmem:[%s1376] sm:$0xf]
      %v1378 = vld [vmem:[%s1376 + $0x4] sm:$0xf]
      %v1379 = vld [vmem:[%s1376 + $0x8] sm:$0xf]
      %v1380 = vld [vmem:[%s1376 + $0xc] sm:$0xf]
      %v1381 = vld [vmem:[%s1376 + $0x10] sm:$0xf]
      %v1382 = vld [vmem:[%s1376 + $0x14] sm:$0xf]
      %v1383 = vld [vmem:[%s1376 + $0x18] sm:$0xf]
      %v1384 = vld [vmem:[%s1376 + $0x1c] sm:$0xf]
      %v1385 = vld [vmem:[%s1376 + $0x20] sm:$0xf]
      %v1386 = vld [vmem:[%s1376 + $0x24] sm:$0xf]
      %v1387 = vld [vmem:[%s1376 + $0x28] sm:$0xf]
      %v1388 = vld [vmem:[%s1376 + $0x2c] sm:$0xf]
      %v1389 = vld [vmem:[%s1376 + $0x30] sm:$0xf]
      %v1390 = vld [vmem:[%s1376 + $0x34] sm:$0xf]
      %v1391 = vld [vmem:[%s1376 + $0x38] sm:$0xf]
      %v1392 = vld [vmem:[%s1376 + $0x3c] sm:$0xf]
      %v1409 = vunpack.c.l.b16 %v1377
      %v1410 = vunpack.c.l.b16 %v1378
      %v1411 = vunpack.c.l.b16 %v1379
      %v1412 = vunpack.c.l.b16 %v1380
      %v1413 = vunpack.c.l.b16 %v1381
      %v1414 = vunpack.c.l.b16 %v1382
      %v1415 = vunpack.c.l.b16 %v1383
      %v1416 = vunpack.c.l.b16 %v1384
      %v1417 = vunpack.c.l.b16 %v1385
      %v1418 = vunpack.c.l.b16 %v1386
      %v1419 = vunpack.c.l.b16 %v1387
      %v1420 = vunpack.c.l.b16 %v1388
      %v1421 = vunpack.c.l.b16 %v1389
      %v1422 = vunpack.c.l.b16 %v1390
      %v1423 = vunpack.c.l.b16 %v1391
      %v1424 = vunpack.c.l.b16 %v1392
      %v1425 = vpack.c.b16 %v1410, %v1409
      %v1426 = vpack.c.b16 %v1412, %v1411
      %v1427 = vpack.c.b16 %v1414, %v1413
      %v1428 = vpack.c.b16 %v1416, %v1415
      %v1429 = vpack.c.b16 %v1418, %v1417
      %v1430 = vpack.c.b16 %v1420, %v1419
      %v1431 = vpack.c.b16 %v1422, %v1421
      %v1432 = vpack.c.b16 %v1424, %v1423
      %1441 = vmatprep.subr.bf16.mxu0 0
      %1442 = vmatpush1.bf16.msra.mxu0 %v1425
      %1443 = vmatprep.subr.bf16.mxu0 0
      %1444 = vmatpush1.bf16.msra.mxu0 %v1426
      %1445 = vmatprep.subr.bf16.mxu0 0
      %1446 = vmatpush1.bf16.msra.mxu0 %v1427
      %1447 = vmatprep.subr.bf16.mxu0 0
      %1448 = vmatpush1.bf16.msra.mxu0 %v1428
      %1449 = vmatprep.subr.bf16.mxu0 0
      %1450 = vmatpush1.bf16.msra.mxu0 %v1429
      %1451 = vmatprep.subr.bf16.mxu0 0
      %1452 = vmatpush1.bf16.msra.mxu0 %v1430
      %1453 = vmatprep.subr.bf16.mxu0 0
      %1454 = vmatpush1.bf16.msra.mxu0 %v1431
      %1455 = vmatprep.subr.bf16.mxu0 0
      %1456 = vmatpush1.bf16.msra.mxu0 %v1432
      %1457 = vmatprep.subr.bf16.mxu0 0
      %1458 = vmatpush1.bf16.msra.mxu0 0
      %1459 = vmatprep.subr.bf16.mxu0 0
      %1460 = vmatpush1.bf16.msra.mxu0 0
      %1461 = vmatprep.subr.bf16.mxu0 0
      %1462 = vmatpush1.bf16.msra.mxu0 0
      %1463 = vmatprep.subr.bf16.mxu0 0
      %1464 = vmatpush1.bf16.msra.mxu0 0
      %1465 = vmatprep.subr.bf16.mxu0 0
      %1466 = vmatpush1.bf16.msra.mxu0 0
      %1467 = vmatprep.subr.bf16.mxu0 0
      %1468 = vmatpush1.bf16.msra.mxu0 0
      %1469 = vmatprep.subr.bf16.mxu0 0
      %1470 = vmatpush1.bf16.msra.mxu0 0
      %1471 = vmatprep.subr.bf16.mxu0 0
      %1472 = vmatpush1.bf16.msra.mxu0 0
      %1473 = vmatprep.mubr.bf16.mxu0 0
      %1474 = vmatmul.mubr.bf16.gmra.mrb[0].mxu0 %v1372
      %v1475 = vpop.f32.mrb[0].mxu0
      %v1476 = vadd.f32 0.0, %v1475
      %v1477 = vpop.f32.mrb[0].mxu0
      %v1478 = vpop.f32.mrb[0].mxu0
      %v1479 = vadd.f32 0.0, %v1478
      %v1480 = vpop.f32.mrb[0].mxu0
      %1481 = vmatprep.mubr.bf16.mxu0 0
      %1482 = vmatmul.mubr.bf16.gmra.mrb[0].mxu0 %v1373
      %v1483 = vpop.f32.mrb[0].mxu0
      %v1484 = vadd.f32 0.0, %v1483
      %v1485 = vpop.f32.mrb[0].mxu0
      %v1486 = vpop.f32.mrb[0].mxu0
      %v1487 = vadd.f32 0.0, %v1486
      %v1488 = vpop.f32.mrb[0].mxu0
      %1489 = vmatprep.mubr.bf16.mxu0 0
      %1490 = vmatmul.mubr.bf16.gmra.mrb[0].mxu0 %v1374
      %v1491 = vpop.f32.mrb[0].mxu0
      %v1492 = vadd.f32 0.0, %v1491
      %v1493 = vpop.f32.mrb[0].mxu0
      %v1494 = vpop.f32.mrb[0].mxu0
      %v1495 = vadd.f32 0.0, %v1494
      %v1496 = vpop.f32.mrb[0].mxu0
      %1497 = vmatprep.mubr.bf16.mxu0 0
      %1498 = vmatmul.mubr.bf16.gmra.mrb[0].mxu0 %v1375
      %v1499 = vpop.f32.mrb[0].mxu0
      %v1500 = vadd.f32 0.0, %v1499
      %v1501 = vpop.f32.mrb[0].mxu0
      %v1502 = vpop.f32.mrb[0].mxu0
      %v1503 = vadd.f32 0.0, %v1502
      %v1504 = vpop.f32.mrb[0].mxu0
      %1505 = vdwg.mxu0
      %v1506 = vadd.f32 %v1355, %v1476
      %v1507 = vadd.f32 %v1356, %v1479
      %v1508 = vadd.f32 %v1357, %v1484
      %v1509 = vadd.f32 %v1358, %v1487
      %v1510 = vadd.f32 %v1359, %v1492
      %v1511 = vadd.f32 %v1360, %v1495
      %v1512 = vadd.f32 %v1361, %v1500
      %v1513 = vadd.f32 %v1362, %v1503
      %v1514 = vld [vmem:[%s1363 + $0x1] sm:$0xff]
      %v1515 = vld [vmem:[%s1363 + $0x11] sm:$0xff]
      %v1516 = vld [vmem:[%s1363 + $0x21] sm:$0xff]
      %v1517 = vld [vmem:[%s1363 + $0x31] sm:$0xff]
      %v1518 = vld [vmem:[%s1363 + $0x41] sm:$0xff]
      %v1519 = vld [vmem:[%s1363 + $0x51] sm:$0xff]
      %v1520 = vld [vmem:[%s1363 + $0x61] sm:$0xff]
      %v1521 = vld [vmem:[%s1363 + $0x71] sm:$0xff]
      %v1522 = vpack.c.bf16 %v1515, %v1514
      %v1523 = vpack.c.bf16 %v1517, %v1516
      %v1524 = vpack.c.bf16 %v1519, %v1518
      %v1525 = vpack.c.bf16 %v1521, %v1520
      %s1526 = scalar_lea.vmem %s2, 448
      %v1527 = vld [vmem:[%s1526] sm:$0xf]
      %v1528 = vld [vmem:[%s1526 + $0x4] sm:$0xf]
      %v1529 = vld [vmem:[%s1526 + $0x8] sm:$0xf]
      %v1530 = vld [vmem:[%s1526 + $0xc] sm:$0xf]
      %v1531 = vld [vmem:[%s1526 + $0x10] sm:$0xf]
      %v1532 = vld [vmem:[%s1526 + $0x14] sm:$0xf]
      %v1533 = vld [vmem:[%s1526 + $0x18] sm:$0xf]
      %v1534 = vld [vmem:[%s1526 + $0x1c] sm:$0xf]
      %v1535 = vld [vmem:[%s1526 + $0x20] sm:$0xf]
      %v1536 = vld [vmem:[%s1526 + $0x24] sm:$0xf]
      %v1537 = vld [vmem:[%s1526 + $0x28] sm:$0xf]
      %v1538 = vld [vmem:[%s1526 + $0x2c] sm:$0xf]
      %v1539 = vld [vmem:[%s1526 + $0x30] sm:$0xf]
      %v1540 = vld [vmem:[%s1526 + $0x34] sm:$0xf]
      %v1541 = vld [vmem:[%s1526 + $0x38] sm:$0xf]
      %v1542 = vld [vmem:[%s1526 + $0x3c] sm:$0xf]
      %v1559 = vunpack.c.l.b16 %v1527
      %v1560 = vunpack.c.l.b16 %v1528
      %v1561 = vunpack.c.l.b16 %v1529
      %v1562 = vunpack.c.l.b16 %v1530
      %v1563 = vunpack.c.l.b16 %v1531
      %v1564 = vunpack.c.l.b16 %v1532
      %v1565 = vunpack.c.l.b16 %v1533
      %v1566 = vunpack.c.l.b16 %v1534
      %v1567 = vunpack.c.l.b16 %v1535
      %v1568 = vunpack.c.l.b16 %v1536
      %v1569 = vunpack.c.l.b16 %v1537
      %v1570 = vunpack.c.l.b16 %v1538
      %v1571 = vunpack.c.l.b16 %v1539
      %v1572 = vunpack.c.l.b16 %v1540
      %v1573 = vunpack.c.l.b16 %v1541
      %v1574 = vunpack.c.l.b16 %v1542
      %v1575 = vpack.c.b16 %v1560, %v1559
      %v1576 = vpack.c.b16 %v1562, %v1561
      %v1577 = vpack.c.b16 %v1564, %v1563
      %v1578 = vpack.c.b16 %v1566, %v1565
      %v1579 = vpack.c.b16 %v1568, %v1567
      %v1580 = vpack.c.b16 %v1570, %v1569
      %v1581 = vpack.c.b16 %v1572, %v1571
      %v1582 = vpack.c.b16 %v1574, %v1573
      %1591 = vmatprep.subr.bf16.mxu0 0
      %1592 = vmatpush1.bf16.msra.mxu0 %v1575
      %1593 = vmatprep.subr.bf16.mxu0 0
      %1594 = vmatpush1.bf16.msra.mxu0 %v1576
      %1595 = vmatprep.subr.bf16.mxu0 0
      %1596 = vmatpush1.bf16.msra.mxu0 %v1577
      %1597 = vmatprep.subr.bf16.mxu0 0
      %1598 = vmatpush1.bf16.msra.mxu0 %v1578
      %1599 = vmatprep.subr.bf16.mxu0 0
      %1600 = vmatpush1.bf16.msra.mxu0 %v1579
      %1601 = vmatprep.subr.bf16.mxu0 0
      %1602 = vmatpush1.bf16.msra.mxu0 %v1580
      %1603 = vmatprep.subr.bf16.mxu0 0
      %1604 = vmatpush1.bf16.msra.mxu0 %v1581
      %1605 = vmatprep.subr.bf16.mxu0 0
      %1606 = vmatpush1.bf16.msra.mxu0 %v1582
      %1607 = vmatprep.subr.bf16.mxu0 0
      %1608 = vmatpush1.bf16.msra.mxu0 0
      %1609 = vmatprep.subr.bf16.mxu0 0
      %1610 = vmatpush1.bf16.msra.mxu0 0
      %1611 = vmatprep.subr.bf16.mxu0 0
      %1612 = vmatpush1.bf16.msra.mxu0 0
      %1613 = vmatprep.subr.bf16.mxu0 0
      %1614 = vmatpush1.bf16.msra.mxu0 0
      %1615 = vmatprep.subr.bf16.mxu0 0
      %1616 = vmatpush1.bf16.msra.mxu0 0
      %1617 = vmatprep.subr.bf16.mxu0 0
      %1618 = vmatpush1.bf16.msra.mxu0 0
      %1619 = vmatprep.subr.bf16.mxu0 0
      %1620 = vmatpush1.bf16.msra.mxu0 0
      %1621 = vmatprep.subr.bf16.mxu0 0
      %1622 = vmatpush1.bf16.msra.mxu0 0
      %1623 = vmatprep.mubr.bf16.mxu0 0
      %1624 = vmatmul.mubr.bf16.gmra.mrb[0].mxu0 %v1522
      %v1625 = vpop.f32.mrb[0].mxu0
      %v1626 = vadd.f32 0.0, %v1625
      %v1627 = vpop.f32.mrb[0].mxu0
      %v1628 = vpop.f32.mrb[0].mxu0
      %v1629 = vadd.f32 0.0, %v1628
      %v1630 = vpop.f32.mrb[0].mxu0
      %1631 = vmatprep.mubr.bf16.mxu0 0
      %1632 = vmatmul.mubr.bf16.gmra.mrb[0].mxu0 %v1523
      %v1633 = vpop.f32.mrb[0].mxu0
      %v1634 = vadd.f32 0.0, %v1633
      %v1635 = vpop.f32.mrb[0].mxu0
      %v1636 = vpop.f32.mrb[0].mxu0
      %v1637 = vadd.f32 0.0, %v1636
      %v1638 = vpop.f32.mrb[0].mxu0
      %1639 = vmatprep.mubr.bf16.mxu0 0
      %1640 = vmatmul.mubr.bf16.gmra.mrb[0].mxu0 %v1524
      %v1641 = vpop.f32.mrb[0].mxu0
      %v1642 = vadd.f32 0.0, %v1641
      %v1643 = vpop.f32.mrb[0].mxu0
      %v1644 = vpop.f32.mrb[0].mxu0
      %v1645 = vadd.f32 0.0, %v1644
      %v1646 = vpop.f32.mrb[0].mxu0
      %1647 = vmatprep.mubr.bf16.mxu0 0
      %1648 = vmatmul.mubr.bf16.gmra.mrb[0].mxu0 %v1525
      %v1649 = vpop.f32.mrb[0].mxu0
      %v1650 = vadd.f32 0.0, %v1649
      %v1651 = vpop.f32.mrb[0].mxu0
      %v1652 = vpop.f32.mrb[0].mxu0
      %v1653 = vadd.f32 0.0, %v1652
      %v1654 = vpop.f32.mrb[0].mxu0
      %1655 = vdwg.mxu0
      %v1656 = vadd.f32 %v1506, %v1626
      %v1657 = vadd.f32 %v1507, %v1629
      %v1658 = vadd.f32 %v1508, %v1634
      %v1659 = vadd.f32 %v1509, %v1637
      %v1660 = vadd.f32 %v1510, %v1642
      %v1661 = vadd.f32 %v1511, %v1645
      %v1662 = vadd.f32 %v1512, %v1650
      %v1663 = vadd.f32 %v1513, %v1653
      %v1664 = vld [vmem:[%s1363 + $0x2] sm:$0xff]
      %v1665 = vld [vmem:[%s1363 + $0x12] sm:$0xff]
      %v1666 = vld [vmem:[%s1363 + $0x22] sm:$0xff]
      %v1667 = vld [vmem:[%s1363 + $0x32] sm:$0xff]
      %v1668 = vld [vmem:[%s1363 + $0x42] sm:$0xff]
      %v1669 = vld [vmem:[%s1363 + $0x52] sm:$0xff]
      %v1670 = vld [vmem:[%s1363 + $0x62] sm:$0xff]
      %v1671 = vld [vmem:[%s1363 + $0x72] sm:$0xff]
      %v1672 = vpack.c.bf16 %v1665, %v1664
      %v1673 = vpack.c.bf16 %v1667, %v1666
      %v1674 = vpack.c.bf16 %v1669, %v1668
      %v1675 = vpack.c.bf16 %v1671, %v1670
      %s1676 = scalar_lea.vmem %s2, 512
      %v1677 = vld [vmem:[%s1676] sm:$0xf]
      %v1678 = vld [vmem:[%s1676 + $0x4] sm:$0xf]
      %v1679 = vld [vmem:[%s1676 + $0x8] sm:$0xf]
      %v1680 = vld [vmem:[%s1676 + $0xc] sm:$0xf]
      %v1681 = vld [vmem:[%s1676 + $0x10] sm:$0xf]
      %v1682 = vld [vmem:[%s1676 + $0x14] sm:$0xf]
      %v1683 = vld [vmem:[%s1676 + $0x18] sm:$0xf]
      %v1684 = vld [vmem:[%s1676 + $0x1c] sm:$0xf]
      %v1685 = vld [vmem:[%s1676 + $0x20] sm:$0xf]
      %v1686 = vld [vmem:[%s1676 + $0x24] sm:$0xf]
      %v1687 = vld [vmem:[%s1676 + $0x28] sm:$0xf]
      %v1688 = vld [vmem:[%s1676 + $0x2c] sm:$0xf]
      %v1689 = vld [vmem:[%s1676 + $0x30] sm:$0xf]
      %v1690 = vld [vmem:[%s1676 + $0x34] sm:$0xf]
      %v1691 = vld [vmem:[%s1676 + $0x38] sm:$0xf]
      %v1692 = vld [vmem:[%s1676 + $0x3c] sm:$0xf]
      %v1709 = vunpack.c.l.b16 %v1677
      %v1710 = vunpack.c.l.b16 %v1678
      %v1711 = vunpack.c.l.b16 %v1679
      %v1712 = vunpack.c.l.b16 %v1680
      %v1713 = vunpack.c.l.b16 %v1681
      %v1714 = vunpack.c.l.b16 %v1682
      %v1715 = vunpack.c.l.b16 %v1683
      %v1716 = vunpack.c.l.b16 %v1684
      %v1717 = vunpack.c.l.b16 %v1685
      %v1718 = vunpack.c.l.b16 %v1686
      %v1719 = vunpack.c.l.b16 %v1687
      %v1720 = vunpack.c.l.b16 %v1688
      %v1721 = vunpack.c.l.b16 %v1689
      %v1722 = vunpack.c.l.b16 %v1690
      %v1723 = vunpack.c.l.b16 %v1691
      %v1724 = vunpack.c.l.b16 %v1692
      %v1725 = vpack.c.b16 %v1710, %v1709
      %v1726 = vpack.c.b16 %v1712, %v1711
      %v1727 = vpack.c.b16 %v1714, %v1713
      %v1728 = vpack.c.b16 %v1716, %v1715
      %v1729 = vpack.c.b16 %v1718, %v1717
      %v1730 = vpack.c.b16 %v1720, %v1719
      %v1731 = vpack.c.b16 %v1722, %v1721
      %v1732 = vpack.c.b16 %v1724, %v1723
      %1741 = vmatprep.subr.bf16.mxu0 0
      %1742 = vmatpush1.bf16.msra.mxu0 %v1725
      %1743 = vmatprep.subr.bf16.mxu0 0
      %1744 = vmatpush1.bf16.msra.mxu0 %v1726
      %1745 = vmatprep.subr.bf16.mxu0 0
      %1746 = vmatpush1.bf16.msra.mxu0 %v1727
      %1747 = vmatprep.subr.bf16.mxu0 0
      %1748 = vmatpush1.bf16.msra.mxu0 %v1728
      %1749 = vmatprep.subr.bf16.mxu0 0
      %1750 = vmatpush1.bf16.msra.mxu0 %v1729
      %1751 = vmatprep.subr.bf16.mxu0 0
      %1752 = vmatpush1.bf16.msra.mxu0 %v1730
      %1753 = vmatprep.subr.bf16.mxu0 0
      %1754 = vmatpush1.bf16.msra.mxu0 %v1731
      %1755 = vmatprep.subr.bf16.mxu0 0
      %1756 = vmatpush1.bf16.msra.mxu0 %v1732
      %1757 = vmatprep.subr.bf16.mxu0 0
      %1758 = vmatpush1.bf16.msra.mxu0 0
      %1759 = vmatprep.subr.bf16.mxu0 0
      %1760 = vmatpush1.bf16.msra.mxu0 0
      %1761 = vmatprep.subr.bf16.mxu0 0
      %1762 = vmatpush1.bf16.msra.mxu0 0
      %1763 = vmatprep.subr.bf16.mxu0 0
      %1764 = vmatpush1.bf16.msra.mxu0 0
      %1765 = vmatprep.subr.bf16.mxu0 0
      %1766 = vmatpush1.bf16.msra.mxu0 0
      %1767 = vmatprep.subr.bf16.mxu0 0
      %1768 = vmatpush1.bf16.msra.mxu0 0
      %1769 = vmatprep.subr.bf16.mxu0 0
      %1770 = vmatpush1.bf16.msra.mxu0 0
      %1771 = vmatprep.subr.bf16.mxu0 0
      %1772 = vmatpush1.bf16.msra.mxu0 0
      %1773 = vmatprep.mubr.bf16.mxu0 0
      %1774 = vmatmul.mubr.bf16.gmra.mrb[0].mxu0 %v1672
      %v1775 = vpop.f32.mrb[0].mxu0
      %v1776 = vadd.f32 0.0, %v1775
      %v1777 = vpop.f32.mrb[0].mxu0
      %v1778 = vpop.f32.mrb[0].mxu0
      %v1779 = vadd.f32 0.0, %v1778
      %v1780 = vpop.f32.mrb[0].mxu0
      %1781 = vmatprep.mubr.bf16.mxu0 0
      %1782 = vmatmul.mubr.bf16.gmra.mrb[0].mxu0 %v1673
      %v1783 = vpop.f32.mrb[0].mxu0
      %v1784 = vadd.f32 0.0, %v1783
      %v1785 = vpop.f32.mrb[0].mxu0
      %v1786 = vpop.f32.mrb[0].mxu0
      %v1787 = vadd.f32 0.0, %v1786
      %v1788 = vpop.f32.mrb[0].mxu0
      %1789 = vmatprep.mubr.bf16.mxu0 0
      %1790 = vmatmul.mubr.bf16.gmra.mrb[0].mxu0 %v1674
      %v1791 = vpop.f32.mrb[0].mxu0
      %v1792 = vadd.f32 0.0, %v1791
      %v1793 = vpop.f32.mrb[0].mxu0
      %v1794 = vpop.f32.mrb[0].mxu0
      %v1795 = vadd.f32 0.0, %v1794
      %v1796 = vpop.f32.mrb[0].mxu0
      %1797 = vmatprep.mubr.bf16.mxu0 0
      %1798 = vmatmul.mubr.bf16.gmra.mrb[0].mxu0 %v1675
      %v1799 = vpop.f32.mrb[0].mxu0
      %v1800 = vadd.f32 0.0, %v1799
      %v1801 = vpop.f32.mrb[0].mxu0
      %v1802 = vpop.f32.mrb[0].mxu0
      %v1803 = vadd.f32 0.0, %v1802
      %v1804 = vpop.f32.mrb[0].mxu0
      %1805 = vdwg.mxu0
      %v1806 = vadd.f32 %v1656, %v1776
      %v1807 = vadd.f32 %v1657, %v1779
      %v1808 = vadd.f32 %v1658, %v1784
      %v1809 = vadd.f32 %v1659, %v1787
      %v1810 = vadd.f32 %v1660, %v1792
      %v1811 = vadd.f32 %v1661, %v1795
      %v1812 = vadd.f32 %v1662, %v1800
      %v1813 = vadd.f32 %v1663, %v1803
      %v1814 = vpack.c.bf16 %v1807, %v1806
      %v1815 = vpack.c.bf16 %v1809, %v1808
      %v1816 = vpack.c.bf16 %v1811, %v1810
      %v1817 = vpack.c.bf16 %v1813, %v1812
      %v1822 = vunpack.c.l.b16 %v1814
      %v1823 = vunpack.c.h.b16 %v1814
      %v1824 = vunpack.c.l.b16 %v1815
      %v1825 = vunpack.c.h.b16 %v1815
      %v1826 = vunpack.c.l.b16 %v1816
      %v1827 = vunpack.c.h.b16 %v1816
      %v1828 = vunpack.c.l.b16 %v1817
      %v1829 = vunpack.c.h.b16 %v1817
      %v1830 = vpack.c.b16 %v1822, %v1822
      %v1831 = vpack.c.b16 %v1823, %v1823
      %v1832 = vpack.c.b16 %v1824, %v1824
      %v1833 = vpack.c.b16 %v1825, %v1825
      %v1834 = vpack.c.b16 %v1826, %v1826
      %v1835 = vpack.c.b16 %v1827, %v1827
      %v1836 = vpack.c.b16 %v1828, %v1828
      %v1837 = vpack.c.b16 %v1829, %v1829
      %1846 = vst [vmem:[%s377] sm:$0xf] %v1830
      %1847 = vst [vmem:[%s377 + $0x4] sm:$0xf] %v1831
      %1848 = vst [vmem:[%s377 + $0x8] sm:$0xf] %v1832
      %1849 = vst [vmem:[%s377 + $0xc] sm:$0xf] %v1833
      %1850 = vst [vmem:[%s377 + $0x10] sm:$0xf] %v1834
      %1851 = vst [vmem:[%s377 + $0x14] sm:$0xf] %v1835
      %1852 = vst [vmem:[%s377 + $0x18] sm:$0xf] %v1836
      %1853 = vst [vmem:[%s377 + $0x1c] sm:$0xf] %v1837
      %v1854 = vadd.f32 %v1806, %v1807
      %v1855 = vadd.f32 %v1854, %v1808
      %v1856 = vadd.f32 %v1855, %v1809
      %v1857 = vadd.f32 %v1856, %v1810
      %v1858 = vadd.f32 %v1857, %v1811
      %v1859 = vadd.f32 %v1858, %v1812
      %v1860 = vadd.f32 %v1859, %v1813
      %v1861 = vrot.slane %v1860, 4
      %v1862 = vadd.f32 %v1860, %v1861
      %v1863 = vrot.slane %v1862, 2
      %v1864 = vadd.f32 %v1862, %v1863
      %v1865 = vrot.slane %v1864, 1
      %v1866 = vadd.f32 %v1864, %v1865
      %1867 = vst [vmem:[%s386] sm:$0x1] %v1866
      %v1868 = vmul.f32 %v1806, %v1806
      %v1869 = vmul.f32 %v1807, %v1807
      %v1870 = vmul.f32 %v1808, %v1808
      %v1871 = vmul.f32 %v1809, %v1809
      %v1872 = vmul.f32 %v1810, %v1810
      %v1873 = vmul.f32 %v1811, %v1811
      %v1874 = vmul.f32 %v1812, %v1812
      %v1875 = vmul.f32 %v1813, %v1813
      %v1876 = vadd.f32 %v1868, %v1869
      %v1877 = vadd.f32 %v1876, %v1870
      %v1878 = vadd.f32 %v1877, %v1871
      %v1879 = vadd.f32 %v1878, %v1872
      %v1880 = vadd.f32 %v1879, %v1873
      %v1881 = vadd.f32 %v1880, %v1874
      %v1882 = vadd.f32 %v1881, %v1875
      %v1883 = vrot.slane %v1882, 4
      %v1884 = vadd.f32 %v1882, %v1883
      %v1885 = vrot.slane %v1884, 2
      %v1886 = vadd.f32 %v1884, %v1885
      %v1887 = vrot.slane %v1886, 1
      %v1888 = vadd.f32 %v1886, %v1887
      %1889 = vst [vmem:[%s386 + $0x1] sm:$0x1] %v1888
      %s1890 = scalar_lea.vmem %s371, 216
      %v1891 = vld [vmem:[%s1890] sm:$0xf]
      %v1892 = vld [vmem:[%s1890 + $0x8] sm:$0xf]
      %v1893 = vld [vmem:[%s1890 + $0x10] sm:$0xf]
      %v1894 = vld [vmem:[%s1890 + $0x18] sm:$0xf]
      %v1895 = vld [vmem:[%s1890 + $0x20] sm:$0xf]
      %v1896 = vld [vmem:[%s1890 + $0x28] sm:$0xf]
      %v1897 = vld [vmem:[%s1890 + $0x30] sm:$0xf]
      %v1898 = vld [vmem:[%s1890 + $0x38] sm:$0xf]
      %v1899 = vld [vmem:[%s3] sm:$0xf]
      %v1900 = vld [vmem:[%s3 + $0x4] sm:$0xf]
      %v1901 = vld [vmem:[%s3 + $0x8] sm:$0xf]
      %v1902 = vld [vmem:[%s3 + $0xc] sm:$0xf]
      %v1903 = vld [vmem:[%s3 + $0x10] sm:$0xf]
      %v1904 = vld [vmem:[%s3 + $0x14] sm:$0xf]
      %v1905 = vld [vmem:[%s3 + $0x18] sm:$0xf]
      %v1906 = vld [vmem:[%s3 + $0x1c] sm:$0xf]
      %v1907 = vld [vmem:[%s3 + $0x20] sm:$0xf]
      %v1908 = vld [vmem:[%s3 + $0x24] sm:$0xf]
      %v1909 = vld [vmem:[%s3 + $0x28] sm:$0xf]
      %v1910 = vld [vmem:[%s3 + $0x2c] sm:$0xf]
      %v1911 = vld [vmem:[%s3 + $0x30] sm:$0xf]
      %v1912 = vld [vmem:[%s3 + $0x34] sm:$0xf]
      %v1913 = vld [vmem:[%s3 + $0x38] sm:$0xf]
      %v1914 = vld [vmem:[%s3 + $0x3c] sm:$0xf]
      %v1923 = vunpack.c.l.b16 %v1891
      %v1924 = vunpack.c.l.b16 %v1892
      %v1925 = vunpack.c.l.b16 %v1893
      %v1926 = vunpack.c.l.b16 %v1894
      %v1927 = vunpack.c.l.b16 %v1895
      %v1928 = vunpack.c.l.b16 %v1896
      %v1929 = vunpack.c.l.b16 %v1897
      %v1930 = vunpack.c.l.b16 %v1898
      %v1931 = vpack.c.b16 %v1924, %v1923
      %v1932 = vpack.c.b16 %v1926, %v1925
      %v1933 = vpack.c.b16 %v1928, %v1927
      %v1934 = vpack.c.b16 %v1930, %v1929
      %v1955 = vunpack.c.l.b16 %v1899
      %v1956 = vunpack.c.l.b16 %v1900
      %v1957 = vunpack.c.l.b16 %v1901
      %v1958 = vunpack.c.l.b16 %v1902
      %v1959 = vunpack.c.l.b16 %v1903
      %v1960 = vunpack.c.l.b16 %v1904
      %v1961 = vunpack.c.l.b16 %v1905
      %v1962 = vunpack.c.l.b16 %v1906
      %v1963 = vunpack.c.l.b16 %v1907
      %v1964 = vunpack.c.l.b16 %v1908
      %v1965 = vunpack.c.l.b16 %v1909
      %v1966 = vunpack.c.l.b16 %v1910
      %v1967 = vunpack.c.l.b16 %v1911
      %v1968 = vunpack.c.l.b16 %v1912
      %v1969 = vunpack.c.l.b16 %v1913
      %v1970 = vunpack.c.l.b16 %v1914
      %v1971 = vpack.c.b16 %v1956, %v1955
      %v1972 = vpack.c.b16 %v1958, %v1957
      %v1973 = vpack.c.b16 %v1960, %v1959
      %v1974 = vpack.c.b16 %v1962, %v1961
      %v1975 = vpack.c.b16 %v1964, %v1963
      %v1976 = vpack.c.b16 %v1966, %v1965
      %v1977 = vpack.c.b16 %v1968, %v1967
      %v1978 = vpack.c.b16 %v1970, %v1969
      %1987 = vmatprep.subr.bf16.mxu0 0
      %1988 = vmatpush1.bf16.msra.mxu0 %v1971
      %1989 = vmatprep.subr.bf16.mxu0 0
      %1990 = vmatpush1.bf16.msra.mxu0 %v1972
      %1991 = vmatprep.subr.bf16.mxu0 0
      %1992 = vmatpush1.bf16.msra.mxu0 %v1973
      %1993 = vmatprep.subr.bf16.mxu0 0
      %1994 = vmatpush1.bf16.msra.mxu0 %v1974
      %1995 = vmatprep.subr.bf16.mxu0 0
      %1996 = vmatpush1.bf16.msra.mxu0 %v1975
      %1997 = vmatprep.subr.bf16.mxu0 0
      %1998 = vmatpush1.bf16.msra.mxu0 %v1976
      %1999 = vmatprep.subr.bf16.mxu0 0
      %2000 = vmatpush1.bf16.msra.mxu0 %v1977
      %2001 = vmatprep.subr.bf16.mxu0 0
      %2002 = vmatpush1.bf16.msra.mxu0 %v1978
      %2003 = vmatprep.subr.bf16.mxu0 0
      %2004 = vmatpush1.bf16.msra.mxu0 0
      %2005 = vmatprep.subr.bf16.mxu0 0
      %2006 = vmatpush1.bf16.msra.mxu0 0
      %2007 = vmatprep.subr.bf16.mxu0 0
      %2008 = vmatpush1.bf16.msra.mxu0 0
      %2009 = vmatprep.subr.bf16.mxu0 0
      %2010 = vmatpush1.bf16.msra.mxu0 0
      %2011 = vmatprep.subr.bf16.mxu0 0
      %2012 = vmatpush1.bf16.msra.mxu0 0
      %2013 = vmatprep.subr.bf16.mxu0 0
      %2014 = vmatpush1.bf16.msra.mxu0 0
      %2015 = vmatprep.subr.bf16.mxu0 0
      %2016 = vmatpush1.bf16.msra.mxu0 0
      %2017 = vmatprep.subr.bf16.mxu0 0
      %2018 = vmatpush1.bf16.msra.mxu0 0
      %2019 = vmatprep.mubr.bf16.mxu0 0
      %2020 = vmatmul.mubr.bf16.gmra.mrb[0].mxu0 %v1931
      %v2021 = vpop.f32.mrb[0].mxu0
      %v2022 = vadd.f32 0.0, %v2021
      %v2023 = vpop.f32.mrb[0].mxu0
      %v2024 = vpop.f32.mrb[0].mxu0
      %v2025 = vadd.f32 0.0, %v2024
      %v2026 = vpop.f32.mrb[0].mxu0
      %2027 = vmatprep.mubr.bf16.mxu0 0
      %2028 = vmatmul.mubr.bf16.gmra.mrb[0].mxu0 %v1932
      %v2029 = vpop.f32.mrb[0].mxu0
      %v2030 = vadd.f32 0.0, %v2029
      %v2031 = vpop.f32.mrb[0].mxu0
      %v2032 = vpop.f32.mrb[0].mxu0
      %v2033 = vadd.f32 0.0, %v2032
      %v2034 = vpop.f32.mrb[0].mxu0
      %2035 = vmatprep.mubr.bf16.mxu0 0
      %2036 = vmatmul.mubr.bf16.gmra.mrb[0].mxu0 %v1933
      %v2037 = vpop.f32.mrb[0].mxu0
      %v2038 = vadd.f32 0.0, %v2037
      %v2039 = vpop.f32.mrb[0].mxu0
      %v2040 = vpop.f32.mrb[0].mxu0
      %v2041 = vadd.f32 0.0, %v2040
      %v2042 = vpop.f32.mrb[0].mxu0
      %2043 = vmatprep.mubr.bf16.mxu0 0
      %2044 = vmatmul.mubr.bf16.gmra.mrb[0].mxu0 %v1934
      %v2045 = vpop.f32.mrb[0].mxu0
      %v2046 = vadd.f32 0.0, %v2045
      %v2047 = vpop.f32.mrb[0].mxu0
      %v2048 = vpop.f32.mrb[0].mxu0
      %v2049 = vadd.f32 0.0, %v2048
      %v2050 = vpop.f32.mrb[0].mxu0
      %2051 = vdwg.mxu0
      %v2052 = vpack.c.bf16 %v2025, %v2022
      %v2053 = vpack.c.bf16 %v2033, %v2030
      %v2054 = vpack.c.bf16 %v2041, %v2038
      %v2055 = vpack.c.bf16 %v2049, %v2046
      %v2060 = vunpack.c.l.b16 %v2052
      %v2061 = vunpack.c.h.b16 %v2052
      %v2062 = vunpack.c.l.b16 %v2053
      %v2063 = vunpack.c.h.b16 %v2053
      %v2064 = vunpack.c.l.b16 %v2054
      %v2065 = vunpack.c.h.b16 %v2054
      %v2066 = vunpack.c.l.b16 %v2055
      %v2067 = vunpack.c.h.b16 %v2055
      %v2068 = vpack.c.b16 %v2060, %v2060
      %v2069 = vpack.c.b16 %v2061, %v2061
      %v2070 = vpack.c.b16 %v2062, %v2062
      %v2071 = vpack.c.b16 %v2063, %v2063
      %v2072 = vpack.c.b16 %v2064, %v2064
      %v2073 = vpack.c.b16 %v2065, %v2065
      %v2074 = vpack.c.b16 %v2066, %v2066
      %v2075 = vpack.c.b16 %v2067, %v2067
      %2084 = vst [vmem:[%s382] sm:$0xf] %v2068
      %2085 = vst [vmem:[%s382 + $0x4] sm:$0xf] %v2069
      %2086 = vst [vmem:[%s382 + $0x8] sm:$0xf] %v2070
      %2087 = vst [vmem:[%s382 + $0xc] sm:$0xf] %v2071
      %2088 = vst [vmem:[%s382 + $0x10] sm:$0xf] %v2072
      %2089 = vst [vmem:[%s382 + $0x14] sm:$0xf] %v2073
      %2090 = vst [vmem:[%s382 + $0x18] sm:$0xf] %v2074
      %2091 = vst [vmem:[%s382 + $0x1c] sm:$0xf] %v2075
      %v2092 = vadd.f32 %v2022, %v2025
      %v2093 = vadd.f32 %v2092, %v2030
      %v2094 = vadd.f32 %v2093, %v2033
      %v2095 = vadd.f32 %v2094, %v2038
      %v2096 = vadd.f32 %v2095, %v2041
      %v2097 = vadd.f32 %v2096, %v2046
      %v2098 = vadd.f32 %v2097, %v2049
      %v2099 = vrot.slane %v2098, 4
      %v2100 = vadd.f32 %v2098, %v2099
      %v2101 = vrot.slane %v2100, 2
      %v2102 = vadd.f32 %v2100, %v2101
      %v2103 = vrot.slane %v2102, 1
      %v2104 = vadd.f32 %v2102, %v2103
      %2105 = vst [vmem:[%s390] sm:$0x1] %v2104
      %v2106 = vmul.f32 %v2022, %v2022
      %v2107 = vmul.f32 %v2025, %v2025
      %v2108 = vmul.f32 %v2030, %v2030
      %v2109 = vmul.f32 %v2033, %v2033
      %v2110 = vmul.f32 %v2038, %v2038
      %v2111 = vmul.f32 %v2041, %v2041
      %v2112 = vmul.f32 %v2046, %v2046
      %v2113 = vmul.f32 %v2049, %v2049
      %v2114 = vadd.f32 %v2106, %v2107
      %v2115 = vadd.f32 %v2114, %v2108
      %v2116 = vadd.f32 %v2115, %v2109
      %v2117 = vadd.f32 %v2116, %v2110
      %v2118 = vadd.f32 %v2117, %v2111
      %v2119 = vadd.f32 %v2118, %v2112
      %v2120 = vadd.f32 %v2119, %v2113
      %v2121 = vrot.slane %v2120, 4
      %v2122 = vadd.f32 %v2120, %v2121
      %v2123 = vrot.slane %v2122, 2
      %v2124 = vadd.f32 %v2122, %v2123
      %v2125 = vrot.slane %v2124, 1
      %v2126 = vadd.f32 %v2124, %v2125
      %2127 = vst [vmem:[%s390 + $0x1] sm:$0x1] %v2126
      %p2128 = scmp.lt.s32.totalorder %s21, 1
      %s2129 = scalar_select %p2128, %s21, 1
      %s2130 = smul.addr %s2129, 8
      %s2131 = smul.addr %s2130, 4
      %s2132 = scalar_lea.vmem %s6, %s2131
      %p2133 = scmp.lt.s32.totalorder %s21, 1
      %s2134 = scalar_select %p2133, %s21, 1
      %s2135 = smul.addr %s2134, 8
      %s2136 = smul.addr %s2135, 4
      %s2137 = scalar_lea.vmem %s7, %s2136
      %p2138 = scmp.lt.s32.totalorder %s21, 1
      %s2139 = scalar_select %p2138, %s21, 1
      %s2140 = smul.addr %s2139, 2
      %s2141 = scalar_lea.vmem %s8, %s2140
      %p2142 = scmp.lt.s32.totalorder %s21, 1
      %s2143 = scalar_select %p2142, %s21, 1
      %s2144 = smul.addr %s2143, 2
      %s2145 = scalar_lea.vmem %s9, %s2144
      // Predicated region
      $region45: #{residual_block_forward.4} parent=43 // pred_check
        %p2146 = pneg %p175
      $region46: #{residual_block_forward.4} parent=43 // pred_check_branch
        %2148 = sbr.rel (%p2146) target = $region48
      $region47: #{residual_block_forward.4} parent=43 // pred_region
        _
      $region48: #{residual_block_forward.4} parent=43 // pred_fallthru
        _
      // Predicated region
      $region49: #{residual_block_forward.4} parent=43 // pred_check
        %p2149 = pneg %p201
      $region50: #{residual_block_forward.4} parent=43 // pred_check_branch
        %2151 = sbr.rel (%p2149) target = $region52
      $region51: #{residual_block_forward.4} parent=43 // pred_region
        _
      $region52: #{residual_block_forward.4} parent=43 // pred_fallthru
        _
      // Predicated region
      $region53: #{residual_block_forward.4} parent=43 // pred_check
        %p2152 = pneg %p227
      $region54: #{residual_block_forward.4} parent=43 // pred_check_branch
        %2154 = sbr.rel (%p2152) target = $region56
      $region55: #{residual_block_forward.4} parent=43 // pred_region
        _
      $region56: #{residual_block_forward.4} parent=43 // pred_fallthru
        _
      // Predicated region
      $region57: #{residual_block_forward.4} parent=43 // pred_check
        %p2155 = pneg %p253
      $region58: #{residual_block_forward.4} parent=43 // pred_check_branch
        %2157 = sbr.rel (%p2155) target = $region60
      $region59: #{residual_block_forward.4} parent=43 // pred_region
        _
      $region60: #{residual_block_forward.4} parent=43 // pred_fallthru
        _
    $region44: #{residual_block_forward.4} parent=5 // pred_fallthru
      _
    %p2158 = scmp.le.s32.totalorder 2, %s16
    // Predicated region
    $region61: #{residual_block_forward.4} parent=5 // pred_check
      %p2159 = pneg %p2158
    $region62: #{residual_block_forward.4} parent=5 // pred_check_branch
      %2161 = sbr.rel (%p2159) target = $region64
    $region63: #{residual_block_forward.4} parent=5 // pred_region
      %s2162 = ssub.s32 %s16, 2
      // Predicated region
      $region65: #{residual_block_forward.4} parent=63 // pred_check
        %p2163 = pneg %p181
      $region66: #{residual_block_forward.4} parent=63 // pred_check_branch
        %2165 = sbr.rel (%p2163) target = $region68
      $region67: #{residual_block_forward.4} parent=63 // pred_region
        %p2166 = scmp.lt.s32.totalorder %s22, 1
        %s2167 = scalar_select %p2166, %s22, 1
        %s2168 = smul.addr %s2167, 8
        %s2169 = smul.addr %s2168, 4
        %s2170 = scalar_lea.vmem %s6, %s2169
      $region68: #{residual_block_forward.4} parent=63 // pred_fallthru
        _
      // Predicated region
      $region69: #{residual_block_forward.4} parent=63 // pred_check
        %p2171 = pneg %p207
      $region70: #{residual_block_forward.4} parent=63 // pred_check_branch
        %2173 = sbr.rel (%p2171) target = $region72
      $region71: #{residual_block_forward.4} parent=63 // pred_region
        %p2174 = scmp.lt.s32.totalorder %s22, 1
        %s2175 = scalar_select %p2174, %s22, 1
        %s2176 = smul.addr %s2175, 8
        %s2177 = smul.addr %s2176, 4
        %s2178 = scalar_lea.vmem %s7, %s2177
      $region72: #{residual_block_forward.4} parent=63 // pred_fallthru
        _
      // Predicated region
      $region73: #{residual_block_forward.4} parent=63 // pred_check
        %p2179 = pneg %p233
      $region74: #{residual_block_forward.4} parent=63 // pred_check_branch
        %2181 = sbr.rel (%p2179) target = $region76
      $region75: #{residual_block_forward.4} parent=63 // pred_region
        %p2182 = scmp.lt.s32.totalorder %s22, 1
        %s2183 = scalar_select %p2182, %s22, 1
        %s2184 = smul.addr %s2183, 2
        %s2185 = scalar_lea.vmem %s8, %s2184
      $region76: #{residual_block_forward.4} parent=63 // pred_fallthru
        _
      // Predicated region
      $region77: #{residual_block_forward.4} parent=63 // pred_check
        %p2186 = pneg %p259
      $region78: #{residual_block_forward.4} parent=63 // pred_check_branch
        %2188 = sbr.rel (%p2186) target = $region80
      $region79: #{residual_block_forward.4} parent=63 // pred_region
        %p2189 = scmp.lt.s32.totalorder %s22, 1
        %s2190 = scalar_select %p2189, %s22, 1
        %s2191 = smul.addr %s2190, 2
        %s2192 = scalar_lea.vmem %s9, %s2191
      $region80: #{residual_block_forward.4} parent=63 // pred_fallthru
        _
    $region64: #{residual_block_forward.4} parent=5 // pred_fallthru
      _
  $region6: #{residual_block_forward.4} parent=0 // loop_footer
    %s20 = sadd.s32 1, %s16
  $region7: #{residual_block_forward.4} parent=0 // loop_footer_branch
    %15 = sbr.rel target = $region3
  $region8: #{residual_block_forward.4} parent=0 // loop_exit
    _

</llo_original>
